<compile_context>
chip_gen: v7x
topology: tpu7x:2x2x1
jax: 0.10.0
libtpu: 0.0.40
codegen_flags: <defaults>
</compile_context>

<pallas_src>
import functools

import jax
import jax.numpy as jnp
from jax import lax
from jax.experimental import pallas as pl
from jax.experimental.pallas import tpu as pltpu


def _round_up(x, m):
    return (x + m - 1) // m * m


# ---------------------------------------------------------------------------
# LSTM cell math (PyTorch gate order: i, f, g, o)
# ---------------------------------------------------------------------------
def _lstm_cell(gates, c_prev, H):
    # One EUP pass over the full (B, 4H) vreg, then cheap lane slices.
    sig = jax.nn.sigmoid(gates)
    i = sig[:, 0 * H:1 * H]
    f = sig[:, 1 * H:2 * H]
    o = sig[:, 3 * H:4 * H]
    g = jnp.tanh(gates[:, 2 * H:3 * H])
    c_new = i * g if c_prev is None else f * c_prev + i * g   # c_prev=None -> c=0 peel (exact)
    h_new = o * jnp.tanh(c_new)
    return h_new, c_new


# ---------------------------------------------------------------------------
# single fused Pallas kernel (whole model resident in VMEM, no grid)
# ---------------------------------------------------------------------------
def seq2seq_kernel(ids_x_ref, ids_t_ref,
                   enc_emb_ref, enc_wih_ref, enc_whh_ref, enc_b_ref,
                   dec_emb_ref, dec_wih_x_ref, dec_whh_ref, dec_b_ref,
                   w_h0_ref, waff_h_ref, baff_ref, y_ref):
    V, W = enc_emb_ref.shape
    H = enc_whh_ref.shape[0]
    B, Sd, Vp = y_ref.shape
    Se = ids_x_ref.shape[0] // B
    G = 4 * H
    f32 = jnp.float32

    def one_hot(ids_col, rows):
        iota = lax.broadcasted_iota(jnp.int32, (rows, V), 1)
        return jnp.where(ids_col == iota, f32(1), f32(0))

    # ------------------------------ encoder -------------------------------
    # gates_x for ALL time steps in one shot; the embedding gather is fused
    # through the input projection: onehot @ (table @ Wih) == table[ids] @ Wih.
    enc_proj = jnp.dot(enc_emb_ref[...], enc_wih_ref[...],
                       preferred_element_type=f32)                   # (V, 4H)
    gx_e = jnp.dot(one_hot(ids_x_ref[...], B * Se), enc_proj,
                   preferred_element_type=f32) + enc_b_ref[...]      # (B*Se, 4H)
    gx_e = gx_e.reshape(B, Se, G)

    enc_whh = enc_whh_ref[...]
    h, c = _lstm_cell(gx_e[:, 0, :], None, H)           # t=0 peeled (h=c=0)
    for t in range(1, Se):                              # static unroll, Se small
        gates = gx_e[:, t, :] + jnp.dot(h, enc_whh, preferred_element_type=f32)
        h, c = _lstm_cell(gates, c, H)
    h0 = h                                              # encoder hn, stays in VMEM

    # ------------------------------ decoder -------------------------------
    # Loop-invariant h0 projections (LSTM-input half + affine half) fused into
    # one (B, H) x (H, 4H + Vp) matmul and folded into gx / the output const.
    h0_proj = jnp.dot(h0, w_h0_ref[...], preferred_element_type=f32)  # (B, 4H+Vp)
    g_h0 = h0_proj[:, :G]                               # h0 @ dec_wih[W:, :]
    aff_h0 = h0_proj[:, G:] + baff_ref[...]             # h0 @ aff_w[H:, :] + b

    dec_proj = jnp.dot(dec_emb_ref[...], dec_wih_x_ref[...],
                       preferred_element_type=f32)                   # (V, 4H)
    gx_d = jnp.dot(one_hot(ids_t_ref[...], B * Sd), dec_proj,
                   preferred_element_type=f32) + dec_b_ref[...]      # (B*Sd, 4H)
    gx_d = gx_d.reshape(B, Sd, G) + g_h0[:, None, :]    # fold bias + h0 once

    dec_whh = dec_whh_ref[...]
    h, c = h0, None                                     # c0 = 0 elided exactly
    hs = []
    for t in range(Sd):
        gates = gx_d[:, t, :] + jnp.dot(h, dec_whh, preferred_element_type=f32)
        h, c = _lstm_cell(gates, c, H)
        hs.append(h)

    # ---------------- vocab projection (off the recurrent path) ------------
    h_seq = jnp.stack(hs, axis=1)                                    # (B, Sd, H)
    logits = jnp.dot(h_seq.reshape(B * Sd, H), waff_h_ref[...],
                     preferred_element_type=f32).reshape(B, Sd, Vp)
    y_ref[...] = logits + aff_h0[:, None, :]            # lane-dense (Vp = 128k)


# ---------------------------------------------------------------------------
# wrapper
# ---------------------------------------------------------------------------
_VMEM = pl.BlockSpec(memory_space=pltpu.MemorySpace.VMEM)


def prepare_params(params):
    """One-time, parameter-only preprocessing. Keep OUT of the jitted forward."""
    W = params["enc_wih"].shape[0]
    H = params["enc_whh"].shape[0]
    V = params["aff_w"].shape[1]
    Vp = _round_up(V, 128)                              # lane-dense logits
    vpad = ((0, 0), (0, Vp - V))
    waff_h = jnp.pad(params["aff_w"][:H, :], vpad)      # (H, Vp)  h-half
    waff_h0 = jnp.pad(params["aff_w"][H:, :], vpad)     # (H, Vp)  h0-half
    return {
        "enc_emb": params["enc_emb"],
        "enc_wih": params["enc_wih"],
        "enc_whh": params["enc_whh"],
        "enc_b": params["enc_b"],
        "dec_emb": params["dec_emb"],
        "dec_wih_x": params["dec_wih"][:W, :],          # emb half of concat input
        "dec_whh": params["dec_whh"],
        "dec_b": params["dec_b"],
        # fused loop-invariant h0 weight: [dec_wih h0-half | aff_w h0-half]
        "w_h0": jnp.concatenate([params["dec_wih"][W:, :], waff_h0], axis=1),
        "waff_h": waff_h,
        "baff": jnp.pad(params["aff_b"], vpad),
    }


def seq2seq_forward(prepped, xs, ts, hidden_size, vocab_size):
    del hidden_size  # shapes are carried by the prepped params
    V = vocab_size
    B, Se = xs.shape
    _, Sd = ts.shape
    Vp = prepped["waff_h"].shape[1]

    # Row-major reshape -> pure bitcast (no copy): token ids become int32
    # column vectors ready for the in-kernel one-hot gather.
    ids_x = xs.astype(jnp.int32).reshape(B * Se, 1)
    ids_t = ts.astype(jnp.int32).reshape(B * Sd, 1)

    y = pl.pallas_call(
        seq2seq_kernel,
        out_shape=jax.ShapeDtypeStruct((B, Sd, Vp), jnp.float32),
        in_specs=[_VMEM] * 13,
        out_specs=_VMEM,
    )(ids_x, ids_t,
      prepped["enc_emb"], prepped["enc_wih"], prepped["enc_whh"], prepped["enc_b"],
      prepped["dec_emb"], prepped["dec_wih_x"], prepped["dec_whh"], prepped["dec_b"],
      prepped["w_h0"], prepped["waff_h"], prepped["baff"])

    return y[:, :, :V]


# ---------------------------------------------------------------------------
# pure-JAX reference (for correctness check)
# ---------------------------------------------------------------------------
def _lstm_gates_ref(gates, c_prev, H):
    i = jax.nn.sigmoid(gates[:, 0 * H:1 * H])
    f = jax.nn.sigmoid(gates[:, 1 * H:2 * H])
    g = jnp.tanh(gates[:, 2 * H:3 * H])
    o = jax.nn.sigmoid(gates[:, 3 * H:4 * H])
    c_new = f * c_prev + i * g
    h_new = o * jnp.tanh(c_new)
    return h_new, c_new


def _lstm_scan_ref(xs_tm, h0, c0, wih, whh, b, H):
    def step(carry, x):
        h, c = carry
        gates = (jnp.dot(x, wih, preferred_element_type=jnp.float32)
                 + jnp.dot(h, whh, preferred_element_type=jnp.float32) + b)
        h, c = _lstm_gates_ref(gates, c, H)
        return (h, c), h
    (hn, _), ys = lax.scan(step, (h0, c0), xs_tm)
    return ys, hn


def seq2seq_ref(params, xs, ts, hidden_size, vocab_size):
    B = xs.shape[0]
    emb_x = jnp.take(params["enc_emb"], xs, axis=0)
    zeros = jnp.zeros((B, hidden_size), jnp.float32)
    _, hn = _lstm_scan_ref(jnp.transpose(emb_x, (1, 0, 2)), zeros, zeros,
                           params["enc_wih"], params["enc_whh"],
                           params["enc_b"], hidden_size)
    emb_t = jnp.take(params["dec_emb"], ts, axis=0)
    Sd = emb_t.shape[1]
    h_for_cat = jnp.broadcast_to(hn[:, None, :], (B, Sd, hidden_size))
    dec_in = jnp.concatenate([emb_t, h_for_cat], axis=-1)
    ys, _ = _lstm_scan_ref(jnp.transpose(dec_in, (1, 0, 2)), hn, zeros,
                           params["dec_wih"], params["dec_whh"],
                           params["dec_b"], hidden_size)
    ys = jnp.transpose(ys, (1, 0, 2))                              # (B, Sd, H)
    y_cat = jnp.concatenate([ys, h_for_cat], axis=-1)              # (B, Sd, 2H)
    return jnp.einsum("bsf,fv->bsv", y_cat, params["aff_w"]) + params["aff_b"]


# ---------------------------------------------------------------------------
# deterministic parameter init
# ---------------------------------------------------------------------------
def init_params(key, vocab_size, wordvec_size, hidden_size):
    ks = jax.random.split(key, 10)
    V, W, H = vocab_size, wordvec_size, hidden_size
    u = lambda k, shape, s: jax.random.uniform(k, shape, jnp.float32, -s, s)
    return {
        "enc_emb": u(ks[0], (V, W), 0.1),
        "enc_wih": u(ks[1], (W, 4 * H), 0.1),
        "enc_whh": u(ks[2], (H, 4 * H), 0.1),
        "enc_b":   u(ks[3], (1, 4 * H), 0.1),
        "dec_emb": u(ks[4], (V, W), 0.1),
        "dec_wih": u(ks[5], (W + H, 4 * H), 0.1),
        "dec_whh": u(ks[6], (H, 4 * H), 0.1),
        "dec_b":   u(ks[7], (1, 4 * H), 0.1),
        "aff_w":   u(ks[8], (2 * H, V), 0.1),
        "aff_b":   u(ks[9], (1, V), 0.1),
    }


if __name__ == "__main__":
    VOCAB, WORDVEC, HIDDEN = 32, 16, 32
    BATCH, SEQ_ENC, SEQ_DEC = 2, 8, 8

    key = jax.random.PRNGKey(0)
    kp, kx, kt = jax.random.split(key, 3)
    params = init_params(kp, VOCAB, WORDVEC, HIDDEN)
    xs = jax.random.randint(kx, (BATCH, SEQ_ENC), 0, VOCAB, dtype=jnp.int32)
    ts = jax.random.randint(kt, (BATCH, SEQ_DEC), 0, VOCAB, dtype=jnp.int32)

    prepped = prepare_params(params)     # one-time, outside the jitted forward

    fwd = jax.jit(functools.partial(seq2seq_forward,
                                    hidden_size=HIDDEN, vocab_size=VOCAB))
    y = fwd(prepped, xs, ts)
    jax.block_until_ready(y)

    y_ref = seq2seq_ref(params, xs, ts, HIDDEN, VOCAB)
    assert y.shape == (BATCH, SEQ_DEC, VOCAB), y.shape
    assert jnp.allclose(y, y_ref, atol=1e-4, rtol=1e-4), \
        float(jnp.max(jnp.abs(y - y_ref)))

    print("KERNEL_OK")
</pallas_src>

<mosaic_0001>
module attributes {stable_mosaic.version = 11 : i64} {
  func.func @seq2seq_kernel(%arg0: memref<16x1xi32, #tpu.memory_space<vmem>>, %arg1: memref<16x1xi32, #tpu.memory_space<vmem>>, %arg2: memref<32x16xf32, #tpu.memory_space<vmem>>, %arg3: memref<16x128xf32, #tpu.memory_space<vmem>>, %arg4: memref<32x128xf32, #tpu.memory_space<vmem>>, %arg5: memref<1x128xf32, #tpu.memory_space<vmem>>, %arg6: memref<32x16xf32, #tpu.memory_space<vmem>>, %arg7: memref<16x128xf32, #tpu.memory_space<vmem>>, %arg8: memref<32x128xf32, #tpu.memory_space<vmem>>, %arg9: memref<1x128xf32, #tpu.memory_space<vmem>>, %arg10: memref<32x256xf32, #tpu.memory_space<vmem>>, %arg11: memref<32x128xf32, #tpu.memory_space<vmem>>, %arg12: memref<1x128xf32, #tpu.memory_space<vmem>>, %arg13: memref<2x8x128xf32, #tpu.memory_space<vmem>>) attributes {dimension_semantics = [], scalar_prefetch = 0 : i64, scratch_operands = 0 : i64, tpu.core_type = #tpu.core_type<tc>} {
    %c0 = arith.constant 0 : index
    %c0_0 = arith.constant 0 : index
    %0 = vector.load %arg2[%c0, %c0_0] : memref<32x16xf32, #tpu.memory_space<vmem>>, vector<32x16xf32>
    %c0_1 = arith.constant 0 : index
    %c0_2 = arith.constant 0 : index
    %1 = vector.load %arg3[%c0_1, %c0_2] : memref<16x128xf32, #tpu.memory_space<vmem>>, vector<16x128xf32>
    %cst = arith.constant dense<0.000000e+00> : vector<32x128xf32>
    %2 = tpu.matmul %0, %1, %cst {dimension_numbers = #tpu.dot_dimension_numbers<[1], [0], [0], [1], [0, 0, 1, 1], [], []>} : vector<32x16xf32>, vector<16x128xf32>, vector<32x128xf32> -> vector<32x128xf32>
    %c0_3 = arith.constant 0 : index
    %c0_4 = arith.constant 0 : index
    %3 = vector.load %arg0[%c0_3, %c0_4] : memref<16x1xi32, #tpu.memory_space<vmem>>, vector<16x1xi32>
    %4 = tpu.iota {dimensions = array<i32: 1>} : vector<16x32xi32>
    %5 = vector.broadcast %3 : vector<16x1xi32> to vector<16x32xi32>
    %6 = arith.cmpi eq, %5, %4 : vector<16x32xi32>
    %cst_5 = arith.constant 1.000000e+00 : f32
    %cst_6 = arith.constant 0.000000e+00 : f32
    %7 = vector.broadcast %cst_5 : f32 to vector<16x32xf32>
    %8 = vector.broadcast %cst_6 : f32 to vector<16x32xf32>
    %9 = arith.select %6, %7, %8 : vector<16x32xi1>, vector<16x32xf32>
    %cst_7 = arith.constant dense<0.000000e+00> : vector<16x128xf32>
    %10 = tpu.matmul %9, %2, %cst_7 {dimension_numbers = #tpu.dot_dimension_numbers<[1], [0], [0], [1], [0, 0, 1, 1], [], []>} : vector<16x32xf32>, vector<32x128xf32>, vector<16x128xf32> -> vector<16x128xf32>
    %c0_8 = arith.constant 0 : index
    %c0_9 = arith.constant 0 : index
    %11 = vector.load %arg5[%c0_8, %c0_9] : memref<1x128xf32, #tpu.memory_space<vmem>>, vector<1x128xf32>
    %12 = vector.broadcast %11 : vector<1x128xf32> to vector<16x128xf32>
    %13 = arith.addf %10, %12 : vector<16x128xf32>
    %14 = vector.shape_cast %13 : vector<16x128xf32> to vector<2x8x128xf32>
    %c0_10 = arith.constant 0 : index
    %c0_11 = arith.constant 0 : index
    %15 = vector.load %arg4[%c0_10, %c0_11] : memref<32x128xf32, #tpu.memory_space<vmem>>, vector<32x128xf32>
    %16 = vector.extract_strided_slice %14 {offsets = [0, 0, 0], sizes = [2, 1, 128], strides = [1, 1, 1]} : vector<2x8x128xf32> to vector<2x1x128xf32>
    %17 = vector.shape_cast %16 : vector<2x1x128xf32> to vector<2x128xf32>
    %18 = arith.negf %17 : vector<2x128xf32>
    %19 = math.exp %18 : vector<2x128xf32>
    %cst_12 = arith.constant 1.000000e+00 : f32
    %20 = vector.broadcast %cst_12 : f32 to vector<2x128xf32>
    %21 = arith.addf %20, %19 : vector<2x128xf32>
    %22 = arith.divf %20, %21 : vector<2x128xf32>
    %23 = vector.extract_strided_slice %22 {offsets = [0, 0], sizes = [2, 32], strides = [1, 1]} : vector<2x128xf32> to vector<2x32xf32>
    %24 = vector.extract_strided_slice %22 {offsets = [0, 96], sizes = [2, 32], strides = [1, 1]} : vector<2x128xf32> to vector<2x32xf32>
    %25 = vector.extract_strided_slice %17 {offsets = [0, 64], sizes = [2, 32], strides = [1, 1]} : vector<2x128xf32> to vector<2x32xf32>
    %26 = math.tanh %25 : vector<2x32xf32>
    %27 = arith.mulf %23, %26 : vector<2x32xf32>
    %28 = math.tanh %27 : vector<2x32xf32>
    %29 = arith.mulf %24, %28 : vector<2x32xf32>
    %30 = vector.extract_strided_slice %14 {offsets = [0, 1, 0], sizes = [2, 1, 128], strides = [1, 1, 1]} : vector<2x8x128xf32> to vector<2x1x128xf32>
    %31 = vector.shape_cast %30 : vector<2x1x128xf32> to vector<2x128xf32>
    %cst_13 = arith.constant dense<0.000000e+00> : vector<2x128xf32>
    %32 = tpu.matmul %29, %15, %cst_13 {dimension_numbers = #tpu.dot_dimension_numbers<[1], [0], [0], [1], [0, 0, 1, 1], [], []>} : vector<2x32xf32>, vector<32x128xf32>, vector<2x128xf32> -> vector<2x128xf32>
    %33 = arith.addf %31, %32 : vector<2x128xf32>
    %34 = arith.negf %33 : vector<2x128xf32>
    %35 = math.exp %34 : vector<2x128xf32>
    %cst_14 = arith.constant 1.000000e+00 : f32
    %36 = vector.broadcast %cst_14 : f32 to vector<2x128xf32>
    %37 = arith.addf %36, %35 : vector<2x128xf32>
    %38 = arith.divf %36, %37 : vector<2x128xf32>
    %39 = vector.extract_strided_slice %38 {offsets = [0, 0], sizes = [2, 32], strides = [1, 1]} : vector<2x128xf32> to vector<2x32xf32>
    %40 = vector.extract_strided_slice %38 {offsets = [0, 32], sizes = [2, 32], strides = [1, 1]} : vector<2x128xf32> to vector<2x32xf32>
    %41 = vector.extract_strided_slice %38 {offsets = [0, 96], sizes = [2, 32], strides = [1, 1]} : vector<2x128xf32> to vector<2x32xf32>
    %42 = vector.extract_strided_slice %33 {offsets = [0, 64], sizes = [2, 32], strides = [1, 1]} : vector<2x128xf32> to vector<2x32xf32>
    %43 = math.tanh %42 : vector<2x32xf32>
    %44 = arith.mulf %40, %27 : vector<2x32xf32>
    %45 = arith.mulf %39, %43 : vector<2x32xf32>
    %46 = arith.addf %44, %45 : vector<2x32xf32>
    %47 = math.tanh %46 : vector<2x32xf32>
    %48 = arith.mulf %41, %47 : vector<2x32xf32>
    %49 = vector.extract_strided_slice %14 {offsets = [0, 2, 0], sizes = [2, 1, 128], strides = [1, 1, 1]} : vector<2x8x128xf32> to vector<2x1x128xf32>
    %50 = vector.shape_cast %49 : vector<2x1x128xf32> to vector<2x128xf32>
    %cst_15 = arith.constant dense<0.000000e+00> : vector<2x128xf32>
    %51 = tpu.matmul %48, %15, %cst_15 {dimension_numbers = #tpu.dot_dimension_numbers<[1], [0], [0], [1], [0, 0, 1, 1], [], []>} : vector<2x32xf32>, vector<32x128xf32>, vector<2x128xf32> -> vector<2x128xf32>
    %52 = arith.addf %50, %51 : vector<2x128xf32>
    %53 = arith.negf %52 : vector<2x128xf32>
    %54 = math.exp %53 : vector<2x128xf32>
    %cst_16 = arith.constant 1.000000e+00 : f32
    %55 = vector.broadcast %cst_16 : f32 to vector<2x128xf32>
    %56 = arith.addf %55, %54 : vector<2x128xf32>
    %57 = arith.divf %55, %56 : vector<2x128xf32>
    %58 = vector.extract_strided_slice %57 {offsets = [0, 0], sizes = [2, 32], strides = [1, 1]} : vector<2x128xf32> to vector<2x32xf32>
    %59 = vector.extract_strided_slice %57 {offsets = [0, 32], sizes = [2, 32], strides = [1, 1]} : vector<2x128xf32> to vector<2x32xf32>
    %60 = vector.extract_strided_slice %57 {offsets = [0, 96], sizes = [2, 32], strides = [1, 1]} : vector<2x128xf32> to vector<2x32xf32>
    %61 = vector.extract_strided_slice %52 {offsets = [0, 64], sizes = [2, 32], strides = [1, 1]} : vector<2x128xf32> to vector<2x32xf32>
    %62 = math.tanh %61 : vector<2x32xf32>
    %63 = arith.mulf %59, %46 : vector<2x32xf32>
    %64 = arith.mulf %58, %62 : vector<2x32xf32>
    %65 = arith.addf %63, %64 : vector<2x32xf32>
    %66 = math.tanh %65 : vector<2x32xf32>
    %67 = arith.mulf %60, %66 : vector<2x32xf32>
    %68 = vector.extract_strided_slice %14 {offsets = [0, 3, 0], sizes = [2, 1, 128], strides = [1, 1, 1]} : vector<2x8x128xf32> to vector<2x1x128xf32>
    %69 = vector.shape_cast %68 : vector<2x1x128xf32> to vector<2x128xf32>
    %cst_17 = arith.constant dense<0.000000e+00> : vector<2x128xf32>
    %70 = tpu.matmul %67, %15, %cst_17 {dimension_numbers = #tpu.dot_dimension_numbers<[1], [0], [0], [1], [0, 0, 1, 1], [], []>} : vector<2x32xf32>, vector<32x128xf32>, vector<2x128xf32> -> vector<2x128xf32>
    %71 = arith.addf %69, %70 : vector<2x128xf32>
    %72 = arith.negf %71 : vector<2x128xf32>
    %73 = math.exp %72 : vector<2x128xf32>
    %cst_18 = arith.constant 1.000000e+00 : f32
    %74 = vector.broadcast %cst_18 : f32 to vector<2x128xf32>
    %75 = arith.addf %74, %73 : vector<2x128xf32>
    %76 = arith.divf %74, %75 : vector<2x128xf32>
    %77 = vector.extract_strided_slice %76 {offsets = [0, 0], sizes = [2, 32], strides = [1, 1]} : vector<2x128xf32> to vector<2x32xf32>
    %78 = vector.extract_strided_slice %76 {offsets = [0, 32], sizes = [2, 32], strides = [1, 1]} : vector<2x128xf32> to vector<2x32xf32>
    %79 = vector.extract_strided_slice %76 {offsets = [0, 96], sizes = [2, 32], strides = [1, 1]} : vector<2x128xf32> to vector<2x32xf32>
    %80 = vector.extract_strided_slice %71 {offsets = [0, 64], sizes = [2, 32], strides = [1, 1]} : vector<2x128xf32> to vector<2x32xf32>
    %81 = math.tanh %80 : vector<2x32xf32>
    %82 = arith.mulf %78, %65 : vector<2x32xf32>
    %83 = arith.mulf %77, %81 : vector<2x32xf32>
    %84 = arith.addf %82, %83 : vector<2x32xf32>
    %85 = math.tanh %84 : vector<2x32xf32>
    %86 = arith.mulf %79, %85 : vector<2x32xf32>
    %87 = vector.extract_strided_slice %14 {offsets = [0, 4, 0], sizes = [2, 1, 128], strides = [1, 1, 1]} : vector<2x8x128xf32> to vector<2x1x128xf32>
    %88 = vector.shape_cast %87 : vector<2x1x128xf32> to vector<2x128xf32>
    %cst_19 = arith.constant dense<0.000000e+00> : vector<2x128xf32>
    %89 = tpu.matmul %86, %15, %cst_19 {dimension_numbers = #tpu.dot_dimension_numbers<[1], [0], [0], [1], [0, 0, 1, 1], [], []>} : vector<2x32xf32>, vector<32x128xf32>, vector<2x128xf32> -> vector<2x128xf32>
    %90 = arith.addf %88, %89 : vector<2x128xf32>
    %91 = arith.negf %90 : vector<2x128xf32>
    %92 = math.exp %91 : vector<2x128xf32>
    %cst_20 = arith.constant 1.000000e+00 : f32
    %93 = vector.broadcast %cst_20 : f32 to vector<2x128xf32>
    %94 = arith.addf %93, %92 : vector<2x128xf32>
    %95 = arith.divf %93, %94 : vector<2x128xf32>
    %96 = vector.extract_strided_slice %95 {offsets = [0, 0], sizes = [2, 32], strides = [1, 1]} : vector<2x128xf32> to vector<2x32xf32>
    %97 = vector.extract_strided_slice %95 {offsets = [0, 32], sizes = [2, 32], strides = [1, 1]} : vector<2x128xf32> to vector<2x32xf32>
    %98 = vector.extract_strided_slice %95 {offsets = [0, 96], sizes = [2, 32], strides = [1, 1]} : vector<2x128xf32> to vector<2x32xf32>
    %99 = vector.extract_strided_slice %90 {offsets = [0, 64], sizes = [2, 32], strides = [1, 1]} : vector<2x128xf32> to vector<2x32xf32>
    %100 = math.tanh %99 : vector<2x32xf32>
    %101 = arith.mulf %97, %84 : vector<2x32xf32>
    %102 = arith.mulf %96, %100 : vector<2x32xf32>
    %103 = arith.addf %101, %102 : vector<2x32xf32>
    %104 = math.tanh %103 : vector<2x32xf32>
    %105 = arith.mulf %98, %104 : vector<2x32xf32>
    %106 = vector.extract_strided_slice %14 {offsets = [0, 5, 0], sizes = [2, 1, 128], strides = [1, 1, 1]} : vector<2x8x128xf32> to vector<2x1x128xf32>
    %107 = vector.shape_cast %106 : vector<2x1x128xf32> to vector<2x128xf32>
    %cst_21 = arith.constant dense<0.000000e+00> : vector<2x128xf32>
    %108 = tpu.matmul %105, %15, %cst_21 {dimension_numbers = #tpu.dot_dimension_numbers<[1], [0], [0], [1], [0, 0, 1, 1], [], []>} : vector<2x32xf32>, vector<32x128xf32>, vector<2x128xf32> -> vector<2x128xf32>
    %109 = arith.addf %107, %108 : vector<2x128xf32>
    %110 = arith.negf %109 : vector<2x128xf32>
    %111 = math.exp %110 : vector<2x128xf32>
    %cst_22 = arith.constant 1.000000e+00 : f32
    %112 = vector.broadcast %cst_22 : f32 to vector<2x128xf32>
    %113 = arith.addf %112, %111 : vector<2x128xf32>
    %114 = arith.divf %112, %113 : vector<2x128xf32>
    %115 = vector.extract_strided_slice %114 {offsets = [0, 0], sizes = [2, 32], strides = [1, 1]} : vector<2x128xf32> to vector<2x32xf32>
    %116 = vector.extract_strided_slice %114 {offsets = [0, 32], sizes = [2, 32], strides = [1, 1]} : vector<2x128xf32> to vector<2x32xf32>
    %117 = vector.extract_strided_slice %114 {offsets = [0, 96], sizes = [2, 32], strides = [1, 1]} : vector<2x128xf32> to vector<2x32xf32>
    %118 = vector.extract_strided_slice %109 {offsets = [0, 64], sizes = [2, 32], strides = [1, 1]} : vector<2x128xf32> to vector<2x32xf32>
    %119 = math.tanh %118 : vector<2x32xf32>
    %120 = arith.mulf %116, %103 : vector<2x32xf32>
    %121 = arith.mulf %115, %119 : vector<2x32xf32>
    %122 = arith.addf %120, %121 : vector<2x32xf32>
    %123 = math.tanh %122 : vector<2x32xf32>
    %124 = arith.mulf %117, %123 : vector<2x32xf32>
    %125 = vector.extract_strided_slice %14 {offsets = [0, 6, 0], sizes = [2, 1, 128], strides = [1, 1, 1]} : vector<2x8x128xf32> to vector<2x1x128xf32>
    %126 = vector.shape_cast %125 : vector<2x1x128xf32> to vector<2x128xf32>
    %cst_23 = arith.constant dense<0.000000e+00> : vector<2x128xf32>
    %127 = tpu.matmul %124, %15, %cst_23 {dimension_numbers = #tpu.dot_dimension_numbers<[1], [0], [0], [1], [0, 0, 1, 1], [], []>} : vector<2x32xf32>, vector<32x128xf32>, vector<2x128xf32> -> vector<2x128xf32>
    %128 = arith.addf %126, %127 : vector<2x128xf32>
    %129 = arith.negf %128 : vector<2x128xf32>
    %130 = math.exp %129 : vector<2x128xf32>
    %cst_24 = arith.constant 1.000000e+00 : f32
    %131 = vector.broadcast %cst_24 : f32 to vector<2x128xf32>
    %132 = arith.addf %131, %130 : vector<2x128xf32>
    %133 = arith.divf %131, %132 : vector<2x128xf32>
    %134 = vector.extract_strided_slice %133 {offsets = [0, 0], sizes = [2, 32], strides = [1, 1]} : vector<2x128xf32> to vector<2x32xf32>
    %135 = vector.extract_strided_slice %133 {offsets = [0, 32], sizes = [2, 32], strides = [1, 1]} : vector<2x128xf32> to vector<2x32xf32>
    %136 = vector.extract_strided_slice %133 {offsets = [0, 96], sizes = [2, 32], strides = [1, 1]} : vector<2x128xf32> to vector<2x32xf32>
    %137 = vector.extract_strided_slice %128 {offsets = [0, 64], sizes = [2, 32], strides = [1, 1]} : vector<2x128xf32> to vector<2x32xf32>
    %138 = math.tanh %137 : vector<2x32xf32>
    %139 = arith.mulf %135, %122 : vector<2x32xf32>
    %140 = arith.mulf %134, %138 : vector<2x32xf32>
    %141 = arith.addf %139, %140 : vector<2x32xf32>
    %142 = math.tanh %141 : vector<2x32xf32>
    %143 = arith.mulf %136, %142 : vector<2x32xf32>
    %144 = vector.extract_strided_slice %14 {offsets = [0, 7, 0], sizes = [2, 1, 128], strides = [1, 1, 1]} : vector<2x8x128xf32> to vector<2x1x128xf32>
    %145 = vector.shape_cast %144 : vector<2x1x128xf32> to vector<2x128xf32>
    %cst_25 = arith.constant dense<0.000000e+00> : vector<2x128xf32>
    %146 = tpu.matmul %143, %15, %cst_25 {dimension_numbers = #tpu.dot_dimension_numbers<[1], [0], [0], [1], [0, 0, 1, 1], [], []>} : vector<2x32xf32>, vector<32x128xf32>, vector<2x128xf32> -> vector<2x128xf32>
    %147 = arith.addf %145, %146 : vector<2x128xf32>
    %148 = arith.negf %147 : vector<2x128xf32>
    %149 = math.exp %148 : vector<2x128xf32>
    %cst_26 = arith.constant 1.000000e+00 : f32
    %150 = vector.broadcast %cst_26 : f32 to vector<2x128xf32>
    %151 = arith.addf %150, %149 : vector<2x128xf32>
    %152 = arith.divf %150, %151 : vector<2x128xf32>
    %153 = vector.extract_strided_slice %152 {offsets = [0, 0], sizes = [2, 32], strides = [1, 1]} : vector<2x128xf32> to vector<2x32xf32>
    %154 = vector.extract_strided_slice %152 {offsets = [0, 32], sizes = [2, 32], strides = [1, 1]} : vector<2x128xf32> to vector<2x32xf32>
    %155 = vector.extract_strided_slice %152 {offsets = [0, 96], sizes = [2, 32], strides = [1, 1]} : vector<2x128xf32> to vector<2x32xf32>
    %156 = vector.extract_strided_slice %147 {offsets = [0, 64], sizes = [2, 32], strides = [1, 1]} : vector<2x128xf32> to vector<2x32xf32>
    %157 = math.tanh %156 : vector<2x32xf32>
    %158 = arith.mulf %154, %141 : vector<2x32xf32>
    %159 = arith.mulf %153, %157 : vector<2x32xf32>
    %160 = arith.addf %158, %159 : vector<2x32xf32>
    %161 = math.tanh %160 : vector<2x32xf32>
    %162 = arith.mulf %155, %161 : vector<2x32xf32>
    %c0_27 = arith.constant 0 : index
    %c0_28 = arith.constant 0 : index
    %163 = vector.load %arg10[%c0_27, %c0_28] : memref<32x256xf32, #tpu.memory_space<vmem>>, vector<32x256xf32>
    %cst_29 = arith.constant dense<0.000000e+00> : vector<2x256xf32>
    %164 = tpu.matmul %162, %163, %cst_29 {dimension_numbers = #tpu.dot_dimension_numbers<[1], [0], [0], [1], [0, 0, 1, 1], [], []>} : vector<2x32xf32>, vector<32x256xf32>, vector<2x256xf32> -> vector<2x256xf32>
    %165 = vector.extract_strided_slice %164 {offsets = [0, 0], sizes = [2, 128], strides = [1, 1]} : vector<2x256xf32> to vector<2x128xf32>
    %166 = vector.extract_strided_slice %164 {offsets = [0, 128], sizes = [2, 128], strides = [1, 1]} : vector<2x256xf32> to vector<2x128xf32>
    %c0_30 = arith.constant 0 : index
    %c0_31 = arith.constant 0 : index
    %167 = vector.load %arg12[%c0_30, %c0_31] : memref<1x128xf32, #tpu.memory_space<vmem>>, vector<1x128xf32>
    %168 = vector.broadcast %167 : vector<1x128xf32> to vector<2x128xf32>
    %169 = arith.addf %166, %168 : vector<2x128xf32>
    %c0_32 = arith.constant 0 : index
    %c0_33 = arith.constant 0 : index
    %170 = vector.load %arg6[%c0_32, %c0_33] : memref<32x16xf32, #tpu.memory_space<vmem>>, vector<32x16xf32>
    %c0_34 = arith.constant 0 : index
    %c0_35 = arith.constant 0 : index
    %171 = vector.load %arg7[%c0_34, %c0_35] : memref<16x128xf32, #tpu.memory_space<vmem>>, vector<16x128xf32>
    %cst_36 = arith.constant dense<0.000000e+00> : vector<32x128xf32>
    %172 = tpu.matmul %170, %171, %cst_36 {dimension_numbers = #tpu.dot_dimension_numbers<[1], [0], [0], [1], [0, 0, 1, 1], [], []>} : vector<32x16xf32>, vector<16x128xf32>, vector<32x128xf32> -> vector<32x128xf32>
    %c0_37 = arith.constant 0 : index
    %c0_38 = arith.constant 0 : index
    %173 = vector.load %arg1[%c0_37, %c0_38] : memref<16x1xi32, #tpu.memory_space<vmem>>, vector<16x1xi32>
    %174 = tpu.iota {dimensions = array<i32: 1>} : vector<16x32xi32>
    %175 = vector.broadcast %173 : vector<16x1xi32> to vector<16x32xi32>
    %176 = arith.cmpi eq, %175, %174 : vector<16x32xi32>
    %cst_39 = arith.constant 1.000000e+00 : f32
    %cst_40 = arith.constant 0.000000e+00 : f32
    %177 = vector.broadcast %cst_39 : f32 to vector<16x32xf32>
    %178 = vector.broadcast %cst_40 : f32 to vector<16x32xf32>
    %179 = arith.select %176, %177, %178 : vector<16x32xi1>, vector<16x32xf32>
    %cst_41 = arith.constant dense<0.000000e+00> : vector<16x128xf32>
    %180 = tpu.matmul %179, %172, %cst_41 {dimension_numbers = #tpu.dot_dimension_numbers<[1], [0], [0], [1], [0, 0, 1, 1], [], []>} : vector<16x32xf32>, vector<32x128xf32>, vector<16x128xf32> -> vector<16x128xf32>
    %c0_42 = arith.constant 0 : index
    %c0_43 = arith.constant 0 : index
    %181 = vector.load %arg9[%c0_42, %c0_43] : memref<1x128xf32, #tpu.memory_space<vmem>>, vector<1x128xf32>
    %182 = vector.broadcast %181 : vector<1x128xf32> to vector<16x128xf32>
    %183 = arith.addf %180, %182 : vector<16x128xf32>
    %184 = vector.shape_cast %183 : vector<16x128xf32> to vector<2x8x128xf32>
    %185 = vector.shape_cast %165 : vector<2x128xf32> to vector<2x1x128xf32>
    %186 = vector.broadcast %185 : vector<2x1x128xf32> to vector<2x8x128xf32>
    %187 = arith.addf %184, %186 : vector<2x8x128xf32>
    %c0_44 = arith.constant 0 : index
    %c0_45 = arith.constant 0 : index
    %188 = vector.load %arg8[%c0_44, %c0_45] : memref<32x128xf32, #tpu.memory_space<vmem>>, vector<32x128xf32>
    %189 = vector.extract_strided_slice %187 {offsets = [0, 0, 0], sizes = [2, 1, 128], strides = [1, 1, 1]} : vector<2x8x128xf32> to vector<2x1x128xf32>
    %190 = vector.shape_cast %189 : vector<2x1x128xf32> to vector<2x128xf32>
    %cst_46 = arith.constant dense<0.000000e+00> : vector<2x128xf32>
    %191 = tpu.matmul %162, %188, %cst_46 {dimension_numbers = #tpu.dot_dimension_numbers<[1], [0], [0], [1], [0, 0, 1, 1], [], []>} : vector<2x32xf32>, vector<32x128xf32>, vector<2x128xf32> -> vector<2x128xf32>
    %192 = arith.addf %190, %191 : vector<2x128xf32>
    %193 = arith.negf %192 : vector<2x128xf32>
    %194 = math.exp %193 : vector<2x128xf32>
    %cst_47 = arith.constant 1.000000e+00 : f32
    %195 = vector.broadcast %cst_47 : f32 to vector<2x128xf32>
    %196 = arith.addf %195, %194 : vector<2x128xf32>
    %197 = arith.divf %195, %196 : vector<2x128xf32>
    %198 = vector.extract_strided_slice %197 {offsets = [0, 0], sizes = [2, 32], strides = [1, 1]} : vector<2x128xf32> to vector<2x32xf32>
    %199 = vector.extract_strided_slice %197 {offsets = [0, 96], sizes = [2, 32], strides = [1, 1]} : vector<2x128xf32> to vector<2x32xf32>
    %200 = vector.extract_strided_slice %192 {offsets = [0, 64], sizes = [2, 32], strides = [1, 1]} : vector<2x128xf32> to vector<2x32xf32>
    %201 = math.tanh %200 : vector<2x32xf32>
    %202 = arith.mulf %198, %201 : vector<2x32xf32>
    %203 = math.tanh %202 : vector<2x32xf32>
    %204 = arith.mulf %199, %203 : vector<2x32xf32>
    %205 = vector.extract_strided_slice %187 {offsets = [0, 1, 0], sizes = [2, 1, 128], strides = [1, 1, 1]} : vector<2x8x128xf32> to vector<2x1x128xf32>
    %206 = vector.shape_cast %205 : vector<2x1x128xf32> to vector<2x128xf32>
    %cst_48 = arith.constant dense<0.000000e+00> : vector<2x128xf32>
    %207 = tpu.matmul %204, %188, %cst_48 {dimension_numbers = #tpu.dot_dimension_numbers<[1], [0], [0], [1], [0, 0, 1, 1], [], []>} : vector<2x32xf32>, vector<32x128xf32>, vector<2x128xf32> -> vector<2x128xf32>
    %208 = arith.addf %206, %207 : vector<2x128xf32>
    %209 = arith.negf %208 : vector<2x128xf32>
    %210 = math.exp %209 : vector<2x128xf32>
    %cst_49 = arith.constant 1.000000e+00 : f32
    %211 = vector.broadcast %cst_49 : f32 to vector<2x128xf32>
    %212 = arith.addf %211, %210 : vector<2x128xf32>
    %213 = arith.divf %211, %212 : vector<2x128xf32>
    %214 = vector.extract_strided_slice %213 {offsets = [0, 0], sizes = [2, 32], strides = [1, 1]} : vector<2x128xf32> to vector<2x32xf32>
    %215 = vector.extract_strided_slice %213 {offsets = [0, 32], sizes = [2, 32], strides = [1, 1]} : vector<2x128xf32> to vector<2x32xf32>
    %216 = vector.extract_strided_slice %213 {offsets = [0, 96], sizes = [2, 32], strides = [1, 1]} : vector<2x128xf32> to vector<2x32xf32>
    %217 = vector.extract_strided_slice %208 {offsets = [0, 64], sizes = [2, 32], strides = [1, 1]} : vector<2x128xf32> to vector<2x32xf32>
    %218 = math.tanh %217 : vector<2x32xf32>
    %219 = arith.mulf %215, %202 : vector<2x32xf32>
    %220 = arith.mulf %214, %218 : vector<2x32xf32>
    %221 = arith.addf %219, %220 : vector<2x32xf32>
    %222 = math.tanh %221 : vector<2x32xf32>
    %223 = arith.mulf %216, %222 : vector<2x32xf32>
    %224 = vector.extract_strided_slice %187 {offsets = [0, 2, 0], sizes = [2, 1, 128], strides = [1, 1, 1]} : vector<2x8x128xf32> to vector<2x1x128xf32>
    %225 = vector.shape_cast %224 : vector<2x1x128xf32> to vector<2x128xf32>
    %cst_50 = arith.constant dense<0.000000e+00> : vector<2x128xf32>
    %226 = tpu.matmul %223, %188, %cst_50 {dimension_numbers = #tpu.dot_dimension_numbers<[1], [0], [0], [1], [0, 0, 1, 1], [], []>} : vector<2x32xf32>, vector<32x128xf32>, vector<2x128xf32> -> vector<2x128xf32>
    %227 = arith.addf %225, %226 : vector<2x128xf32>
    %228 = arith.negf %227 : vector<2x128xf32>
    %229 = math.exp %228 : vector<2x128xf32>
    %cst_51 = arith.constant 1.000000e+00 : f32
    %230 = vector.broadcast %cst_51 : f32 to vector<2x128xf32>
    %231 = arith.addf %230, %229 : vector<2x128xf32>
    %232 = arith.divf %230, %231 : vector<2x128xf32>
    %233 = vector.extract_strided_slice %232 {offsets = [0, 0], sizes = [2, 32], strides = [1, 1]} : vector<2x128xf32> to vector<2x32xf32>
    %234 = vector.extract_strided_slice %232 {offsets = [0, 32], sizes = [2, 32], strides = [1, 1]} : vector<2x128xf32> to vector<2x32xf32>
    %235 = vector.extract_strided_slice %232 {offsets = [0, 96], sizes = [2, 32], strides = [1, 1]} : vector<2x128xf32> to vector<2x32xf32>
    %236 = vector.extract_strided_slice %227 {offsets = [0, 64], sizes = [2, 32], strides = [1, 1]} : vector<2x128xf32> to vector<2x32xf32>
    %237 = math.tanh %236 : vector<2x32xf32>
    %238 = arith.mulf %234, %221 : vector<2x32xf32>
    %239 = arith.mulf %233, %237 : vector<2x32xf32>
    %240 = arith.addf %238, %239 : vector<2x32xf32>
    %241 = math.tanh %240 : vector<2x32xf32>
    %242 = arith.mulf %235, %241 : vector<2x32xf32>
    %243 = vector.extract_strided_slice %187 {offsets = [0, 3, 0], sizes = [2, 1, 128], strides = [1, 1, 1]} : vector<2x8x128xf32> to vector<2x1x128xf32>
    %244 = vector.shape_cast %243 : vector<2x1x128xf32> to vector<2x128xf32>
    %cst_52 = arith.constant dense<0.000000e+00> : vector<2x128xf32>
    %245 = tpu.matmul %242, %188, %cst_52 {dimension_numbers = #tpu.dot_dimension_numbers<[1], [0], [0], [1], [0, 0, 1, 1], [], []>} : vector<2x32xf32>, vector<32x128xf32>, vector<2x128xf32> -> vector<2x128xf32>
    %246 = arith.addf %244, %245 : vector<2x128xf32>
    %247 = arith.negf %246 : vector<2x128xf32>
    %248 = math.exp %247 : vector<2x128xf32>
    %cst_53 = arith.constant 1.000000e+00 : f32
    %249 = vector.broadcast %cst_53 : f32 to vector<2x128xf32>
    %250 = arith.addf %249, %248 : vector<2x128xf32>
    %251 = arith.divf %249, %250 : vector<2x128xf32>
    %252 = vector.extract_strided_slice %251 {offsets = [0, 0], sizes = [2, 32], strides = [1, 1]} : vector<2x128xf32> to vector<2x32xf32>
    %253 = vector.extract_strided_slice %251 {offsets = [0, 32], sizes = [2, 32], strides = [1, 1]} : vector<2x128xf32> to vector<2x32xf32>
    %254 = vector.extract_strided_slice %251 {offsets = [0, 96], sizes = [2, 32], strides = [1, 1]} : vector<2x128xf32> to vector<2x32xf32>
    %255 = vector.extract_strided_slice %246 {offsets = [0, 64], sizes = [2, 32], strides = [1, 1]} : vector<2x128xf32> to vector<2x32xf32>
    %256 = math.tanh %255 : vector<2x32xf32>
    %257 = arith.mulf %253, %240 : vector<2x32xf32>
    %258 = arith.mulf %252, %256 : vector<2x32xf32>
    %259 = arith.addf %257, %258 : vector<2x32xf32>
    %260 = math.tanh %259 : vector<2x32xf32>
    %261 = arith.mulf %254, %260 : vector<2x32xf32>
    %262 = vector.extract_strided_slice %187 {offsets = [0, 4, 0], sizes = [2, 1, 128], strides = [1, 1, 1]} : vector<2x8x128xf32> to vector<2x1x128xf32>
    %263 = vector.shape_cast %262 : vector<2x1x128xf32> to vector<2x128xf32>
    %cst_54 = arith.constant dense<0.000000e+00> : vector<2x128xf32>
    %264 = tpu.matmul %261, %188, %cst_54 {dimension_numbers = #tpu.dot_dimension_numbers<[1], [0], [0], [1], [0, 0, 1, 1], [], []>} : vector<2x32xf32>, vector<32x128xf32>, vector<2x128xf32> -> vector<2x128xf32>
    %265 = arith.addf %263, %264 : vector<2x128xf32>
    %266 = arith.negf %265 : vector<2x128xf32>
    %267 = math.exp %266 : vector<2x128xf32>
    %cst_55 = arith.constant 1.000000e+00 : f32
    %268 = vector.broadcast %cst_55 : f32 to vector<2x128xf32>
    %269 = arith.addf %268, %267 : vector<2x128xf32>
    %270 = arith.divf %268, %269 : vector<2x128xf32>
    %271 = vector.extract_strided_slice %270 {offsets = [0, 0], sizes = [2, 32], strides = [1, 1]} : vector<2x128xf32> to vector<2x32xf32>
    %272 = vector.extract_strided_slice %270 {offsets = [0, 32], sizes = [2, 32], strides = [1, 1]} : vector<2x128xf32> to vector<2x32xf32>
    %273 = vector.extract_strided_slice %270 {offsets = [0, 96], sizes = [2, 32], strides = [1, 1]} : vector<2x128xf32> to vector<2x32xf32>
    %274 = vector.extract_strided_slice %265 {offsets = [0, 64], sizes = [2, 32], strides = [1, 1]} : vector<2x128xf32> to vector<2x32xf32>
    %275 = math.tanh %274 : vector<2x32xf32>
    %276 = arith.mulf %272, %259 : vector<2x32xf32>
    %277 = arith.mulf %271, %275 : vector<2x32xf32>
    %278 = arith.addf %276, %277 : vector<2x32xf32>
    %279 = math.tanh %278 : vector<2x32xf32>
    %280 = arith.mulf %273, %279 : vector<2x32xf32>
    %281 = vector.extract_strided_slice %187 {offsets = [0, 5, 0], sizes = [2, 1, 128], strides = [1, 1, 1]} : vector<2x8x128xf32> to vector<2x1x128xf32>
    %282 = vector.shape_cast %281 : vector<2x1x128xf32> to vector<2x128xf32>
    %cst_56 = arith.constant dense<0.000000e+00> : vector<2x128xf32>
    %283 = tpu.matmul %280, %188, %cst_56 {dimension_numbers = #tpu.dot_dimension_numbers<[1], [0], [0], [1], [0, 0, 1, 1], [], []>} : vector<2x32xf32>, vector<32x128xf32>, vector<2x128xf32> -> vector<2x128xf32>
    %284 = arith.addf %282, %283 : vector<2x128xf32>
    %285 = arith.negf %284 : vector<2x128xf32>
    %286 = math.exp %285 : vector<2x128xf32>
    %cst_57 = arith.constant 1.000000e+00 : f32
    %287 = vector.broadcast %cst_57 : f32 to vector<2x128xf32>
    %288 = arith.addf %287, %286 : vector<2x128xf32>
    %289 = arith.divf %287, %288 : vector<2x128xf32>
    %290 = vector.extract_strided_slice %289 {offsets = [0, 0], sizes = [2, 32], strides = [1, 1]} : vector<2x128xf32> to vector<2x32xf32>
    %291 = vector.extract_strided_slice %289 {offsets = [0, 32], sizes = [2, 32], strides = [1, 1]} : vector<2x128xf32> to vector<2x32xf32>
    %292 = vector.extract_strided_slice %289 {offsets = [0, 96], sizes = [2, 32], strides = [1, 1]} : vector<2x128xf32> to vector<2x32xf32>
    %293 = vector.extract_strided_slice %284 {offsets = [0, 64], sizes = [2, 32], strides = [1, 1]} : vector<2x128xf32> to vector<2x32xf32>
    %294 = math.tanh %293 : vector<2x32xf32>
    %295 = arith.mulf %291, %278 : vector<2x32xf32>
    %296 = arith.mulf %290, %294 : vector<2x32xf32>
    %297 = arith.addf %295, %296 : vector<2x32xf32>
    %298 = math.tanh %297 : vector<2x32xf32>
    %299 = arith.mulf %292, %298 : vector<2x32xf32>
    %300 = vector.extract_strided_slice %187 {offsets = [0, 6, 0], sizes = [2, 1, 128], strides = [1, 1, 1]} : vector<2x8x128xf32> to vector<2x1x128xf32>
    %301 = vector.shape_cast %300 : vector<2x1x128xf32> to vector<2x128xf32>
    %cst_58 = arith.constant dense<0.000000e+00> : vector<2x128xf32>
    %302 = tpu.matmul %299, %188, %cst_58 {dimension_numbers = #tpu.dot_dimension_numbers<[1], [0], [0], [1], [0, 0, 1, 1], [], []>} : vector<2x32xf32>, vector<32x128xf32>, vector<2x128xf32> -> vector<2x128xf32>
    %303 = arith.addf %301, %302 : vector<2x128xf32>
    %304 = arith.negf %303 : vector<2x128xf32>
    %305 = math.exp %304 : vector<2x128xf32>
    %cst_59 = arith.constant 1.000000e+00 : f32
    %306 = vector.broadcast %cst_59 : f32 to vector<2x128xf32>
    %307 = arith.addf %306, %305 : vector<2x128xf32>
    %308 = arith.divf %306, %307 : vector<2x128xf32>
    %309 = vector.extract_strided_slice %308 {offsets = [0, 0], sizes = [2, 32], strides = [1, 1]} : vector<2x128xf32> to vector<2x32xf32>
    %310 = vector.extract_strided_slice %308 {offsets = [0, 32], sizes = [2, 32], strides = [1, 1]} : vector<2x128xf32> to vector<2x32xf32>
    %311 = vector.extract_strided_slice %308 {offsets = [0, 96], sizes = [2, 32], strides = [1, 1]} : vector<2x128xf32> to vector<2x32xf32>
    %312 = vector.extract_strided_slice %303 {offsets = [0, 64], sizes = [2, 32], strides = [1, 1]} : vector<2x128xf32> to vector<2x32xf32>
    %313 = math.tanh %312 : vector<2x32xf32>
    %314 = arith.mulf %310, %297 : vector<2x32xf32>
    %315 = arith.mulf %309, %313 : vector<2x32xf32>
    %316 = arith.addf %314, %315 : vector<2x32xf32>
    %317 = math.tanh %316 : vector<2x32xf32>
    %318 = arith.mulf %311, %317 : vector<2x32xf32>
    %319 = vector.extract_strided_slice %187 {offsets = [0, 7, 0], sizes = [2, 1, 128], strides = [1, 1, 1]} : vector<2x8x128xf32> to vector<2x1x128xf32>
    %320 = vector.shape_cast %319 : vector<2x1x128xf32> to vector<2x128xf32>
    %cst_60 = arith.constant dense<0.000000e+00> : vector<2x128xf32>
    %321 = tpu.matmul %318, %188, %cst_60 {dimension_numbers = #tpu.dot_dimension_numbers<[1], [0], [0], [1], [0, 0, 1, 1], [], []>} : vector<2x32xf32>, vector<32x128xf32>, vector<2x128xf32> -> vector<2x128xf32>
    %322 = arith.addf %320, %321 : vector<2x128xf32>
    %323 = arith.negf %322 : vector<2x128xf32>
    %324 = math.exp %323 : vector<2x128xf32>
    %cst_61 = arith.constant 1.000000e+00 : f32
    %325 = vector.broadcast %cst_61 : f32 to vector<2x128xf32>
    %326 = arith.addf %325, %324 : vector<2x128xf32>
    %327 = arith.divf %325, %326 : vector<2x128xf32>
    %328 = vector.extract_strided_slice %327 {offsets = [0, 0], sizes = [2, 32], strides = [1, 1]} : vector<2x128xf32> to vector<2x32xf32>
    %329 = vector.extract_strided_slice %327 {offsets = [0, 32], sizes = [2, 32], strides = [1, 1]} : vector<2x128xf32> to vector<2x32xf32>
    %330 = vector.extract_strided_slice %327 {offsets = [0, 96], sizes = [2, 32], strides = [1, 1]} : vector<2x128xf32> to vector<2x32xf32>
    %331 = vector.extract_strided_slice %322 {offsets = [0, 64], sizes = [2, 32], strides = [1, 1]} : vector<2x128xf32> to vector<2x32xf32>
    %332 = math.tanh %331 : vector<2x32xf32>
    %333 = arith.mulf %329, %316 : vector<2x32xf32>
    %334 = arith.mulf %328, %332 : vector<2x32xf32>
    %335 = arith.addf %333, %334 : vector<2x32xf32>
    %336 = math.tanh %335 : vector<2x32xf32>
    %337 = arith.mulf %330, %336 : vector<2x32xf32>
    %338 = vector.shape_cast %204 : vector<2x32xf32> to vector<2x1x32xf32>
    %339 = vector.shape_cast %223 : vector<2x32xf32> to vector<2x1x32xf32>
    %340 = vector.shape_cast %242 : vector<2x32xf32> to vector<2x1x32xf32>
    %341 = vector.shape_cast %261 : vector<2x32xf32> to vector<2x1x32xf32>
    %342 = vector.shape_cast %280 : vector<2x32xf32> to vector<2x1x32xf32>
    %343 = vector.shape_cast %299 : vector<2x32xf32> to vector<2x1x32xf32>
    %344 = vector.shape_cast %318 : vector<2x32xf32> to vector<2x1x32xf32>
    %345 = vector.shape_cast %337 : vector<2x32xf32> to vector<2x1x32xf32>
    %346 = tpu.concatenate %338, %339, %340, %341, %342, %343, %344, %345 in 1 : vector<2x1x32xf32>, vector<2x1x32xf32>, vector<2x1x32xf32>, vector<2x1x32xf32>, vector<2x1x32xf32>, vector<2x1x32xf32>, vector<2x1x32xf32>, vector<2x1x32xf32> -> vector<2x8x32xf32>
    %347 = vector.shape_cast %346 : vector<2x8x32xf32> to vector<16x32xf32>
    %c0_62 = arith.constant 0 : index
    %c0_63 = arith.constant 0 : index
    %348 = vector.load %arg11[%c0_62, %c0_63] : memref<32x128xf32, #tpu.memory_space<vmem>>, vector<32x128xf32>
    %cst_64 = arith.constant dense<0.000000e+00> : vector<16x128xf32>
    %349 = tpu.matmul %347, %348, %cst_64 {dimension_numbers = #tpu.dot_dimension_numbers<[1], [0], [0], [1], [0, 0, 1, 1], [], []>} : vector<16x32xf32>, vector<32x128xf32>, vector<16x128xf32> -> vector<16x128xf32>
    %350 = vector.shape_cast %349 : vector<16x128xf32> to vector<2x8x128xf32>
    %351 = vector.shape_cast %169 : vector<2x128xf32> to vector<2x1x128xf32>
    %352 = vector.broadcast %351 : vector<2x1x128xf32> to vector<2x8x128xf32>
    %353 = arith.addf %350, %352 : vector<2x8x128xf32>
    %c0_65 = arith.constant 0 : index
    %c0_66 = arith.constant 0 : index
    %c0_67 = arith.constant 0 : index
    %354 = vector.load %arg13[%c0_65, %c0_66, %c0_67] : memref<2x8x128xf32, #tpu.memory_space<vmem>>, vector<2x8x128xf32>
    tpu.vector_store %arg13[%c0_65, %c0_66, %c0_67], %353 {strides = array<i32>} : memref<2x8x128xf32, #tpu.memory_space<vmem>>, vector<2x8x128xf32>,
    return
  }
}

</mosaic_0001>

<llo_original>
// kernel: seq2seq_forward.1
$region0: #{seq2seq_forward.1}
  #allocation0 [shape = 'u32[]', space=smem, size = 0x4, offset = 0x4, fixed_abs, tag = 'smem constant byte address 0x4 - core index']
  #allocation1 [shape = 'u32[144,128]{1,0:T(1,128)}', space=vmem, size = 0x12000, scoped, tag = 'internal scratch']
  %s0 = inlined_call_operand.vmem [shape: s32[16,1], index: 0, kind: input, shape index: {}]
  %s1 = inlined_call_operand.vmem [shape: s32[16,1], index: 1, kind: input, shape index: {}]
  %s2 = inlined_call_operand.vmem [shape: f32[32,16], index: 2, kind: input, shape index: {}]
  %s3 = inlined_call_operand.hbm [shape: f32[16,128], index: 3, kind: input, shape index: {}]
  %s4 = inlined_call_operand.vmem [shape: f32[32,128], index: 4, kind: input, shape index: {}]
  %s5 = inlined_call_operand.hbm [shape: f32[1,128], index: 5, kind: input, shape index: {}]
  %s6 = inlined_call_operand.vmem [shape: f32[32,16], index: 6, kind: input, shape index: {}]
  %s7 = inlined_call_operand.hbm [shape: f32[16,128], index: 7, kind: input, shape index: {}]
  %s8 = inlined_call_operand.vmem [shape: f32[32,128], index: 8, kind: input, shape index: {}]
  %s9 = inlined_call_operand.hbm [shape: f32[1,128], index: 9, kind: input, shape index: {}]
  %s10 = inlined_call_operand.vmem [shape: f32[32,256], index: 10, kind: input, shape index: {}]
  %s11 = inlined_call_operand.vmem [shape: f32[32,128], index: 11, kind: input, shape index: {}]
  %s12 = inlined_call_operand.hbm [shape: f32[1,128], index: 12, kind: input, shape index: {}]
  %s13 = inlined_call_operand.hbm [shape: f32[2,8,128], index: 13, kind: output, shape index: {}]
  %s14 = sld [smem:[#allocation0]]
  $region82: #{seq2seq_forward.1} parent=0
    _
  %s16 = ssub.s32 1, %s14
  %s17 = scalar_select 0, %s16, %s14
  $region1: #{seq2seq_forward.1} parent=0
    #allocation2 [shape = 'u8[8192]{0}', space=vmem, size = 0x2000, scoped, tag = 'input window, operand 3, single buffered']
    #allocation3 [shape = 's32[1]{0}', space=sflag, size = 0x4, scoped, tag = 'scoped memory for seq2seq_forward.1']
    #allocation4 [shape = 's32[1]{0}', space=sflag, size = 0x4, scoped, tag = 'scoped memory for seq2seq_forward.1']
    #allocation5 [shape = 'u8[512]{0}', space=vmem, size = 0x400, scoped, tag = 'input window, operand 5, single buffered']
    #allocation6 [shape = 's32[1]{0}', space=sflag, size = 0x4, scoped, tag = 'scoped memory for seq2seq_forward.1']
    #allocation7 [shape = 'u8[8192]{0}', space=vmem, size = 0x2000, scoped, tag = 'input window, operand 7, single buffered']
    #allocation8 [shape = 'u8[512]{0}', space=vmem, size = 0x400, scoped, tag = 'input window, operand 9, single buffered']
    #allocation9 [shape = 's32[1]{0}', space=sflag, size = 0x4, scoped, tag = 'scoped memory for seq2seq_forward.1']
    #allocation10 [shape = 'u8[512]{0}', space=vmem, size = 0x400, scoped, tag = 'input window, operand 12, single buffered']
    #allocation11 [shape = 'u8[8192]{0}', space=vmem, size = 0x2000, scoped, tag = 'output window, operand 0, single buffered']
    %18 = vsyncpa [#allocation3], 0
    %19 = vsyncpa [#allocation6], 0
    %20 = vsyncpa [#allocation9], 0
    %21 = vsyncpa [#allocation4], 0
    // Predicated region
    $region2: #{seq2seq_forward.1} parent=1 // pred_check
      _
    $region3: #{seq2seq_forward.1} parent=1 // pred_check_branch
      %23 = sbr.rel (0) target = $region5
    $region4: #{seq2seq_forward.1} parent=1 // pred_region
      _
    $region5: #{seq2seq_forward.1} parent=1 // pred_fallthru
      _
    // Predicated region
    $region6: #{seq2seq_forward.1} parent=1 // pred_check
      _
    $region7: #{seq2seq_forward.1} parent=1 // pred_check_branch
      %25 = sbr.rel (0) target = $region9
    $region8: #{seq2seq_forward.1} parent=1 // pred_region
      _
    $region9: #{seq2seq_forward.1} parent=1 // pred_fallthru
      _
    // Predicated region
    $region10: #{seq2seq_forward.1} parent=1 // pred_check
      _
    $region11: #{seq2seq_forward.1} parent=1 // pred_check_branch
      %27 = sbr.rel (0) target = $region13
    $region12: #{seq2seq_forward.1} parent=1 // pred_region
      _
    $region13: #{seq2seq_forward.1} parent=1 // pred_fallthru
      _
    // Predicated region
    $region14: #{seq2seq_forward.1} parent=1 // pred_check
      _
    $region15: #{seq2seq_forward.1} parent=1 // pred_check_branch
      %29 = sbr.rel (0) target = $region17
    $region16: #{seq2seq_forward.1} parent=1 // pred_region
      %s31 = ssub.s32 256, 256
      %32 = vsyncadd [#allocation3], %s31
      %s33 = sshll.u32 [#allocation2], 4
      %s34 = int_to_ptr.vmem [resolvable:$true] %s33
      %39 = dma.hbm_to_vmem [thread:$0]  %s3, 256, %s34, [#allocation3], 128, 128, 8
    $region17: #{seq2seq_forward.1} parent=1 // pred_fallthru
      _
    // Predicated region
    $region18: #{seq2seq_forward.1} parent=1 // pred_check
      _
    $region19: #{seq2seq_forward.1} parent=1 // pred_check_branch
      %41 = sbr.rel (0) target = $region21
    $region20: #{seq2seq_forward.1} parent=1 // pred_region
      _
    $region21: #{seq2seq_forward.1} parent=1 // pred_fallthru
      _
    // Predicated region
    $region22: #{seq2seq_forward.1} parent=1 // pred_check
      _
    $region23: #{seq2seq_forward.1} parent=1 // pred_check_branch
      %43 = sbr.rel (0) target = $region25
    $region24: #{seq2seq_forward.1} parent=1 // pred_region
      %s45 = ssub.s32 16, 16
      %46 = vsyncadd [#allocation6], %s45
      %s48 = sshll.u32 [#allocation5], 4
      %s49 = int_to_ptr.vmem [resolvable:$true] %s48
      %51 = dma.hbm_to_vmem [thread:$0]  %s5, 16, %s49, [#allocation6]
    $region25: #{seq2seq_forward.1} parent=1 // pred_fallthru
      _
    // Predicated region
    $region26: #{seq2seq_forward.1} parent=1 // pred_check
      _
    $region27: #{seq2seq_forward.1} parent=1 // pred_check_branch
      %53 = sbr.rel (0) target = $region29
    $region28: #{seq2seq_forward.1} parent=1 // pred_region
      _
    $region29: #{seq2seq_forward.1} parent=1 // pred_fallthru
      _
    // Predicated region
    $region30: #{seq2seq_forward.1} parent=1 // pred_check
      _
    $region31: #{seq2seq_forward.1} parent=1 // pred_check_branch
      %55 = sbr.rel (0) target = $region33
    $region32: #{seq2seq_forward.1} parent=1 // pred_region
      %s57 = ssub.s32 256, 256
      %58 = vsyncadd [#allocation6], %s57
      %s59 = sshll.u32 [#allocation7], 4
      %s60 = int_to_ptr.vmem [resolvable:$true] %s59
      %65 = dma.hbm_to_vmem [thread:$0]  %s7, 256, %s60, [#allocation6], 128, 128, 8
    $region33: #{seq2seq_forward.1} parent=1 // pred_fallthru
      _
    // Predicated region
    $region34: #{seq2seq_forward.1} parent=1 // pred_check
      _
    $region35: #{seq2seq_forward.1} parent=1 // pred_check_branch
      %67 = sbr.rel (0) target = $region37
    $region36: #{seq2seq_forward.1} parent=1 // pred_region
      _
    $region37: #{seq2seq_forward.1} parent=1 // pred_fallthru
      _
    // Predicated region
    $region38: #{seq2seq_forward.1} parent=1 // pred_check
      _
    $region39: #{seq2seq_forward.1} parent=1 // pred_check_branch
      %69 = sbr.rel (0) target = $region41
    $region40: #{seq2seq_forward.1} parent=1 // pred_region
      %s71 = ssub.s32 16, 16
      %72 = vsyncadd [#allocation9], %s71
      %s74 = sshll.u32 [#allocation8], 4
      %s75 = int_to_ptr.vmem [resolvable:$true] %s74
      %77 = dma.hbm_to_vmem [thread:$0]  %s9, 16, %s75, [#allocation9]
    $region41: #{seq2seq_forward.1} parent=1 // pred_fallthru
      _
    // Predicated region
    $region42: #{seq2seq_forward.1} parent=1 // pred_check
      _
    $region43: #{seq2seq_forward.1} parent=1 // pred_check_branch
      %79 = sbr.rel (0) target = $region45
    $region44: #{seq2seq_forward.1} parent=1 // pred_region
      _
    $region45: #{seq2seq_forward.1} parent=1 // pred_fallthru
      _
    // Predicated region
    $region46: #{seq2seq_forward.1} parent=1 // pred_check
      _
    $region47: #{seq2seq_forward.1} parent=1 // pred_check_branch
      %81 = sbr.rel (0) target = $region49
    $region48: #{seq2seq_forward.1} parent=1 // pred_region
      _
    $region49: #{seq2seq_forward.1} parent=1 // pred_fallthru
      _
    // Predicated region
    $region50: #{seq2seq_forward.1} parent=1 // pred_check
      _
    $region51: #{seq2seq_forward.1} parent=1 // pred_check_branch
      %83 = sbr.rel (0) target = $region53
    $region52: #{seq2seq_forward.1} parent=1 // pred_region
      %s85 = ssub.s32 16, 16
      %86 = vsyncadd [#allocation9], %s85
      %s88 = sshll.u32 [#allocation10], 4
      %s89 = int_to_ptr.vmem [resolvable:$true] %s88
      %91 = dma.hbm_to_vmem [thread:$0]  %s12, 16, %s89, [#allocation9]
    $region53: #{seq2seq_forward.1} parent=1 // pred_fallthru
      _
    // Predicated region
    $region54: #{seq2seq_forward.1} parent=1 // pred_check
      _
    $region55: #{seq2seq_forward.1} parent=1 // pred_check_branch
      %93 = sbr.rel (0) target = $region57
    $region56: #{seq2seq_forward.1} parent=1 // pred_region
      %94 = dma.done [#allocation3], 256
    $region57: #{seq2seq_forward.1} parent=1 // pred_fallthru
      _
    // Predicated region
    $region58: #{seq2seq_forward.1} parent=1 // pred_check
      _
    $region59: #{seq2seq_forward.1} parent=1 // pred_check_branch
      %96 = sbr.rel (0) target = $region61
    $region60: #{seq2seq_forward.1} parent=1 // pred_region
      %97 = dma.done [#allocation6], 16
    $region61: #{seq2seq_forward.1} parent=1 // pred_fallthru
      _
    // Predicated region
    $region62: #{seq2seq_forward.1} parent=1 // pred_check
      _
    $region63: #{seq2seq_forward.1} parent=1 // pred_check_branch
      %99 = sbr.rel (0) target = $region65
    $region64: #{seq2seq_forward.1} parent=1 // pred_region
      %100 = dma.done [#allocation6], 256
    $region65: #{seq2seq_forward.1} parent=1 // pred_fallthru
      _
    // Predicated region
    $region66: #{seq2seq_forward.1} parent=1 // pred_check
      _
    $region67: #{seq2seq_forward.1} parent=1 // pred_check_branch
      %102 = sbr.rel (0) target = $region69
    $region68: #{seq2seq_forward.1} parent=1 // pred_region
      %103 = dma.done [#allocation9], 16
    $region69: #{seq2seq_forward.1} parent=1 // pred_fallthru
      _
    // Predicated region
    $region70: #{seq2seq_forward.1} parent=1 // pred_check
      _
    $region71: #{seq2seq_forward.1} parent=1 // pred_check_branch
      %105 = sbr.rel (0) target = $region73
    $region72: #{seq2seq_forward.1} parent=1 // pred_region
      %106 = dma.done [#allocation9], 16
    $region73: #{seq2seq_forward.1} parent=1 // pred_fallthru
      _
    %v107 = vld [vmem:[%s2] sm:$0xff]
    %v108 = vld [vmem:[%s2 + $0x8] sm:$0xff]
    %v109 = vld [vmem:[%s2 + $0x10] sm:$0xff]
    %v110 = vld [vmem:[%s2 + $0x18] sm:$0xff]
    %v111 = vld [vmem:[#allocation2] sm:$0xff]
    %v112 = vld [vmem:[#allocation2 + $0x8] sm:$0xff]
    %vm113 = vcmask 130048
    %v115 = vsel %vm113, %v107, 0
    %v118 = vsel %vm113, %v108, 0
    %v121 = vsel %vm113, %v109, 0
    %v124 = vsel %vm113, %v110, 0
    %126 = vmatprep.subr.mxu0 0.0
    %127 = vmatpush1.msra.mxu0 %v111
    %128 = vmatprep.subr.mxu0 0.0
    %129 = vmatpush1.msra.mxu0 %v112
    %130 = vmatprep.subr.mxu0 0.0
    %131 = vmatpush1.msra.mxu0 0.0
    %132 = vmatprep.subr.mxu0 0.0
    %133 = vmatpush1.msra.mxu0 0.0
    %134 = vmatprep.subr.mxu0 0.0
    %135 = vmatpush1.msra.mxu0 0.0
    %136 = vmatprep.subr.mxu0 0.0
    %137 = vmatpush1.msra.mxu0 0.0
    %138 = vmatprep.subr.mxu0 0.0
    %139 = vmatpush1.msra.mxu0 0.0
    %140 = vmatprep.subr.mxu0 0.0
    %141 = vmatpush1.msra.mxu0 0.0
    %142 = vmatprep.subr.mxu0 0.0
    %143 = vmatpush1.msra.mxu0 0.0
    %144 = vmatprep.subr.mxu0 0.0
    %145 = vmatpush1.msra.mxu0 0.0
    %146 = vmatprep.subr.mxu0 0.0
    %147 = vmatpush1.msra.mxu0 0.0
    %148 = vmatprep.subr.mxu0 0.0
    %149 = vmatpush1.msra.mxu0 0.0
    %150 = vmatprep.subr.mxu0 0.0
    %151 = vmatpush1.msra.mxu0 0.0
    %152 = vmatprep.subr.mxu0 0.0
    %153 = vmatpush1.msra.mxu0 0.0
    %154 = vmatprep.subr.mxu0 0.0
    %155 = vmatpush1.msra.mxu0 0.0
    %156 = vmatprep.subr.mxu0 0.0
    %157 = vmatpush1.msra.mxu0 0.0
    %158 = vmatprep.subr.mxu0 0.0
    %159 = vmatpush1.msra.mxu0 0.0
    %160 = vmatprep.subr.mxu0 0.0
    %161 = vmatpush1.msra.mxu0 0.0
    %162 = vmatprep.subr.mxu0 0.0
    %163 = vmatpush1.msra.mxu0 0.0
    %164 = vmatprep.subr.mxu0 0.0
    %165 = vmatpush1.msra.mxu0 0.0
    %166 = vmatprep.subr.mxu0 0.0
    %167 = vmatpush1.msra.mxu0 0.0
    %168 = vmatprep.subr.mxu0 0.0
    %169 = vmatpush1.msra.mxu0 0.0
    %170 = vmatprep.subr.mxu0 0.0
    %171 = vmatpush1.msra.mxu0 0.0
    %172 = vmatprep.subr.mxu0 0.0
    %173 = vmatpush1.msra.mxu0 0.0
    %174 = vmatprep.subr.mxu0 0.0
    %175 = vmatpush1.msra.mxu0 0.0
    %176 = vmatprep.subr.mxu0 0.0
    %177 = vmatpush1.msra.mxu0 0.0
    %178 = vmatprep.subr.mxu0 0.0
    %179 = vmatpush1.msra.mxu0 0.0
    %180 = vmatprep.subr.mxu0 0.0
    %181 = vmatpush1.msra.mxu0 0.0
    %182 = vmatprep.subr.mxu0 0.0
    %183 = vmatpush1.msra.mxu0 0.0
    %184 = vmatprep.subr.mxu0 0.0
    %185 = vmatpush1.msra.mxu0 0.0
    %186 = vmatprep.subr.mxu0 0.0
    %187 = vmatpush1.msra.mxu0 0.0
    %188 = vmatprep.subr.mxu0 0.0
    %189 = vmatpush1.msra.mxu0 0.0
    %190 = vmatprep.mubr.f32.mxu0 0.0
    %191 = vmatmul.mubr.f32.gmra.mrb[0].mxu0 %v115
    %v192 = vpop.f32.mrb[0].mxu0
    %v193 = vadd.f32 0.0, %v192
    %v194 = vpop.f32.mrb[0].mxu0
    %195 = vmatprep.mubr.f32.mxu0 0.0
    %196 = vmatmul.mubr.f32.gmra.mrb[0].mxu0 %v118
    %v197 = vpop.f32.mrb[0].mxu0
    %v198 = vadd.f32 0.0, %v197
    %v199 = vpop.f32.mrb[0].mxu0
    %200 = vmatprep.mubr.f32.mxu0 0.0
    %201 = vmatmul.mubr.f32.gmra.mrb[0].mxu0 %v121
    %v202 = vpop.f32.mrb[0].mxu0
    %v203 = vadd.f32 0.0, %v202
    %v204 = vpop.f32.mrb[0].mxu0
    %205 = vmatprep.mubr.f32.mxu0 0.0
    %206 = vmatmul.mubr.f32.gmra.mrb[0].mxu0 %v124
    %v207 = vpop.f32.mrb[0].mxu0
    %v208 = vadd.f32 0.0, %v207
    %v209 = vpop.f32.mrb[0].mxu0
    %210 = vdwg.mxu0
    %v211 = vld [vmem:[%s0] sm:$0xff]
    %v212 = vld [vmem:[%s0 + $0x8] sm:$0xff]
    %v213 = vlaneseq
    %v214 = vand.u32 %v213, 127
    %215 = vset.pattern.permute.xlu0 0
    %216 = vperm.xlu0 %215, %v211
    %v217 = vpop.permute.xlu0 %216
    %218 = vset.pattern.permute.xlu0 0
    %219 = vperm.xlu0 %218, %v212
    %v220 = vpop.permute.xlu0 %219
    %vm221 = vcmp.eq.s32.totalorder %v217, %v214
    %vm222 = vcmp.eq.s32.totalorder %v220, %v214
    %v223 = vsel %vm221, 1.0, 0.0
    %v224 = vsel %vm222, 1.0, 0.0
    %v225 = vld [vmem:[#allocation5] sm:$0x1]
    %v227 = vlaneseq
    %v228 = vshrl.u32 %v227, 7
    %v229 = vsub.s32 0, %v228
    %v230 = vrot.slane %v225, %v229
    %vm232 = vcmask 261120
    %v234 = vsel %vm232, %v223, 0
    %v237 = vsel %vm232, %v224, 0
    %239 = vmatprep.subr.mxu0 0.0
    %240 = vmatpush1.msra.mxu0 %v193
    %241 = vmatprep.subr.mxu0 0.0
    %242 = vmatpush1.msra.mxu0 %v198
    %243 = vmatprep.subr.mxu0 0.0
    %244 = vmatpush1.msra.mxu0 %v203
    %245 = vmatprep.subr.mxu0 0.0
    %246 = vmatpush1.msra.mxu0 %v208
    %247 = vmatprep.subr.mxu0 0.0
    %248 = vmatpush1.msra.mxu0 0.0
    %249 = vmatprep.subr.mxu0 0.0
    %250 = vmatpush1.msra.mxu0 0.0
    %251 = vmatprep.subr.mxu0 0.0
    %252 = vmatpush1.msra.mxu0 0.0
    %253 = vmatprep.subr.mxu0 0.0
    %254 = vmatpush1.msra.mxu0 0.0
    %255 = vmatprep.subr.mxu0 0.0
    %256 = vmatpush1.msra.mxu0 0.0
    %257 = vmatprep.subr.mxu0 0.0
    %258 = vmatpush1.msra.mxu0 0.0
    %259 = vmatprep.subr.mxu0 0.0
    %260 = vmatpush1.msra.mxu0 0.0
    %261 = vmatprep.subr.mxu0 0.0
    %262 = vmatpush1.msra.mxu0 0.0
    %263 = vmatprep.subr.mxu0 0.0
    %264 = vmatpush1.msra.mxu0 0.0
    %265 = vmatprep.subr.mxu0 0.0
    %266 = vmatpush1.msra.mxu0 0.0
    %267 = vmatprep.subr.mxu0 0.0
    %268 = vmatpush1.msra.mxu0 0.0
    %269 = vmatprep.subr.mxu0 0.0
    %270 = vmatpush1.msra.mxu0 0.0
    %271 = vmatprep.subr.mxu0 0.0
    %272 = vmatpush1.msra.mxu0 0.0
    %273 = vmatprep.subr.mxu0 0.0
    %274 = vmatpush1.msra.mxu0 0.0
    %275 = vmatprep.subr.mxu0 0.0
    %276 = vmatpush1.msra.mxu0 0.0
    %277 = vmatprep.subr.mxu0 0.0
    %278 = vmatpush1.msra.mxu0 0.0
    %279 = vmatprep.subr.mxu0 0.0
    %280 = vmatpush1.msra.mxu0 0.0
    %281 = vmatprep.subr.mxu0 0.0
    %282 = vmatpush1.msra.mxu0 0.0
    %283 = vmatprep.subr.mxu0 0.0
    %284 = vmatpush1.msra.mxu0 0.0
    %285 = vmatprep.subr.mxu0 0.0
    %286 = vmatpush1.msra.mxu0 0.0
    %287 = vmatprep.subr.mxu0 0.0
    %288 = vmatpush1.msra.mxu0 0.0
    %289 = vmatprep.subr.mxu0 0.0
    %290 = vmatpush1.msra.mxu0 0.0
    %291 = vmatprep.subr.mxu0 0.0
    %292 = vmatpush1.msra.mxu0 0.0
    %293 = vmatprep.subr.mxu0 0.0
    %294 = vmatpush1.msra.mxu0 0.0
    %295 = vmatprep.subr.mxu0 0.0
    %296 = vmatpush1.msra.mxu0 0.0
    %297 = vmatprep.subr.mxu0 0.0
    %298 = vmatpush1.msra.mxu0 0.0
    %299 = vmatprep.subr.mxu0 0.0
    %300 = vmatpush1.msra.mxu0 0.0
    %301 = vmatprep.subr.mxu0 0.0
    %302 = vmatpush1.msra.mxu0 0.0
    %303 = vmatprep.mubr.f32.mxu0 0.0
    %304 = vmatmul.mubr.f32.gmra.mrb[0].mxu0 %v234
    %v305 = vpop.f32.mrb[0].mxu0
    %v306 = vadd.f32 %v230, %v305
    %v307 = vpop.f32.mrb[0].mxu0
    %308 = vmatprep.mubr.f32.mxu0 0.0
    %309 = vmatmul.mubr.f32.gmra.mrb[0].mxu0 %v237
    %v310 = vpop.f32.mrb[0].mxu0
    %v311 = vadd.f32 %v230, %v310
    %v312 = vpop.f32.mrb[0].mxu0
    %313 = vdwg.mxu0
    %v314 = vld [vmem:[%s4] sm:$0xff]
    %v315 = vld [vmem:[%s4 + $0x8] sm:$0xff]
    %v316 = vld [vmem:[%s4 + $0x10] sm:$0xff]
    %v317 = vld [vmem:[%s4 + $0x18] sm:$0xff]
    %v318 = vxor.u32 %v306, 2147483648
    %v319 = vxor.u32 %v311, 2147483648
    %v320 = vmul.f32 %v318, 1.442695
    %v321 = vpow.pop %v320
    %v322 = vmul.f32 %v319, 1.442695
    %v323 = vpow.pop %v322
    %v324 = vadd.f32 %v321, 1.0
    %v325 = vadd.f32 %v323, 1.0
    %v326 = vrcp.pop %v324
    %v327 = vmul.f32 1.0, %v326
    %v328 = vrcp.pop %v325
    %v329 = vmul.f32 1.0, %v328
    %v330 = vtanh.pop %v306
    %v331 = vtanh.pop %v311
    %334 = vrot.lane.b32.xlu0 %v330, 64
    %v335 = vpop.permute.xlu0 %334
    %336 = vrot.lane.b32.xlu0 %v331, 64
    %v337 = vpop.permute.xlu0 %336
    %v340 = vmul.f32 %v327, %v335
    %v341 = vmul.f32 %v329, %v337
    %v342 = vtanh.pop %v340
    %v343 = vtanh.pop %v341
    %346 = vrot.lane.b32.xlu0 %v342, 96
    %v347 = vpop.permute.xlu0 %346
    %348 = vrot.lane.b32.xlu0 %v343, 96
    %v349 = vpop.permute.xlu0 %348
    %v352 = vmul.f32 %v327, %v347
    %v353 = vmul.f32 %v329, %v349
    %v356 = vrot.slane %v353, 7
    %vm357 = vcmask 1041409
    %v358 = vsel %vm357, %v356, %v352
    %359 = vrot.lane.b32.xlu0 %v358, 32
    %v360 = vpop.permute.xlu0 %359
    %v361 = vsel %vm232, %v360, 0
    %363 = vmatprep.subr.mxu0 0.0
    %364 = vmatpush1.msra.mxu0 %v314
    %365 = vmatprep.subr.mxu0 0.0
    %366 = vmatpush1.msra.mxu0 %v315
    %367 = vmatprep.subr.mxu0 0.0
    %368 = vmatpush1.msra.mxu0 %v316
    %369 = vmatprep.subr.mxu0 0.0
    %370 = vmatpush1.msra.mxu0 %v317
    %371 = vmatprep.subr.mxu0 0.0
    %372 = vmatpush1.msra.mxu0 0.0
    %373 = vmatprep.subr.mxu0 0.0
    %374 = vmatpush1.msra.mxu0 0.0
    %375 = vmatprep.subr.mxu0 0.0
    %376 = vmatpush1.msra.mxu0 0.0
    %377 = vmatprep.subr.mxu0 0.0
    %378 = vmatpush1.msra.mxu0 0.0
    %379 = vmatprep.subr.mxu0 0.0
    %380 = vmatpush1.msra.mxu0 0.0
    %381 = vmatprep.subr.mxu0 0.0
    %382 = vmatpush1.msra.mxu0 0.0
    %383 = vmatprep.subr.mxu0 0.0
    %384 = vmatpush1.msra.mxu0 0.0
    %385 = vmatprep.subr.mxu0 0.0
    %386 = vmatpush1.msra.mxu0 0.0
    %387 = vmatprep.subr.mxu0 0.0
    %388 = vmatpush1.msra.mxu0 0.0
    %389 = vmatprep.subr.mxu0 0.0
    %390 = vmatpush1.msra.mxu0 0.0
    %391 = vmatprep.subr.mxu0 0.0
    %392 = vmatpush1.msra.mxu0 0.0
    %393 = vmatprep.subr.mxu0 0.0
    %394 = vmatpush1.msra.mxu0 0.0
    %395 = vmatprep.subr.mxu0 0.0
    %396 = vmatpush1.msra.mxu0 0.0
    %397 = vmatprep.subr.mxu0 0.0
    %398 = vmatpush1.msra.mxu0 0.0
    %399 = vmatprep.subr.mxu0 0.0
    %400 = vmatpush1.msra.mxu0 0.0
    %401 = vmatprep.subr.mxu0 0.0
    %402 = vmatpush1.msra.mxu0 0.0
    %403 = vmatprep.subr.mxu0 0.0
    %404 = vmatpush1.msra.mxu0 0.0
    %405 = vmatprep.subr.mxu0 0.0
    %406 = vmatpush1.msra.mxu0 0.0
    %407 = vmatprep.subr.mxu0 0.0
    %408 = vmatpush1.msra.mxu0 0.0
    %409 = vmatprep.subr.mxu0 0.0
    %410 = vmatpush1.msra.mxu0 0.0
    %411 = vmatprep.subr.mxu0 0.0
    %412 = vmatpush1.msra.mxu0 0.0
    %413 = vmatprep.subr.mxu0 0.0
    %414 = vmatpush1.msra.mxu0 0.0
    %415 = vmatprep.subr.mxu0 0.0
    %416 = vmatpush1.msra.mxu0 0.0
    %417 = vmatprep.subr.mxu0 0.0
    %418 = vmatpush1.msra.mxu0 0.0
    %419 = vmatprep.subr.mxu0 0.0
    %420 = vmatpush1.msra.mxu0 0.0
    %421 = vmatprep.subr.mxu0 0.0
    %422 = vmatpush1.msra.mxu0 0.0
    %423 = vmatprep.subr.mxu0 0.0
    %424 = vmatpush1.msra.mxu0 0.0
    %425 = vmatprep.subr.mxu0 0.0
    %426 = vmatpush1.msra.mxu0 0.0
    %427 = vmatprep.mubr.f32.mxu0 0.0
    %428 = vmatmul.mubr.f32.gmra.mrb[0].mxu0 %v361
    %v429 = vpop.f32.mrb[0].mxu0
    %v430 = vadd.f32 0.0, %v429
    %v431 = vpop.f32.mrb[0].mxu0
    %432 = vdwg.mxu0
    %v434 = vrot.slane %v430, 7
    %v437 = vadd.f32 %v306, %v434
    %v438 = vadd.f32 %v311, %v430
    %v439 = vxor.u32 %v437, 2147483648
    %v440 = vxor.u32 %v438, 2147483648
    %v441 = vmul.f32 %v439, 1.442695
    %v442 = vpow.pop %v441
    %v443 = vmul.f32 %v440, 1.442695
    %v444 = vpow.pop %v443
    %v445 = vadd.f32 %v442, 1.0
    %v446 = vadd.f32 %v444, 1.0
    %v447 = vrcp.pop %v445
    %v448 = vmul.f32 1.0, %v447
    %v449 = vrcp.pop %v446
    %v450 = vmul.f32 1.0, %v449
    %v451 = vtanh.pop %v437
    %v452 = vtanh.pop %v438
    %v455 = vrot.slane %v340, 7
    %v456 = vrot.slane %v341, 7
    %457 = vrot.lane.b32.xlu0 %v455, 32
    %v458 = vpop.permute.xlu0 %457
    %459 = vrot.lane.b32.xlu0 %v456, 32
    %v460 = vpop.permute.xlu0 %459
    %v463 = vmul.f32 %v448, %v458
    %v464 = vmul.f32 %v450, %v460
    %467 = vrot.lane.b32.xlu0 %v451, 64
    %v468 = vpop.permute.xlu0 %467
    %469 = vrot.lane.b32.xlu0 %v452, 64
    %v470 = vpop.permute.xlu0 %469
    %v473 = vmul.f32 %v448, %v468
    %v474 = vmul.f32 %v450, %v470
    %477 = vrot.lane.b32.xlu0 %v473, 32
    %v478 = vpop.permute.xlu0 %477
    %479 = vrot.lane.b32.xlu0 %v474, 32
    %v480 = vpop.permute.xlu0 %479
    %v483 = vadd.f32 %v463, %v478
    %v484 = vadd.f32 %v464, %v480
    %v485 = vtanh.pop %v483
    %v486 = vtanh.pop %v484
    %489 = vrot.lane.b32.xlu0 %v485, 64
    %v490 = vpop.permute.xlu0 %489
    %491 = vrot.lane.b32.xlu0 %v486, 64
    %v492 = vpop.permute.xlu0 %491
    %v495 = vmul.f32 %v448, %v490
    %v496 = vmul.f32 %v450, %v492
    %v499 = vrot.slane %v495, 1
    %v500 = vsel %vm357, %v496, %v499
    %501 = vrot.lane.b32.xlu0 %v500, 32
    %v502 = vpop.permute.xlu0 %501
    %v503 = vsel %vm232, %v502, 0
    %505 = vmatprep.subr.mxu0 0.0
    %506 = vmatpush1.msra.mxu0 %v314
    %507 = vmatprep.subr.mxu0 0.0
    %508 = vmatpush1.msra.mxu0 %v315
    %509 = vmatprep.subr.mxu0 0.0
    %510 = vmatpush1.msra.mxu0 %v316
    %511 = vmatprep.subr.mxu0 0.0
    %512 = vmatpush1.msra.mxu0 %v317
    %513 = vmatprep.subr.mxu0 0.0
    %514 = vmatpush1.msra.mxu0 0.0
    %515 = vmatprep.subr.mxu0 0.0
    %516 = vmatpush1.msra.mxu0 0.0
    %517 = vmatprep.subr.mxu0 0.0
    %518 = vmatpush1.msra.mxu0 0.0
    %519 = vmatprep.subr.mxu0 0.0
    %520 = vmatpush1.msra.mxu0 0.0
    %521 = vmatprep.subr.mxu0 0.0
    %522 = vmatpush1.msra.mxu0 0.0
    %523 = vmatprep.subr.mxu0 0.0
    %524 = vmatpush1.msra.mxu0 0.0
    %525 = vmatprep.subr.mxu0 0.0
    %526 = vmatpush1.msra.mxu0 0.0
    %527 = vmatprep.subr.mxu0 0.0
    %528 = vmatpush1.msra.mxu0 0.0
    %529 = vmatprep.subr.mxu0 0.0
    %530 = vmatpush1.msra.mxu0 0.0
    %531 = vmatprep.subr.mxu0 0.0
    %532 = vmatpush1.msra.mxu0 0.0
    %533 = vmatprep.subr.mxu0 0.0
    %534 = vmatpush1.msra.mxu0 0.0
    %535 = vmatprep.subr.mxu0 0.0
    %536 = vmatpush1.msra.mxu0 0.0
    %537 = vmatprep.subr.mxu0 0.0
    %538 = vmatpush1.msra.mxu0 0.0
    %539 = vmatprep.subr.mxu0 0.0
    %540 = vmatpush1.msra.mxu0 0.0
    %541 = vmatprep.subr.mxu0 0.0
    %542 = vmatpush1.msra.mxu0 0.0
    %543 = vmatprep.subr.mxu0 0.0
    %544 = vmatpush1.msra.mxu0 0.0
    %545 = vmatprep.subr.mxu0 0.0
    %546 = vmatpush1.msra.mxu0 0.0
    %547 = vmatprep.subr.mxu0 0.0
    %548 = vmatpush1.msra.mxu0 0.0
    %549 = vmatprep.subr.mxu0 0.0
    %550 = vmatpush1.msra.mxu0 0.0
    %551 = vmatprep.subr.mxu0 0.0
    %552 = vmatpush1.msra.mxu0 0.0
    %553 = vmatprep.subr.mxu0 0.0
    %554 = vmatpush1.msra.mxu0 0.0
    %555 = vmatprep.subr.mxu0 0.0
    %556 = vmatpush1.msra.mxu0 0.0
    %557 = vmatprep.subr.mxu0 0.0
    %558 = vmatpush1.msra.mxu0 0.0
    %559 = vmatprep.subr.mxu0 0.0
    %560 = vmatpush1.msra.mxu0 0.0
    %561 = vmatprep.subr.mxu0 0.0
    %562 = vmatpush1.msra.mxu0 0.0
    %563 = vmatprep.subr.mxu0 0.0
    %564 = vmatpush1.msra.mxu0 0.0
    %565 = vmatprep.subr.mxu0 0.0
    %566 = vmatpush1.msra.mxu0 0.0
    %567 = vmatprep.subr.mxu0 0.0
    %568 = vmatpush1.msra.mxu0 0.0
    %569 = vmatprep.mubr.f32.mxu0 0.0
    %570 = vmatmul.mubr.f32.gmra.mrb[0].mxu0 %v503
    %v571 = vpop.f32.mrb[0].mxu0
    %v572 = vadd.f32 0.0, %v571
    %v573 = vpop.f32.mrb[0].mxu0
    %574 = vdwg.mxu0
    %v576 = vrot.slane %v572, 6
    %v577 = vrot.slane %v572, 7
    %v580 = vadd.f32 %v306, %v576
    %v581 = vadd.f32 %v311, %v577
    %v582 = vxor.u32 %v580, 2147483648
    %v583 = vxor.u32 %v581, 2147483648
    %v584 = vmul.f32 %v582, 1.442695
    %v585 = vpow.pop %v584
    %v586 = vmul.f32 %v583, 1.442695
    %v587 = vpow.pop %v586
    %v588 = vadd.f32 %v585, 1.0
    %v589 = vadd.f32 %v587, 1.0
    %v590 = vrcp.pop %v588
    %v591 = vmul.f32 1.0, %v590
    %v592 = vrcp.pop %v589
    %v593 = vmul.f32 1.0, %v592
    %v594 = vtanh.pop %v580
    %v595 = vtanh.pop %v581
    %v598 = vrot.slane %v483, 7
    %v599 = vrot.slane %v484, 7
    %v602 = vmul.f32 %v591, %v598
    %v603 = vmul.f32 %v593, %v599
    %606 = vrot.lane.b32.xlu0 %v594, 64
    %v607 = vpop.permute.xlu0 %606
    %608 = vrot.lane.b32.xlu0 %v595, 64
    %v609 = vpop.permute.xlu0 %608
    %v612 = vmul.f32 %v591, %v607
    %v613 = vmul.f32 %v593, %v609
    %616 = vrot.lane.b32.xlu0 %v612, 32
    %v617 = vpop.permute.xlu0 %616
    %618 = vrot.lane.b32.xlu0 %v613, 32
    %v619 = vpop.permute.xlu0 %618
    %v622 = vadd.f32 %v602, %v617
    %v623 = vadd.f32 %v603, %v619
    %v624 = vtanh.pop %v622
    %v625 = vtanh.pop %v623
    %628 = vrot.lane.b32.xlu0 %v624, 64
    %v629 = vpop.permute.xlu0 %628
    %630 = vrot.lane.b32.xlu0 %v625, 64
    %v631 = vpop.permute.xlu0 %630
    %v634 = vmul.f32 %v591, %v629
    %v635 = vmul.f32 %v593, %v631
    %v638 = vrot.slane %v634, 2
    %v639 = vrot.slane %v635, 1
    %v640 = vsel %vm357, %v639, %v638
    %641 = vrot.lane.b32.xlu0 %v640, 32
    %v642 = vpop.permute.xlu0 %641
    %v643 = vsel %vm232, %v642, 0
    %645 = vmatprep.subr.mxu0 0.0
    %646 = vmatpush1.msra.mxu0 %v314
    %647 = vmatprep.subr.mxu0 0.0
    %648 = vmatpush1.msra.mxu0 %v315
    %649 = vmatprep.subr.mxu0 0.0
    %650 = vmatpush1.msra.mxu0 %v316
    %651 = vmatprep.subr.mxu0 0.0
    %652 = vmatpush1.msra.mxu0 %v317
    %653 = vmatprep.subr.mxu0 0.0
    %654 = vmatpush1.msra.mxu0 0.0
    %655 = vmatprep.subr.mxu0 0.0
    %656 = vmatpush1.msra.mxu0 0.0
    %657 = vmatprep.subr.mxu0 0.0
    %658 = vmatpush1.msra.mxu0 0.0
    %659 = vmatprep.subr.mxu0 0.0
    %660 = vmatpush1.msra.mxu0 0.0
    %661 = vmatprep.subr.mxu0 0.0
    %662 = vmatpush1.msra.mxu0 0.0
    %663 = vmatprep.subr.mxu0 0.0
    %664 = vmatpush1.msra.mxu0 0.0
    %665 = vmatprep.subr.mxu0 0.0
    %666 = vmatpush1.msra.mxu0 0.0
    %667 = vmatprep.subr.mxu0 0.0
    %668 = vmatpush1.msra.mxu0 0.0
    %669 = vmatprep.subr.mxu0 0.0
    %670 = vmatpush1.msra.mxu0 0.0
    %671 = vmatprep.subr.mxu0 0.0
    %672 = vmatpush1.msra.mxu0 0.0
    %673 = vmatprep.subr.mxu0 0.0
    %674 = vmatpush1.msra.mxu0 0.0
    %675 = vmatprep.subr.mxu0 0.0
    %676 = vmatpush1.msra.mxu0 0.0
    %677 = vmatprep.subr.mxu0 0.0
    %678 = vmatpush1.msra.mxu0 0.0
    %679 = vmatprep.subr.mxu0 0.0
    %680 = vmatpush1.msra.mxu0 0.0
    %681 = vmatprep.subr.mxu0 0.0
    %682 = vmatpush1.msra.mxu0 0.0
    %683 = vmatprep.subr.mxu0 0.0
    %684 = vmatpush1.msra.mxu0 0.0
    %685 = vmatprep.subr.mxu0 0.0
    %686 = vmatpush1.msra.mxu0 0.0
    %687 = vmatprep.subr.mxu0 0.0
    %688 = vmatpush1.msra.mxu0 0.0
    %689 = vmatprep.subr.mxu0 0.0
    %690 = vmatpush1.msra.mxu0 0.0
    %691 = vmatprep.subr.mxu0 0.0
    %692 = vmatpush1.msra.mxu0 0.0
    %693 = vmatprep.subr.mxu0 0.0
    %694 = vmatpush1.msra.mxu0 0.0
    %695 = vmatprep.subr.mxu0 0.0
    %696 = vmatpush1.msra.mxu0 0.0
    %697 = vmatprep.subr.mxu0 0.0
    %698 = vmatpush1.msra.mxu0 0.0
    %699 = vmatprep.subr.mxu0 0.0
    %700 = vmatpush1.msra.mxu0 0.0
    %701 = vmatprep.subr.mxu0 0.0
    %702 = vmatpush1.msra.mxu0 0.0
    %703 = vmatprep.subr.mxu0 0.0
    %704 = vmatpush1.msra.mxu0 0.0
    %705 = vmatprep.subr.mxu0 0.0
    %706 = vmatpush1.msra.mxu0 0.0
    %707 = vmatprep.subr.mxu0 0.0
    %708 = vmatpush1.msra.mxu0 0.0
    %709 = vmatprep.mubr.f32.mxu0 0.0
    %710 = vmatmul.mubr.f32.gmra.mrb[0].mxu0 %v643
    %v711 = vpop.f32.mrb[0].mxu0
    %v712 = vadd.f32 0.0, %v711
    %v713 = vpop.f32.mrb[0].mxu0
    %714 = vdwg.mxu0
    %v716 = vrot.slane %v712, 5
    %v717 = vrot.slane %v712, 6
    %v720 = vadd.f32 %v306, %v716
    %v721 = vadd.f32 %v311, %v717
    %v722 = vxor.u32 %v720, 2147483648
    %v723 = vxor.u32 %v721, 2147483648
    %v724 = vmul.f32 %v722, 1.442695
    %v725 = vpow.pop %v724
    %v726 = vmul.f32 %v723, 1.442695
    %v727 = vpow.pop %v726
    %v728 = vadd.f32 %v725, 1.0
    %v729 = vadd.f32 %v727, 1.0
    %v730 = vrcp.pop %v728
    %v731 = vmul.f32 1.0, %v730
    %v732 = vrcp.pop %v729
    %v733 = vmul.f32 1.0, %v732
    %v734 = vtanh.pop %v720
    %v735 = vtanh.pop %v721
    %v738 = vrot.slane %v622, 7
    %v739 = vrot.slane %v623, 7
    %v742 = vmul.f32 %v731, %v738
    %v743 = vmul.f32 %v733, %v739
    %746 = vrot.lane.b32.xlu0 %v734, 64
    %v747 = vpop.permute.xlu0 %746
    %748 = vrot.lane.b32.xlu0 %v735, 64
    %v749 = vpop.permute.xlu0 %748
    %v752 = vmul.f32 %v731, %v747
    %v753 = vmul.f32 %v733, %v749
    %756 = vrot.lane.b32.xlu0 %v752, 32
    %v757 = vpop.permute.xlu0 %756
    %758 = vrot.lane.b32.xlu0 %v753, 32
    %v759 = vpop.permute.xlu0 %758
    %v762 = vadd.f32 %v742, %v757
    %v763 = vadd.f32 %v743, %v759
    %v764 = vtanh.pop %v762
    %v765 = vtanh.pop %v763
    %768 = vrot.lane.b32.xlu0 %v764, 64
    %v769 = vpop.permute.xlu0 %768
    %770 = vrot.lane.b32.xlu0 %v765, 64
    %v771 = vpop.permute.xlu0 %770
    %v774 = vmul.f32 %v731, %v769
    %v775 = vmul.f32 %v733, %v771
    %v778 = vrot.slane %v774, 3
    %v779 = vrot.slane %v775, 2
    %v780 = vsel %vm357, %v779, %v778
    %781 = vrot.lane.b32.xlu0 %v780, 32
    %v782 = vpop.permute.xlu0 %781
    %v783 = vsel %vm232, %v782, 0
    %785 = vmatprep.subr.mxu0 0.0
    %786 = vmatpush1.msra.mxu0 %v314
    %787 = vmatprep.subr.mxu0 0.0
    %788 = vmatpush1.msra.mxu0 %v315
    %789 = vmatprep.subr.mxu0 0.0
    %790 = vmatpush1.msra.mxu0 %v316
    %791 = vmatprep.subr.mxu0 0.0
    %792 = vmatpush1.msra.mxu0 %v317
    %793 = vmatprep.subr.mxu0 0.0
    %794 = vmatpush1.msra.mxu0 0.0
    %795 = vmatprep.subr.mxu0 0.0
    %796 = vmatpush1.msra.mxu0 0.0
    %797 = vmatprep.subr.mxu0 0.0
    %798 = vmatpush1.msra.mxu0 0.0
    %799 = vmatprep.subr.mxu0 0.0
    %800 = vmatpush1.msra.mxu0 0.0
    %801 = vmatprep.subr.mxu0 0.0
    %802 = vmatpush1.msra.mxu0 0.0
    %803 = vmatprep.subr.mxu0 0.0
    %804 = vmatpush1.msra.mxu0 0.0
    %805 = vmatprep.subr.mxu0 0.0
    %806 = vmatpush1.msra.mxu0 0.0
    %807 = vmatprep.subr.mxu0 0.0
    %808 = vmatpush1.msra.mxu0 0.0
    %809 = vmatprep.subr.mxu0 0.0
    %810 = vmatpush1.msra.mxu0 0.0
    %811 = vmatprep.subr.mxu0 0.0
    %812 = vmatpush1.msra.mxu0 0.0
    %813 = vmatprep.subr.mxu0 0.0
    %814 = vmatpush1.msra.mxu0 0.0
    %815 = vmatprep.subr.mxu0 0.0
    %816 = vmatpush1.msra.mxu0 0.0
    %817 = vmatprep.subr.mxu0 0.0
    %818 = vmatpush1.msra.mxu0 0.0
    %819 = vmatprep.subr.mxu0 0.0
    %820 = vmatpush1.msra.mxu0 0.0
    %821 = vmatprep.subr.mxu0 0.0
    %822 = vmatpush1.msra.mxu0 0.0
    %823 = vmatprep.subr.mxu0 0.0
    %824 = vmatpush1.msra.mxu0 0.0
    %825 = vmatprep.subr.mxu0 0.0
    %826 = vmatpush1.msra.mxu0 0.0
    %827 = vmatprep.subr.mxu0 0.0
    %828 = vmatpush1.msra.mxu0 0.0
    %829 = vmatprep.subr.mxu0 0.0
    %830 = vmatpush1.msra.mxu0 0.0
    %831 = vmatprep.subr.mxu0 0.0
    %832 = vmatpush1.msra.mxu0 0.0
    %833 = vmatprep.subr.mxu0 0.0
    %834 = vmatpush1.msra.mxu0 0.0
    %835 = vmatprep.subr.mxu0 0.0
    %836 = vmatpush1.msra.mxu0 0.0
    %837 = vmatprep.subr.mxu0 0.0
    %838 = vmatpush1.msra.mxu0 0.0
    %839 = vmatprep.subr.mxu0 0.0
    %840 = vmatpush1.msra.mxu0 0.0
    %841 = vmatprep.subr.mxu0 0.0
    %842 = vmatpush1.msra.mxu0 0.0
    %843 = vmatprep.subr.mxu0 0.0
    %844 = vmatpush1.msra.mxu0 0.0
    %845 = vmatprep.subr.mxu0 0.0
    %846 = vmatpush1.msra.mxu0 0.0
    %847 = vmatprep.subr.mxu0 0.0
    %848 = vmatpush1.msra.mxu0 0.0
    %849 = vmatprep.mubr.f32.mxu0 0.0
    %850 = vmatmul.mubr.f32.gmra.mrb[0].mxu0 %v783
    %v851 = vpop.f32.mrb[0].mxu0
    %v852 = vadd.f32 0.0, %v851
    %v853 = vpop.f32.mrb[0].mxu0
    %854 = vdwg.mxu0
    %v856 = vrot.slane %v852, 4
    %v857 = vrot.slane %v852, 5
    %v860 = vadd.f32 %v306, %v856
    %v861 = vadd.f32 %v311, %v857
    %v862 = vxor.u32 %v860, 2147483648
    %v863 = vxor.u32 %v861, 2147483648
    %v864 = vmul.f32 %v862, 1.442695
    %v865 = vpow.pop %v864
    %v866 = vmul.f32 %v863, 1.442695
    %v867 = vpow.pop %v866
    %v868 = vadd.f32 %v865, 1.0
    %v869 = vadd.f32 %v867, 1.0
    %v870 = vrcp.pop %v868
    %v871 = vmul.f32 1.0, %v870
    %v872 = vrcp.pop %v869
    %v873 = vmul.f32 1.0, %v872
    %v874 = vtanh.pop %v860
    %v875 = vtanh.pop %v861
    %v878 = vrot.slane %v762, 7
    %v879 = vrot.slane %v763, 7
    %v882 = vmul.f32 %v871, %v878
    %v883 = vmul.f32 %v873, %v879
    %886 = vrot.lane.b32.xlu0 %v874, 64
    %v887 = vpop.permute.xlu0 %886
    %888 = vrot.lane.b32.xlu0 %v875, 64
    %v889 = vpop.permute.xlu0 %888
    %v892 = vmul.f32 %v871, %v887
    %v893 = vmul.f32 %v873, %v889
    %896 = vrot.lane.b32.xlu0 %v892, 32
    %v897 = vpop.permute.xlu0 %896
    %898 = vrot.lane.b32.xlu0 %v893, 32
    %v899 = vpop.permute.xlu0 %898
    %v902 = vadd.f32 %v882, %v897
    %v903 = vadd.f32 %v883, %v899
    %v904 = vtanh.pop %v902
    %v905 = vtanh.pop %v903
    %908 = vrot.lane.b32.xlu0 %v904, 64
    %v909 = vpop.permute.xlu0 %908
    %910 = vrot.lane.b32.xlu0 %v905, 64
    %v911 = vpop.permute.xlu0 %910
    %v914 = vmul.f32 %v871, %v909
    %v915 = vmul.f32 %v873, %v911
    %v918 = vrot.slane %v914, 4
    %v919 = vrot.slane %v915, 3
    %v920 = vsel %vm357, %v919, %v918
    %921 = vrot.lane.b32.xlu0 %v920, 32
    %v922 = vpop.permute.xlu0 %921
    %v923 = vsel %vm232, %v922, 0
    %925 = vmatprep.subr.mxu0 0.0
    %926 = vmatpush1.msra.mxu0 %v314
    %927 = vmatprep.subr.mxu0 0.0
    %928 = vmatpush1.msra.mxu0 %v315
    %929 = vmatprep.subr.mxu0 0.0
    %930 = vmatpush1.msra.mxu0 %v316
    %931 = vmatprep.subr.mxu0 0.0
    %932 = vmatpush1.msra.mxu0 %v317
    %933 = vmatprep.subr.mxu0 0.0
    %934 = vmatpush1.msra.mxu0 0.0
    %935 = vmatprep.subr.mxu0 0.0
    %936 = vmatpush1.msra.mxu0 0.0
    %937 = vmatprep.subr.mxu0 0.0
    %938 = vmatpush1.msra.mxu0 0.0
    %939 = vmatprep.subr.mxu0 0.0
    %940 = vmatpush1.msra.mxu0 0.0
    %941 = vmatprep.subr.mxu0 0.0
    %942 = vmatpush1.msra.mxu0 0.0
    %943 = vmatprep.subr.mxu0 0.0
    %944 = vmatpush1.msra.mxu0 0.0
    %945 = vmatprep.subr.mxu0 0.0
    %946 = vmatpush1.msra.mxu0 0.0
    %947 = vmatprep.subr.mxu0 0.0
    %948 = vmatpush1.msra.mxu0 0.0
    %949 = vmatprep.subr.mxu0 0.0
    %950 = vmatpush1.msra.mxu0 0.0
    %951 = vmatprep.subr.mxu0 0.0
    %952 = vmatpush1.msra.mxu0 0.0
    %953 = vmatprep.subr.mxu0 0.0
    %954 = vmatpush1.msra.mxu0 0.0
    %955 = vmatprep.subr.mxu0 0.0
    %956 = vmatpush1.msra.mxu0 0.0
    %957 = vmatprep.subr.mxu0 0.0
    %958 = vmatpush1.msra.mxu0 0.0
    %959 = vmatprep.subr.mxu0 0.0
    %960 = vmatpush1.msra.mxu0 0.0
    %961 = vmatprep.subr.mxu0 0.0
    %962 = vmatpush1.msra.mxu0 0.0
    %963 = vmatprep.subr.mxu0 0.0
    %964 = vmatpush1.msra.mxu0 0.0
    %965 = vmatprep.subr.mxu0 0.0
    %966 = vmatpush1.msra.mxu0 0.0
    %967 = vmatprep.subr.mxu0 0.0
    %968 = vmatpush1.msra.mxu0 0.0
    %969 = vmatprep.subr.mxu0 0.0
    %970 = vmatpush1.msra.mxu0 0.0
    %971 = vmatprep.subr.mxu0 0.0
    %972 = vmatpush1.msra.mxu0 0.0
    %973 = vmatprep.subr.mxu0 0.0
    %974 = vmatpush1.msra.mxu0 0.0
    %975 = vmatprep.subr.mxu0 0.0
    %976 = vmatpush1.msra.mxu0 0.0
    %977 = vmatprep.subr.mxu0 0.0
    %978 = vmatpush1.msra.mxu0 0.0
    %979 = vmatprep.subr.mxu0 0.0
    %980 = vmatpush1.msra.mxu0 0.0
    %981 = vmatprep.subr.mxu0 0.0
    %982 = vmatpush1.msra.mxu0 0.0
    %983 = vmatprep.subr.mxu0 0.0
    %984 = vmatpush1.msra.mxu0 0.0
    %985 = vmatprep.subr.mxu0 0.0
    %986 = vmatpush1.msra.mxu0 0.0
    %987 = vmatprep.subr.mxu0 0.0
    %988 = vmatpush1.msra.mxu0 0.0
    %989 = vmatprep.mubr.f32.mxu0 0.0
    %990 = vmatmul.mubr.f32.gmra.mrb[0].mxu0 %v923
    %v991 = vpop.f32.mrb[0].mxu0
    %v992 = vadd.f32 0.0, %v991
    %v993 = vpop.f32.mrb[0].mxu0
    %994 = vdwg.mxu0
    %v996 = vrot.slane %v992, 3
    %v997 = vrot.slane %v992, 4
    %v1000 = vadd.f32 %v306, %v996
    %v1001 = vadd.f32 %v311, %v997
    %v1002 = vxor.u32 %v1000, 2147483648
    %v1003 = vxor.u32 %v1001, 2147483648
    %v1004 = vmul.f32 %v1002, 1.442695
    %v1005 = vpow.pop %v1004
    %v1006 = vmul.f32 %v1003, 1.442695
    %v1007 = vpow.pop %v1006
    %v1008 = vadd.f32 %v1005, 1.0
    %v1009 = vadd.f32 %v1007, 1.0
    %v1010 = vrcp.pop %v1008
    %v1011 = vmul.f32 1.0, %v1010
    %v1012 = vrcp.pop %v1009
    %v1013 = vmul.f32 1.0, %v1012
    %v1014 = vtanh.pop %v1000
    %v1015 = vtanh.pop %v1001
    %v1018 = vrot.slane %v902, 7
    %v1019 = vrot.slane %v903, 7
    %v1022 = vmul.f32 %v1011, %v1018
    %v1023 = vmul.f32 %v1013, %v1019
    %1026 = vrot.lane.b32.xlu0 %v1014, 64
    %v1027 = vpop.permute.xlu0 %1026
    %1028 = vrot.lane.b32.xlu0 %v1015, 64
    %v1029 = vpop.permute.xlu0 %1028
    %v1032 = vmul.f32 %v1011, %v1027
    %v1033 = vmul.f32 %v1013, %v1029
    %1036 = vrot.lane.b32.xlu0 %v1032, 32
    %v1037 = vpop.permute.xlu0 %1036
    %1038 = vrot.lane.b32.xlu0 %v1033, 32
    %v1039 = vpop.permute.xlu0 %1038
    %v1042 = vadd.f32 %v1022, %v1037
    %v1043 = vadd.f32 %v1023, %v1039
    %v1044 = vtanh.pop %v1042
    %v1045 = vtanh.pop %v1043
    %1048 = vrot.lane.b32.xlu0 %v1044, 64
    %v1049 = vpop.permute.xlu0 %1048
    %1050 = vrot.lane.b32.xlu0 %v1045, 64
    %v1051 = vpop.permute.xlu0 %1050
    %v1054 = vmul.f32 %v1011, %v1049
    %v1055 = vmul.f32 %v1013, %v1051
    %v1058 = vrot.slane %v1054, 5
    %v1059 = vrot.slane %v1055, 4
    %v1060 = vsel %vm357, %v1059, %v1058
    %1061 = vrot.lane.b32.xlu0 %v1060, 32
    %v1062 = vpop.permute.xlu0 %1061
    %v1063 = vsel %vm232, %v1062, 0
    %1065 = vmatprep.subr.mxu0 0.0
    %1066 = vmatpush1.msra.mxu0 %v314
    %1067 = vmatprep.subr.mxu0 0.0
    %1068 = vmatpush1.msra.mxu0 %v315
    %1069 = vmatprep.subr.mxu0 0.0
    %1070 = vmatpush1.msra.mxu0 %v316
    %1071 = vmatprep.subr.mxu0 0.0
    %1072 = vmatpush1.msra.mxu0 %v317
    %1073 = vmatprep.subr.mxu0 0.0
    %1074 = vmatpush1.msra.mxu0 0.0
    %1075 = vmatprep.subr.mxu0 0.0
    %1076 = vmatpush1.msra.mxu0 0.0
    %1077 = vmatprep.subr.mxu0 0.0
    %1078 = vmatpush1.msra.mxu0 0.0
    %1079 = vmatprep.subr.mxu0 0.0
    %1080 = vmatpush1.msra.mxu0 0.0
    %1081 = vmatprep.subr.mxu0 0.0
    %1082 = vmatpush1.msra.mxu0 0.0
    %1083 = vmatprep.subr.mxu0 0.0
    %1084 = vmatpush1.msra.mxu0 0.0
    %1085 = vmatprep.subr.mxu0 0.0
    %1086 = vmatpush1.msra.mxu0 0.0
    %1087 = vmatprep.subr.mxu0 0.0
    %1088 = vmatpush1.msra.mxu0 0.0
    %1089 = vmatprep.subr.mxu0 0.0
    %1090 = vmatpush1.msra.mxu0 0.0
    %1091 = vmatprep.subr.mxu0 0.0
    %1092 = vmatpush1.msra.mxu0 0.0
    %1093 = vmatprep.subr.mxu0 0.0
    %1094 = vmatpush1.msra.mxu0 0.0
    %1095 = vmatprep.subr.mxu0 0.0
    %1096 = vmatpush1.msra.mxu0 0.0
    %1097 = vmatprep.subr.mxu0 0.0
    %1098 = vmatpush1.msra.mxu0 0.0
    %1099 = vmatprep.subr.mxu0 0.0
    %1100 = vmatpush1.msra.mxu0 0.0
    %1101 = vmatprep.subr.mxu0 0.0
    %1102 = vmatpush1.msra.mxu0 0.0
    %1103 = vmatprep.subr.mxu0 0.0
    %1104 = vmatpush1.msra.mxu0 0.0
    %1105 = vmatprep.subr.mxu0 0.0
    %1106 = vmatpush1.msra.mxu0 0.0
    %1107 = vmatprep.subr.mxu0 0.0
    %1108 = vmatpush1.msra.mxu0 0.0
    %1109 = vmatprep.subr.mxu0 0.0
    %1110 = vmatpush1.msra.mxu0 0.0
    %1111 = vmatprep.subr.mxu0 0.0
    %1112 = vmatpush1.msra.mxu0 0.0
    %1113 = vmatprep.subr.mxu0 0.0
    %1114 = vmatpush1.msra.mxu0 0.0
    %1115 = vmatprep.subr.mxu0 0.0
    %1116 = vmatpush1.msra.mxu0 0.0
    %1117 = vmatprep.subr.mxu0 0.0
    %1118 = vmatpush1.msra.mxu0 0.0
    %1119 = vmatprep.subr.mxu0 0.0
    %1120 = vmatpush1.msra.mxu0 0.0
    %1121 = vmatprep.subr.mxu0 0.0
    %1122 = vmatpush1.msra.mxu0 0.0
    %1123 = vmatprep.subr.mxu0 0.0
    %1124 = vmatpush1.msra.mxu0 0.0
    %1125 = vmatprep.subr.mxu0 0.0
    %1126 = vmatpush1.msra.mxu0 0.0
    %1127 = vmatprep.subr.mxu0 0.0
    %1128 = vmatpush1.msra.mxu0 0.0
    %1129 = vmatprep.mubr.f32.mxu0 0.0
    %1130 = vmatmul.mubr.f32.gmra.mrb[0].mxu0 %v1063
    %v1131 = vpop.f32.mrb[0].mxu0
    %v1132 = vadd.f32 0.0, %v1131
    %v1133 = vpop.f32.mrb[0].mxu0
    %1134 = vdwg.mxu0
    %v1136 = vrot.slane %v1132, 2
    %v1137 = vrot.slane %v1132, 3
    %v1140 = vadd.f32 %v306, %v1136
    %v1141 = vadd.f32 %v311, %v1137
    %v1142 = vxor.u32 %v1140, 2147483648
    %v1143 = vxor.u32 %v1141, 2147483648
    %v1144 = vmul.f32 %v1142, 1.442695
    %v1145 = vpow.pop %v1144
    %v1146 = vmul.f32 %v1143, 1.442695
    %v1147 = vpow.pop %v1146
    %v1148 = vadd.f32 %v1145, 1.0
    %v1149 = vadd.f32 %v1147, 1.0
    %v1150 = vrcp.pop %v1148
    %v1151 = vmul.f32 1.0, %v1150
    %v1152 = vrcp.pop %v1149
    %v1153 = vmul.f32 1.0, %v1152
    %v1154 = vtanh.pop %v1140
    %v1155 = vtanh.pop %v1141
    %v1158 = vrot.slane %v1042, 7
    %v1159 = vrot.slane %v1043, 7
    %v1162 = vmul.f32 %v1151, %v1158
    %v1163 = vmul.f32 %v1153, %v1159
    %1166 = vrot.lane.b32.xlu0 %v1154, 64
    %v1167 = vpop.permute.xlu0 %1166
    %1168 = vrot.lane.b32.xlu0 %v1155, 64
    %v1169 = vpop.permute.xlu0 %1168
    %v1172 = vmul.f32 %v1151, %v1167
    %v1173 = vmul.f32 %v1153, %v1169
    %1176 = vrot.lane.b32.xlu0 %v1172, 32
    %v1177 = vpop.permute.xlu0 %1176
    %1178 = vrot.lane.b32.xlu0 %v1173, 32
    %v1179 = vpop.permute.xlu0 %1178
    %v1182 = vadd.f32 %v1162, %v1177
    %v1183 = vadd.f32 %v1163, %v1179
    %v1184 = vtanh.pop %v1182
    %v1185 = vtanh.pop %v1183
    %1188 = vrot.lane.b32.xlu0 %v1184, 64
    %v1189 = vpop.permute.xlu0 %1188
    %1190 = vrot.lane.b32.xlu0 %v1185, 64
    %v1191 = vpop.permute.xlu0 %1190
    %v1194 = vmul.f32 %v1151, %v1189
    %v1195 = vmul.f32 %v1153, %v1191
    %v1198 = vrot.slane %v1194, 6
    %v1199 = vrot.slane %v1195, 5
    %v1200 = vsel %vm357, %v1199, %v1198
    %1201 = vrot.lane.b32.xlu0 %v1200, 32
    %v1202 = vpop.permute.xlu0 %1201
    %v1203 = vsel %vm232, %v1202, 0
    %1205 = vmatprep.subr.mxu0 0.0
    %1206 = vmatpush1.msra.mxu0 %v314
    %1207 = vmatprep.subr.mxu0 0.0
    %1208 = vmatpush1.msra.mxu0 %v315
    %1209 = vmatprep.subr.mxu0 0.0
    %1210 = vmatpush1.msra.mxu0 %v316
    %1211 = vmatprep.subr.mxu0 0.0
    %1212 = vmatpush1.msra.mxu0 %v317
    %1213 = vmatprep.subr.mxu0 0.0
    %1214 = vmatpush1.msra.mxu0 0.0
    %1215 = vmatprep.subr.mxu0 0.0
    %1216 = vmatpush1.msra.mxu0 0.0
    %1217 = vmatprep.subr.mxu0 0.0
    %1218 = vmatpush1.msra.mxu0 0.0
    %1219 = vmatprep.subr.mxu0 0.0
    %1220 = vmatpush1.msra.mxu0 0.0
    %1221 = vmatprep.subr.mxu0 0.0
    %1222 = vmatpush1.msra.mxu0 0.0
    %1223 = vmatprep.subr.mxu0 0.0
    %1224 = vmatpush1.msra.mxu0 0.0
    %1225 = vmatprep.subr.mxu0 0.0
    %1226 = vmatpush1.msra.mxu0 0.0
    %1227 = vmatprep.subr.mxu0 0.0
    %1228 = vmatpush1.msra.mxu0 0.0
    %1229 = vmatprep.subr.mxu0 0.0
    %1230 = vmatpush1.msra.mxu0 0.0
    %1231 = vmatprep.subr.mxu0 0.0
    %1232 = vmatpush1.msra.mxu0 0.0
    %1233 = vmatprep.subr.mxu0 0.0
    %1234 = vmatpush1.msra.mxu0 0.0
    %1235 = vmatprep.subr.mxu0 0.0
    %1236 = vmatpush1.msra.mxu0 0.0
    %1237 = vmatprep.subr.mxu0 0.0
    %1238 = vmatpush1.msra.mxu0 0.0
    %1239 = vmatprep.subr.mxu0 0.0
    %1240 = vmatpush1.msra.mxu0 0.0
    %1241 = vmatprep.subr.mxu0 0.0
    %1242 = vmatpush1.msra.mxu0 0.0
    %1243 = vmatprep.subr.mxu0 0.0
    %1244 = vmatpush1.msra.mxu0 0.0
    %1245 = vmatprep.subr.mxu0 0.0
    %1246 = vmatpush1.msra.mxu0 0.0
    %1247 = vmatprep.subr.mxu0 0.0
    %1248 = vmatpush1.msra.mxu0 0.0
    %1249 = vmatprep.subr.mxu0 0.0
    %1250 = vmatpush1.msra.mxu0 0.0
    %1251 = vmatprep.subr.mxu0 0.0
    %1252 = vmatpush1.msra.mxu0 0.0
    %1253 = vmatprep.subr.mxu0 0.0
    %1254 = vmatpush1.msra.mxu0 0.0
    %1255 = vmatprep.subr.mxu0 0.0
    %1256 = vmatpush1.msra.mxu0 0.0
    %1257 = vmatprep.subr.mxu0 0.0
    %1258 = vmatpush1.msra.mxu0 0.0
    %1259 = vmatprep.subr.mxu0 0.0
    %1260 = vmatpush1.msra.mxu0 0.0
    %1261 = vmatprep.subr.mxu0 0.0
    %1262 = vmatpush1.msra.mxu0 0.0
    %1263 = vmatprep.subr.mxu0 0.0
    %1264 = vmatpush1.msra.mxu0 0.0
    %1265 = vmatprep.subr.mxu0 0.0
    %1266 = vmatpush1.msra.mxu0 0.0
    %1267 = vmatprep.subr.mxu0 0.0
    %1268 = vmatpush1.msra.mxu0 0.0
    %1269 = vmatprep.mubr.f32.mxu0 0.0
    %1270 = vmatmul.mubr.f32.gmra.mrb[0].mxu0 %v1203
    %v1271 = vpop.f32.mrb[0].mxu0
    %v1272 = vadd.f32 0.0, %v1271
    %v1273 = vpop.f32.mrb[0].mxu0
    %1274 = vdwg.mxu0
    %v1276 = vrot.slane %v1272, 1
    %v1277 = vrot.slane %v1272, 2
    %v1280 = vadd.f32 %v306, %v1276
    %v1281 = vadd.f32 %v311, %v1277
    %v1282 = vxor.u32 %v1280, 2147483648
    %v1283 = vxor.u32 %v1281, 2147483648
    %v1284 = vmul.f32 %v1282, 1.442695
    %v1285 = vpow.pop %v1284
    %v1286 = vmul.f32 %v1283, 1.442695
    %v1287 = vpow.pop %v1286
    %v1288 = vadd.f32 %v1285, 1.0
    %v1289 = vadd.f32 %v1287, 1.0
    %v1290 = vrcp.pop %v1288
    %v1291 = vmul.f32 1.0, %v1290
    %v1292 = vrcp.pop %v1289
    %v1293 = vmul.f32 1.0, %v1292
    %v1294 = vtanh.pop %v1280
    %v1295 = vtanh.pop %v1281
    %v1298 = vrot.slane %v1182, 7
    %v1299 = vrot.slane %v1183, 7
    %v1302 = vmul.f32 %v1291, %v1298
    %v1303 = vmul.f32 %v1293, %v1299
    %1306 = vrot.lane.b32.xlu0 %v1294, 64
    %v1307 = vpop.permute.xlu0 %1306
    %1308 = vrot.lane.b32.xlu0 %v1295, 64
    %v1309 = vpop.permute.xlu0 %1308
    %v1312 = vmul.f32 %v1291, %v1307
    %v1313 = vmul.f32 %v1293, %v1309
    %1316 = vrot.lane.b32.xlu0 %v1312, 32
    %v1317 = vpop.permute.xlu0 %1316
    %1318 = vrot.lane.b32.xlu0 %v1313, 32
    %v1319 = vpop.permute.xlu0 %1318
    %v1322 = vadd.f32 %v1302, %v1317
    %v1323 = vadd.f32 %v1303, %v1319
    %v1324 = vtanh.pop %v1322
    %v1325 = vtanh.pop %v1323
    %1328 = vrot.lane.b32.xlu0 %v1324, 64
    %v1329 = vpop.permute.xlu0 %1328
    %1330 = vrot.lane.b32.xlu0 %v1325, 64
    %v1331 = vpop.permute.xlu0 %1330
    %v1334 = vmul.f32 %v1291, %v1329
    %v1335 = vmul.f32 %v1293, %v1331
    %v1336 = vld [vmem:[%s10] sm:$0xff]
    %v1337 = vld [vmem:[%s10 + $0x8] sm:$0xff]
    %v1338 = vld [vmem:[%s10 + $0x10] sm:$0xff]
    %v1339 = vld [vmem:[%s10 + $0x18] sm:$0xff]
    %v1340 = vld [vmem:[%s10 + $0x20] sm:$0xff]
    %v1341 = vld [vmem:[%s10 + $0x28] sm:$0xff]
    %v1342 = vld [vmem:[%s10 + $0x30] sm:$0xff]
    %v1343 = vld [vmem:[%s10 + $0x38] sm:$0xff]
    %v1346 = vrot.slane %v1334, 7
    %v1347 = vrot.slane %v1335, 6
    %v1348 = vsel %vm357, %v1347, %v1346
    %1349 = vrot.lane.b32.xlu0 %v1348, 32
    %v1350 = vpop.permute.xlu0 %1349
    %v1351 = vsel %vm232, %v1350, 0
    %1353 = vmatprep.subr.mxu0 %v1337
    %1354 = vmatpush1.msra.mxu0 %v1336
    %1355 = vmatprep.subr.mxu0 %v1339
    %1356 = vmatpush1.msra.mxu0 %v1338
    %1357 = vmatprep.subr.mxu0 %v1341
    %1358 = vmatpush1.msra.mxu0 %v1340
    %1359 = vmatprep.subr.mxu0 %v1343
    %1360 = vmatpush1.msra.mxu0 %v1342
    %1361 = vmatprep.subr.mxu0 0.0
    %1362 = vmatpush1.msra.mxu0 0.0
    %1363 = vmatprep.subr.mxu0 0.0
    %1364 = vmatpush1.msra.mxu0 0.0
    %1365 = vmatprep.subr.mxu0 0.0
    %1366 = vmatpush1.msra.mxu0 0.0
    %1367 = vmatprep.subr.mxu0 0.0
    %1368 = vmatpush1.msra.mxu0 0.0
    %1369 = vmatprep.subr.mxu0 0.0
    %1370 = vmatpush1.msra.mxu0 0.0
    %1371 = vmatprep.subr.mxu0 0.0
    %1372 = vmatpush1.msra.mxu0 0.0
    %1373 = vmatprep.subr.mxu0 0.0
    %1374 = vmatpush1.msra.mxu0 0.0
    %1375 = vmatprep.subr.mxu0 0.0
    %1376 = vmatpush1.msra.mxu0 0.0
    %1377 = vmatprep.subr.mxu0 0.0
    %1378 = vmatpush1.msra.mxu0 0.0
    %1379 = vmatprep.subr.mxu0 0.0
    %1380 = vmatpush1.msra.mxu0 0.0
    %1381 = vmatprep.subr.mxu0 0.0
    %1382 = vmatpush1.msra.mxu0 0.0
    %1383 = vmatprep.subr.mxu0 0.0
    %1384 = vmatpush1.msra.mxu0 0.0
    %1385 = vmatprep.subr.mxu0 0.0
    %1386 = vmatpush1.msra.mxu0 0.0
    %1387 = vmatprep.subr.mxu0 0.0
    %1388 = vmatpush1.msra.mxu0 0.0
    %1389 = vmatprep.subr.mxu0 0.0
    %1390 = vmatpush1.msra.mxu0 0.0
    %1391 = vmatprep.subr.mxu0 0.0
    %1392 = vmatpush1.msra.mxu0 0.0
    %1393 = vmatprep.subr.mxu0 0.0
    %1394 = vmatpush1.msra.mxu0 0.0
    %1395 = vmatprep.subr.mxu0 0.0
    %1396 = vmatpush1.msra.mxu0 0.0
    %1397 = vmatprep.subr.mxu0 0.0
    %1398 = vmatpush1.msra.mxu0 0.0
    %1399 = vmatprep.subr.mxu0 0.0
    %1400 = vmatpush1.msra.mxu0 0.0
    %1401 = vmatprep.subr.mxu0 0.0
    %1402 = vmatpush1.msra.mxu0 0.0
    %1403 = vmatprep.subr.mxu0 0.0
    %1404 = vmatpush1.msra.mxu0 0.0
    %1405 = vmatprep.subr.mxu0 0.0
    %1406 = vmatpush1.msra.mxu0 0.0
    %1407 = vmatprep.subr.mxu0 0.0
    %1408 = vmatpush1.msra.mxu0 0.0
    %1409 = vmatprep.subr.mxu0 0.0
    %1410 = vmatpush1.msra.mxu0 0.0
    %1411 = vmatprep.subr.mxu0 0.0
    %1412 = vmatpush1.msra.mxu0 0.0
    %1413 = vmatprep.subr.mxu0 0.0
    %1414 = vmatpush1.msra.mxu0 0.0
    %1415 = vmatprep.subr.mxu0 0.0
    %1416 = vmatpush1.msra.mxu0 0.0
    %1417 = vmatprep.mubr.f32.mxu0 0.0
    %1418 = vmatmul.mubr.f32.gmra.mrb[0].mxu0 %v1351
    %v1419 = vpop.f32.mrb[0].mxu0
    %v1420 = vadd.f32 0.0, %v1419
    %v1421 = vpop.f32.mrb[0].mxu0
    %v1422 = vadd.f32 0.0, %v1421
    %1423 = vdwg.mxu0
    %v1424 = vld [vmem:[#allocation10] sm:$0x1]
    %v1426 = vlaneseq
    %v1427 = vshrl.u32 %v1426, 7
    %v1428 = vsub.s32 0, %v1427
    %v1429 = vrot.slane %v1424, %v1428
    %v1431 = vadd.f32 %v1422, %v1429
    %v1432 = vld [vmem:[%s6] sm:$0xff]
    %v1433 = vld [vmem:[%s6 + $0x8] sm:$0xff]
    %v1434 = vld [vmem:[%s6 + $0x10] sm:$0xff]
    %v1435 = vld [vmem:[%s6 + $0x18] sm:$0xff]
    %v1436 = vld [vmem:[#allocation7] sm:$0xff]
    %v1437 = vld [vmem:[#allocation7 + $0x8] sm:$0xff]
    %v1439 = vsel %vm113, %v1432, 0
    %v1442 = vsel %vm113, %v1433, 0
    %v1445 = vsel %vm113, %v1434, 0
    %v1448 = vsel %vm113, %v1435, 0
    %1450 = vmatprep.subr.mxu0 0.0
    %1451 = vmatpush1.msra.mxu0 %v1436
    %1452 = vmatprep.subr.mxu0 0.0
    %1453 = vmatpush1.msra.mxu0 %v1437
    %1454 = vmatprep.subr.mxu0 0.0
    %1455 = vmatpush1.msra.mxu0 0.0
    %1456 = vmatprep.subr.mxu0 0.0
    %1457 = vmatpush1.msra.mxu0 0.0
    %1458 = vmatprep.subr.mxu0 0.0
    %1459 = vmatpush1.msra.mxu0 0.0
    %1460 = vmatprep.subr.mxu0 0.0
    %1461 = vmatpush1.msra.mxu0 0.0
    %1462 = vmatprep.subr.mxu0 0.0
    %1463 = vmatpush1.msra.mxu0 0.0
    %1464 = vmatprep.subr.mxu0 0.0
    %1465 = vmatpush1.msra.mxu0 0.0
    %1466 = vmatprep.subr.mxu0 0.0
    %1467 = vmatpush1.msra.mxu0 0.0
    %1468 = vmatprep.subr.mxu0 0.0
    %1469 = vmatpush1.msra.mxu0 0.0
    %1470 = vmatprep.subr.mxu0 0.0
    %1471 = vmatpush1.msra.mxu0 0.0
    %1472 = vmatprep.subr.mxu0 0.0
    %1473 = vmatpush1.msra.mxu0 0.0
    %1474 = vmatprep.subr.mxu0 0.0
    %1475 = vmatpush1.msra.mxu0 0.0
    %1476 = vmatprep.subr.mxu0 0.0
    %1477 = vmatpush1.msra.mxu0 0.0
    %1478 = vmatprep.subr.mxu0 0.0
    %1479 = vmatpush1.msra.mxu0 0.0
    %1480 = vmatprep.subr.mxu0 0.0
    %1481 = vmatpush1.msra.mxu0 0.0
    %1482 = vmatprep.subr.mxu0 0.0
    %1483 = vmatpush1.msra.mxu0 0.0
    %1484 = vmatprep.subr.mxu0 0.0
    %1485 = vmatpush1.msra.mxu0 0.0
    %1486 = vmatprep.subr.mxu0 0.0
    %1487 = vmatpush1.msra.mxu0 0.0
    %1488 = vmatprep.subr.mxu0 0.0
    %1489 = vmatpush1.msra.mxu0 0.0
    %1490 = vmatprep.subr.mxu0 0.0
    %1491 = vmatpush1.msra.mxu0 0.0
    %1492 = vmatprep.subr.mxu0 0.0
    %1493 = vmatpush1.msra.mxu0 0.0
    %1494 = vmatprep.subr.mxu0 0.0
    %1495 = vmatpush1.msra.mxu0 0.0
    %1496 = vmatprep.subr.mxu0 0.0
    %1497 = vmatpush1.msra.mxu0 0.0
    %1498 = vmatprep.subr.mxu0 0.0
    %1499 = vmatpush1.msra.mxu0 0.0
    %1500 = vmatprep.subr.mxu0 0.0
    %1501 = vmatpush1.msra.mxu0 0.0
    %1502 = vmatprep.subr.mxu0 0.0
    %1503 = vmatpush1.msra.mxu0 0.0
    %1504 = vmatprep.subr.mxu0 0.0
    %1505 = vmatpush1.msra.mxu0 0.0
    %1506 = vmatprep.subr.mxu0 0.0
    %1507 = vmatpush1.msra.mxu0 0.0
    %1508 = vmatprep.subr.mxu0 0.0
    %1509 = vmatpush1.msra.mxu0 0.0
    %1510 = vmatprep.subr.mxu0 0.0
    %1511 = vmatpush1.msra.mxu0 0.0
    %1512 = vmatprep.subr.mxu0 0.0
    %1513 = vmatpush1.msra.mxu0 0.0
    %1514 = vmatprep.mubr.f32.mxu0 0.0
    %1515 = vmatmul.mubr.f32.gmra.mrb[0].mxu0 %v1439
    %v1516 = vpop.f32.mrb[0].mxu0
    %v1517 = vadd.f32 0.0, %v1516
    %v1518 = vpop.f32.mrb[0].mxu0
    %1519 = vmatprep.mubr.f32.mxu0 0.0
    %1520 = vmatmul.mubr.f32.gmra.mrb[0].mxu0 %v1442
    %v1521 = vpop.f32.mrb[0].mxu0
    %v1522 = vadd.f32 0.0, %v1521
    %v1523 = vpop.f32.mrb[0].mxu0
    %1524 = vmatprep.mubr.f32.mxu0 0.0
    %1525 = vmatmul.mubr.f32.gmra.mrb[0].mxu0 %v1445
    %v1526 = vpop.f32.mrb[0].mxu0
    %v1527 = vadd.f32 0.0, %v1526
    %v1528 = vpop.f32.mrb[0].mxu0
    %1529 = vmatprep.mubr.f32.mxu0 0.0
    %1530 = vmatmul.mubr.f32.gmra.mrb[0].mxu0 %v1448
    %v1531 = vpop.f32.mrb[0].mxu0
    %v1532 = vadd.f32 0.0, %v1531
    %v1533 = vpop.f32.mrb[0].mxu0
    %1534 = vdwg.mxu0
    %v1535 = vld [vmem:[%s1] sm:$0xff]
    %v1536 = vld [vmem:[%s1 + $0x8] sm:$0xff]
    %1537 = vset.pattern.permute.xlu0 0
    %1538 = vperm.xlu0 %1537, %v1535
    %v1539 = vpop.permute.xlu0 %1538
    %1540 = vset.pattern.permute.xlu0 0
    %1541 = vperm.xlu0 %1540, %v1536
    %v1542 = vpop.permute.xlu0 %1541
    %vm1543 = vcmp.eq.s32.totalorder %v1539, %v214
    %vm1544 = vcmp.eq.s32.totalorder %v1542, %v214
    %v1545 = vsel %vm1543, 1.0, 0.0
    %v1546 = vsel %vm1544, 1.0, 0.0
    %v1547 = vld [vmem:[#allocation8] sm:$0x1]
    %v1549 = vlaneseq
    %v1550 = vshrl.u32 %v1549, 7
    %v1551 = vsub.s32 0, %v1550
    %v1552 = vrot.slane %v1547, %v1551
    %v1555 = vsel %vm232, %v1545, 0
    %v1558 = vsel %vm232, %v1546, 0
    %1560 = vmatprep.subr.mxu0 0.0
    %1561 = vmatpush1.msra.mxu0 %v1517
    %1562 = vmatprep.subr.mxu0 0.0
    %1563 = vmatpush1.msra.mxu0 %v1522
    %1564 = vmatprep.subr.mxu0 0.0
    %1565 = vmatpush1.msra.mxu0 %v1527
    %1566 = vmatprep.subr.mxu0 0.0
    %1567 = vmatpush1.msra.mxu0 %v1532
    %1568 = vmatprep.subr.mxu0 0.0
    %1569 = vmatpush1.msra.mxu0 0.0
    %1570 = vmatprep.subr.mxu0 0.0
    %1571 = vmatpush1.msra.mxu0 0.0
    %1572 = vmatprep.subr.mxu0 0.0
    %1573 = vmatpush1.msra.mxu0 0.0
    %1574 = vmatprep.subr.mxu0 0.0
    %1575 = vmatpush1.msra.mxu0 0.0
    %1576 = vmatprep.subr.mxu0 0.0
    %1577 = vmatpush1.msra.mxu0 0.0
    %1578 = vmatprep.subr.mxu0 0.0
    %1579 = vmatpush1.msra.mxu0 0.0
    %1580 = vmatprep.subr.mxu0 0.0
    %1581 = vmatpush1.msra.mxu0 0.0
    %1582 = vmatprep.subr.mxu0 0.0
    %1583 = vmatpush1.msra.mxu0 0.0
    %1584 = vmatprep.subr.mxu0 0.0
    %1585 = vmatpush1.msra.mxu0 0.0
    %1586 = vmatprep.subr.mxu0 0.0
    %1587 = vmatpush1.msra.mxu0 0.0
    %1588 = vmatprep.subr.mxu0 0.0
    %1589 = vmatpush1.msra.mxu0 0.0
    %1590 = vmatprep.subr.mxu0 0.0
    %1591 = vmatpush1.msra.mxu0 0.0
    %1592 = vmatprep.subr.mxu0 0.0
    %1593 = vmatpush1.msra.mxu0 0.0
    %1594 = vmatprep.subr.mxu0 0.0
    %1595 = vmatpush1.msra.mxu0 0.0
    %1596 = vmatprep.subr.mxu0 0.0
    %1597 = vmatpush1.msra.mxu0 0.0
    %1598 = vmatprep.subr.mxu0 0.0
    %1599 = vmatpush1.msra.mxu0 0.0
    %1600 = vmatprep.subr.mxu0 0.0
    %1601 = vmatpush1.msra.mxu0 0.0
    %1602 = vmatprep.subr.mxu0 0.0
    %1603 = vmatpush1.msra.mxu0 0.0
    %1604 = vmatprep.subr.mxu0 0.0
    %1605 = vmatpush1.msra.mxu0 0.0
    %1606 = vmatprep.subr.mxu0 0.0
    %1607 = vmatpush1.msra.mxu0 0.0
    %1608 = vmatprep.subr.mxu0 0.0
    %1609 = vmatpush1.msra.mxu0 0.0
    %1610 = vmatprep.subr.mxu0 0.0
    %1611 = vmatpush1.msra.mxu0 0.0
    %1612 = vmatprep.subr.mxu0 0.0
    %1613 = vmatpush1.msra.mxu0 0.0
    %1614 = vmatprep.subr.mxu0 0.0
    %1615 = vmatpush1.msra.mxu0 0.0
    %1616 = vmatprep.subr.mxu0 0.0
    %1617 = vmatpush1.msra.mxu0 0.0
    %1618 = vmatprep.subr.mxu0 0.0
    %1619 = vmatpush1.msra.mxu0 0.0
    %1620 = vmatprep.subr.mxu0 0.0
    %1621 = vmatpush1.msra.mxu0 0.0
    %1622 = vmatprep.subr.mxu0 0.0
    %1623 = vmatpush1.msra.mxu0 0.0
    %1624 = vmatprep.mubr.f32.mxu0 0.0
    %1625 = vmatmul.mubr.f32.gmra.mrb[0].mxu0 %v1555
    %v1626 = vpop.f32.mrb[0].mxu0
    %v1627 = vadd.f32 %v1552, %v1626
    %v1628 = vpop.f32.mrb[0].mxu0
    %1629 = vmatprep.mubr.f32.mxu0 0.0
    %1630 = vmatmul.mubr.f32.gmra.mrb[0].mxu0 %v1558
    %v1631 = vpop.f32.mrb[0].mxu0
    %v1632 = vadd.f32 %v1552, %v1631
    %v1633 = vpop.f32.mrb[0].mxu0
    %1634 = vdwg.mxu0
    %v1637 = vunpack.c.l.s4 1966171168
    %v1638 = vunpack.c.0.s8 %v1637
    %v1639 = vlaneseq
    %v1640 = vshrl.u32 %v1639, 7
    %v1641 = vsub.s32 %v1638, %v1640
    %v1642 = vrot.slane %v1420, %v1641
    %v1643 = vcombine.high %v1642, %v1642
    %v1645 = vunpack.c.l.s4 1966171168
    %v1646 = vunpack.c.0.s8 %v1645
    %v1647 = vlaneseq
    %v1648 = vshrl.u32 %v1647, 7
    %v1649 = vsub.s32 %v1646, %v1648
    %v1650 = vrot.slane %v1642, %v1649
    %v1652 = vunpack.c.l.s4 1966171168
    %v1653 = vunpack.c.0.s8 %v1652
    %v1654 = vlaneseq
    %v1655 = vshrl.u32 %v1654, 7
    %v1656 = vsub.s32 %v1653, %v1655
    %v1657 = vrot.slane %v1643, %v1656
    %v1658 = vlaneseq
    %v1659 = vshrl.u32 %v1658, 7
    %v1660 = vsub.s32 0, %v1659
    %v1661 = vrot.slane %v1650, %v1660
    %v1662 = vlaneseq
    %v1663 = vshrl.u32 %v1662, 7
    %v1664 = vsub.s32 0, %v1663
    %v1665 = vrot.slane %v1657, %v1664
    %v1668 = vadd.f32 %v1627, %v1661
    %v1669 = vadd.f32 %v1632, %v1665
    %v1670 = vld [vmem:[%s8] sm:$0xff]
    %v1671 = vld [vmem:[%s8 + $0x8] sm:$0xff]
    %v1672 = vld [vmem:[%s8 + $0x10] sm:$0xff]
    %v1673 = vld [vmem:[%s8 + $0x18] sm:$0xff]
    %1674 = vmatprep.subr.mxu0 0.0
    %1675 = vmatpush1.msra.mxu0 %v1670
    %1676 = vmatprep.subr.mxu0 0.0
    %1677 = vmatpush1.msra.mxu0 %v1671
    %1678 = vmatprep.subr.mxu0 0.0
    %1679 = vmatpush1.msra.mxu0 %v1672
    %1680 = vmatprep.subr.mxu0 0.0
    %1681 = vmatpush1.msra.mxu0 %v1673
    %1682 = vmatprep.subr.mxu0 0.0
    %1683 = vmatpush1.msra.mxu0 0.0
    %1684 = vmatprep.subr.mxu0 0.0
    %1685 = vmatpush1.msra.mxu0 0.0
    %1686 = vmatprep.subr.mxu0 0.0
    %1687 = vmatpush1.msra.mxu0 0.0
    %1688 = vmatprep.subr.mxu0 0.0
    %1689 = vmatpush1.msra.mxu0 0.0
    %1690 = vmatprep.subr.mxu0 0.0
    %1691 = vmatpush1.msra.mxu0 0.0
    %1692 = vmatprep.subr.mxu0 0.0
    %1693 = vmatpush1.msra.mxu0 0.0
    %1694 = vmatprep.subr.mxu0 0.0
    %1695 = vmatpush1.msra.mxu0 0.0
    %1696 = vmatprep.subr.mxu0 0.0
    %1697 = vmatpush1.msra.mxu0 0.0
    %1698 = vmatprep.subr.mxu0 0.0
    %1699 = vmatpush1.msra.mxu0 0.0
    %1700 = vmatprep.subr.mxu0 0.0
    %1701 = vmatpush1.msra.mxu0 0.0
    %1702 = vmatprep.subr.mxu0 0.0
    %1703 = vmatpush1.msra.mxu0 0.0
    %1704 = vmatprep.subr.mxu0 0.0
    %1705 = vmatpush1.msra.mxu0 0.0
    %1706 = vmatprep.subr.mxu0 0.0
    %1707 = vmatpush1.msra.mxu0 0.0
    %1708 = vmatprep.subr.mxu0 0.0
    %1709 = vmatpush1.msra.mxu0 0.0
    %1710 = vmatprep.subr.mxu0 0.0
    %1711 = vmatpush1.msra.mxu0 0.0
    %1712 = vmatprep.subr.mxu0 0.0
    %1713 = vmatpush1.msra.mxu0 0.0
    %1714 = vmatprep.subr.mxu0 0.0
    %1715 = vmatpush1.msra.mxu0 0.0
    %1716 = vmatprep.subr.mxu0 0.0
    %1717 = vmatpush1.msra.mxu0 0.0
    %1718 = vmatprep.subr.mxu0 0.0
    %1719 = vmatpush1.msra.mxu0 0.0
    %1720 = vmatprep.subr.mxu0 0.0
    %1721 = vmatpush1.msra.mxu0 0.0
    %1722 = vmatprep.subr.mxu0 0.0
    %1723 = vmatpush1.msra.mxu0 0.0
    %1724 = vmatprep.subr.mxu0 0.0
    %1725 = vmatpush1.msra.mxu0 0.0
    %1726 = vmatprep.subr.mxu0 0.0
    %1727 = vmatpush1.msra.mxu0 0.0
    %1728 = vmatprep.subr.mxu0 0.0
    %1729 = vmatpush1.msra.mxu0 0.0
    %1730 = vmatprep.subr.mxu0 0.0
    %1731 = vmatpush1.msra.mxu0 0.0
    %1732 = vmatprep.subr.mxu0 0.0
    %1733 = vmatpush1.msra.mxu0 0.0
    %1734 = vmatprep.subr.mxu0 0.0
    %1735 = vmatpush1.msra.mxu0 0.0
    %1736 = vmatprep.subr.mxu0 0.0
    %1737 = vmatpush1.msra.mxu0 0.0
    %1738 = vmatprep.mubr.f32.mxu0 0.0
    %1739 = vmatmul.mubr.f32.gmra.mrb[0].mxu0 %v1351
    %v1740 = vpop.f32.mrb[0].mxu0
    %v1741 = vadd.f32 0.0, %v1740
    %v1742 = vpop.f32.mrb[0].mxu0
    %1743 = vdwg.mxu0
    %v1745 = vrot.slane %v1741, 1
    %v1748 = vadd.f32 %v1668, %v1741
    %v1749 = vadd.f32 %v1669, %v1745
    %v1750 = vxor.u32 %v1748, 2147483648
    %v1751 = vxor.u32 %v1749, 2147483648
    %v1752 = vmul.f32 %v1750, 1.442695
    %v1753 = vpow.pop %v1752
    %v1754 = vmul.f32 %v1751, 1.442695
    %v1755 = vpow.pop %v1754
    %v1756 = vadd.f32 %v1753, 1.0
    %v1757 = vadd.f32 %v1755, 1.0
    %v1758 = vrcp.pop %v1756
    %v1759 = vmul.f32 1.0, %v1758
    %v1760 = vrcp.pop %v1757
    %v1761 = vmul.f32 1.0, %v1760
    %v1762 = vtanh.pop %v1748
    %v1763 = vtanh.pop %v1749
    %1766 = vrot.lane.b32.xlu0 %v1762, 64
    %v1767 = vpop.permute.xlu0 %1766
    %1768 = vrot.lane.b32.xlu0 %v1763, 64
    %v1769 = vpop.permute.xlu0 %1768
    %v1772 = vmul.f32 %v1759, %v1767
    %v1773 = vmul.f32 %v1761, %v1769
    %v1774 = vtanh.pop %v1772
    %v1775 = vtanh.pop %v1773
    %1778 = vrot.lane.b32.xlu0 %v1774, 96
    %v1779 = vpop.permute.xlu0 %1778
    %1780 = vrot.lane.b32.xlu0 %v1775, 96
    %v1781 = vpop.permute.xlu0 %1780
    %v1784 = vmul.f32 %v1759, %v1779
    %v1785 = vmul.f32 %v1761, %v1781
    %v1788 = vrot.slane %v1785, 7
    %v1789 = vsel %vm357, %v1788, %v1784
    %1790 = vrot.lane.b32.xlu0 %v1789, 32
    %v1791 = vpop.permute.xlu0 %1790
    %v1792 = vsel %vm232, %v1791, 0
    %1794 = vmatprep.subr.mxu0 0.0
    %1795 = vmatpush1.msra.mxu0 %v1670
    %1796 = vmatprep.subr.mxu0 0.0
    %1797 = vmatpush1.msra.mxu0 %v1671
    %1798 = vmatprep.subr.mxu0 0.0
    %1799 = vmatpush1.msra.mxu0 %v1672
    %1800 = vmatprep.subr.mxu0 0.0
    %1801 = vmatpush1.msra.mxu0 %v1673
    %1802 = vmatprep.subr.mxu0 0.0
    %1803 = vmatpush1.msra.mxu0 0.0
    %1804 = vmatprep.subr.mxu0 0.0
    %1805 = vmatpush1.msra.mxu0 0.0
    %1806 = vmatprep.subr.mxu0 0.0
    %1807 = vmatpush1.msra.mxu0 0.0
    %1808 = vmatprep.subr.mxu0 0.0
    %1809 = vmatpush1.msra.mxu0 0.0
    %1810 = vmatprep.subr.mxu0 0.0
    %1811 = vmatpush1.msra.mxu0 0.0
    %1812 = vmatprep.subr.mxu0 0.0
    %1813 = vmatpush1.msra.mxu0 0.0
    %1814 = vmatprep.subr.mxu0 0.0
    %1815 = vmatpush1.msra.mxu0 0.0
    %1816 = vmatprep.subr.mxu0 0.0
    %1817 = vmatpush1.msra.mxu0 0.0
    %1818 = vmatprep.subr.mxu0 0.0
    %1819 = vmatpush1.msra.mxu0 0.0
    %1820 = vmatprep.subr.mxu0 0.0
    %1821 = vmatpush1.msra.mxu0 0.0
    %1822 = vmatprep.subr.mxu0 0.0
    %1823 = vmatpush1.msra.mxu0 0.0
    %1824 = vmatprep.subr.mxu0 0.0
    %1825 = vmatpush1.msra.mxu0 0.0
    %1826 = vmatprep.subr.mxu0 0.0
    %1827 = vmatpush1.msra.mxu0 0.0
    %1828 = vmatprep.subr.mxu0 0.0
    %1829 = vmatpush1.msra.mxu0 0.0
    %1830 = vmatprep.subr.mxu0 0.0
    %1831 = vmatpush1.msra.mxu0 0.0
    %1832 = vmatprep.subr.mxu0 0.0
    %1833 = vmatpush1.msra.mxu0 0.0
    %1834 = vmatprep.subr.mxu0 0.0
    %1835 = vmatpush1.msra.mxu0 0.0
    %1836 = vmatprep.subr.mxu0 0.0
    %1837 = vmatpush1.msra.mxu0 0.0
    %1838 = vmatprep.subr.mxu0 0.0
    %1839 = vmatpush1.msra.mxu0 0.0
    %1840 = vmatprep.subr.mxu0 0.0
    %1841 = vmatpush1.msra.mxu0 0.0
    %1842 = vmatprep.subr.mxu0 0.0
    %1843 = vmatpush1.msra.mxu0 0.0
    %1844 = vmatprep.subr.mxu0 0.0
    %1845 = vmatpush1.msra.mxu0 0.0
    %1846 = vmatprep.subr.mxu0 0.0
    %1847 = vmatpush1.msra.mxu0 0.0
    %1848 = vmatprep.subr.mxu0 0.0
    %1849 = vmatpush1.msra.mxu0 0.0
    %1850 = vmatprep.subr.mxu0 0.0
    %1851 = vmatpush1.msra.mxu0 0.0
    %1852 = vmatprep.subr.mxu0 0.0
    %1853 = vmatpush1.msra.mxu0 0.0
    %1854 = vmatprep.subr.mxu0 0.0
    %1855 = vmatpush1.msra.mxu0 0.0
    %1856 = vmatprep.subr.mxu0 0.0
    %1857 = vmatpush1.msra.mxu0 0.0
    %1858 = vmatprep.mubr.f32.mxu0 0.0
    %1859 = vmatmul.mubr.f32.gmra.mrb[0].mxu0 %v1792
    %v1860 = vpop.f32.mrb[0].mxu0
    %v1861 = vadd.f32 0.0, %v1860
    %v1862 = vpop.f32.mrb[0].mxu0
    %1863 = vdwg.mxu0
    %v1865 = vrot.slane %v1861, 7
    %v1868 = vadd.f32 %v1668, %v1865
    %v1869 = vadd.f32 %v1669, %v1861
    %v1870 = vxor.u32 %v1868, 2147483648
    %v1871 = vxor.u32 %v1869, 2147483648
    %v1872 = vmul.f32 %v1870, 1.442695
    %v1873 = vpow.pop %v1872
    %v1874 = vmul.f32 %v1871, 1.442695
    %v1875 = vpow.pop %v1874
    %v1876 = vadd.f32 %v1873, 1.0
    %v1877 = vadd.f32 %v1875, 1.0
    %v1878 = vrcp.pop %v1876
    %v1879 = vmul.f32 1.0, %v1878
    %v1880 = vrcp.pop %v1877
    %v1881 = vmul.f32 1.0, %v1880
    %v1882 = vtanh.pop %v1868
    %v1883 = vtanh.pop %v1869
    %v1886 = vrot.slane %v1772, 7
    %v1887 = vrot.slane %v1773, 7
    %1888 = vrot.lane.b32.xlu0 %v1886, 32
    %v1889 = vpop.permute.xlu0 %1888
    %1890 = vrot.lane.b32.xlu0 %v1887, 32
    %v1891 = vpop.permute.xlu0 %1890
    %v1894 = vmul.f32 %v1879, %v1889
    %v1895 = vmul.f32 %v1881, %v1891
    %1898 = vrot.lane.b32.xlu0 %v1882, 64
    %v1899 = vpop.permute.xlu0 %1898
    %1900 = vrot.lane.b32.xlu0 %v1883, 64
    %v1901 = vpop.permute.xlu0 %1900
    %v1904 = vmul.f32 %v1879, %v1899
    %v1905 = vmul.f32 %v1881, %v1901
    %1908 = vrot.lane.b32.xlu0 %v1904, 32
    %v1909 = vpop.permute.xlu0 %1908
    %1910 = vrot.lane.b32.xlu0 %v1905, 32
    %v1911 = vpop.permute.xlu0 %1910
    %v1914 = vadd.f32 %v1894, %v1909
    %v1915 = vadd.f32 %v1895, %v1911
    %v1916 = vtanh.pop %v1914
    %v1917 = vtanh.pop %v1915
    %1920 = vrot.lane.b32.xlu0 %v1916, 64
    %v1921 = vpop.permute.xlu0 %1920
    %1922 = vrot.lane.b32.xlu0 %v1917, 64
    %v1923 = vpop.permute.xlu0 %1922
    %v1926 = vmul.f32 %v1879, %v1921
    %v1927 = vmul.f32 %v1881, %v1923
    %v1930 = vrot.slane %v1926, 1
    %v1931 = vsel %vm357, %v1927, %v1930
    %1932 = vrot.lane.b32.xlu0 %v1931, 32
    %v1933 = vpop.permute.xlu0 %1932
    %v1934 = vsel %vm232, %v1933, 0
    %1936 = vmatprep.subr.mxu0 0.0
    %1937 = vmatpush1.msra.mxu0 %v1670
    %1938 = vmatprep.subr.mxu0 0.0
    %1939 = vmatpush1.msra.mxu0 %v1671
    %1940 = vmatprep.subr.mxu0 0.0
    %1941 = vmatpush1.msra.mxu0 %v1672
    %1942 = vmatprep.subr.mxu0 0.0
    %1943 = vmatpush1.msra.mxu0 %v1673
    %1944 = vmatprep.subr.mxu0 0.0
    %1945 = vmatpush1.msra.mxu0 0.0
    %1946 = vmatprep.subr.mxu0 0.0
    %1947 = vmatpush1.msra.mxu0 0.0
    %1948 = vmatprep.subr.mxu0 0.0
    %1949 = vmatpush1.msra.mxu0 0.0
    %1950 = vmatprep.subr.mxu0 0.0
    %1951 = vmatpush1.msra.mxu0 0.0
    %1952 = vmatprep.subr.mxu0 0.0
    %1953 = vmatpush1.msra.mxu0 0.0
    %1954 = vmatprep.subr.mxu0 0.0
    %1955 = vmatpush1.msra.mxu0 0.0
    %1956 = vmatprep.subr.mxu0 0.0
    %1957 = vmatpush1.msra.mxu0 0.0
    %1958 = vmatprep.subr.mxu0 0.0
    %1959 = vmatpush1.msra.mxu0 0.0
    %1960 = vmatprep.subr.mxu0 0.0
    %1961 = vmatpush1.msra.mxu0 0.0
    %1962 = vmatprep.subr.mxu0 0.0
    %1963 = vmatpush1.msra.mxu0 0.0
    %1964 = vmatprep.subr.mxu0 0.0
    %1965 = vmatpush1.msra.mxu0 0.0
    %1966 = vmatprep.subr.mxu0 0.0
    %1967 = vmatpush1.msra.mxu0 0.0
    %1968 = vmatprep.subr.mxu0 0.0
    %1969 = vmatpush1.msra.mxu0 0.0
    %1970 = vmatprep.subr.mxu0 0.0
    %1971 = vmatpush1.msra.mxu0 0.0
    %1972 = vmatprep.subr.mxu0 0.0
    %1973 = vmatpush1.msra.mxu0 0.0
    %1974 = vmatprep.subr.mxu0 0.0
    %1975 = vmatpush1.msra.mxu0 0.0
    %1976 = vmatprep.subr.mxu0 0.0
    %1977 = vmatpush1.msra.mxu0 0.0
    %1978 = vmatprep.subr.mxu0 0.0
    %1979 = vmatpush1.msra.mxu0 0.0
    %1980 = vmatprep.subr.mxu0 0.0
    %1981 = vmatpush1.msra.mxu0 0.0
    %1982 = vmatprep.subr.mxu0 0.0
    %1983 = vmatpush1.msra.mxu0 0.0
    %1984 = vmatprep.subr.mxu0 0.0
    %1985 = vmatpush1.msra.mxu0 0.0
    %1986 = vmatprep.subr.mxu0 0.0
    %1987 = vmatpush1.msra.mxu0 0.0
    %1988 = vmatprep.subr.mxu0 0.0
    %1989 = vmatpush1.msra.mxu0 0.0
    %1990 = vmatprep.subr.mxu0 0.0
    %1991 = vmatpush1.msra.mxu0 0.0
    %1992 = vmatprep.subr.mxu0 0.0
    %1993 = vmatpush1.msra.mxu0 0.0
    %1994 = vmatprep.subr.mxu0 0.0
    %1995 = vmatpush1.msra.mxu0 0.0
    %1996 = vmatprep.subr.mxu0 0.0
    %1997 = vmatpush1.msra.mxu0 0.0
    %1998 = vmatprep.subr.mxu0 0.0
    %1999 = vmatpush1.msra.mxu0 0.0
    %2000 = vmatprep.mubr.f32.mxu0 0.0
    %2001 = vmatmul.mubr.f32.gmra.mrb[0].mxu0 %v1934
    %v2002 = vpop.f32.mrb[0].mxu0
    %v2003 = vadd.f32 0.0, %v2002
    %v2004 = vpop.f32.mrb[0].mxu0
    %2005 = vdwg.mxu0
    %v2007 = vrot.slane %v2003, 6
    %v2008 = vrot.slane %v2003, 7
    %v2011 = vadd.f32 %v1668, %v2007
    %v2012 = vadd.f32 %v1669, %v2008
    %v2013 = vxor.u32 %v2011, 2147483648
    %v2014 = vxor.u32 %v2012, 2147483648
    %v2015 = vmul.f32 %v2013, 1.442695
    %v2016 = vpow.pop %v2015
    %v2017 = vmul.f32 %v2014, 1.442695
    %v2018 = vpow.pop %v2017
    %v2019 = vadd.f32 %v2016, 1.0
    %v2020 = vadd.f32 %v2018, 1.0
    %v2021 = vrcp.pop %v2019
    %v2022 = vmul.f32 1.0, %v2021
    %v2023 = vrcp.pop %v2020
    %v2024 = vmul.f32 1.0, %v2023
    %v2025 = vtanh.pop %v2011
    %v2026 = vtanh.pop %v2012
    %v2029 = vrot.slane %v1914, 7
    %v2030 = vrot.slane %v1915, 7
    %v2033 = vmul.f32 %v2022, %v2029
    %v2034 = vmul.f32 %v2024, %v2030
    %2037 = vrot.lane.b32.xlu0 %v2025, 64
    %v2038 = vpop.permute.xlu0 %2037
    %2039 = vrot.lane.b32.xlu0 %v2026, 64
    %v2040 = vpop.permute.xlu0 %2039
    %v2043 = vmul.f32 %v2022, %v2038
    %v2044 = vmul.f32 %v2024, %v2040
    %2047 = vrot.lane.b32.xlu0 %v2043, 32
    %v2048 = vpop.permute.xlu0 %2047
    %2049 = vrot.lane.b32.xlu0 %v2044, 32
    %v2050 = vpop.permute.xlu0 %2049
    %v2053 = vadd.f32 %v2033, %v2048
    %v2054 = vadd.f32 %v2034, %v2050
    %v2055 = vtanh.pop %v2053
    %v2056 = vtanh.pop %v2054
    %2059 = vrot.lane.b32.xlu0 %v2055, 64
    %v2060 = vpop.permute.xlu0 %2059
    %2061 = vrot.lane.b32.xlu0 %v2056, 64
    %v2062 = vpop.permute.xlu0 %2061
    %v2065 = vmul.f32 %v2022, %v2060
    %v2066 = vmul.f32 %v2024, %v2062
    %v2069 = vrot.slane %v2065, 2
    %v2070 = vrot.slane %v2066, 1
    %v2071 = vsel %vm357, %v2070, %v2069
    %2072 = vrot.lane.b32.xlu0 %v2071, 32
    %v2073 = vpop.permute.xlu0 %2072
    %v2074 = vsel %vm232, %v2073, 0
    %2076 = vmatprep.subr.mxu0 0.0
    %2077 = vmatpush1.msra.mxu0 %v1670
    %2078 = vmatprep.subr.mxu0 0.0
    %2079 = vmatpush1.msra.mxu0 %v1671
    %2080 = vmatprep.subr.mxu0 0.0
    %2081 = vmatpush1.msra.mxu0 %v1672
    %2082 = vmatprep.subr.mxu0 0.0
    %2083 = vmatpush1.msra.mxu0 %v1673
    %2084 = vmatprep.subr.mxu0 0.0
    %2085 = vmatpush1.msra.mxu0 0.0
    %2086 = vmatprep.subr.mxu0 0.0
    %2087 = vmatpush1.msra.mxu0 0.0
    %2088 = vmatprep.subr.mxu0 0.0
    %2089 = vmatpush1.msra.mxu0 0.0
    %2090 = vmatprep.subr.mxu0 0.0
    %2091 = vmatpush1.msra.mxu0 0.0
    %2092 = vmatprep.subr.mxu0 0.0
    %2093 = vmatpush1.msra.mxu0 0.0
    %2094 = vmatprep.subr.mxu0 0.0
    %2095 = vmatpush1.msra.mxu0 0.0
    %2096 = vmatprep.subr.mxu0 0.0
    %2097 = vmatpush1.msra.mxu0 0.0
    %2098 = vmatprep.subr.mxu0 0.0
    %2099 = vmatpush1.msra.mxu0 0.0
    %2100 = vmatprep.subr.mxu0 0.0
    %2101 = vmatpush1.msra.mxu0 0.0
    %2102 = vmatprep.subr.mxu0 0.0
    %2103 = vmatpush1.msra.mxu0 0.0
    %2104 = vmatprep.subr.mxu0 0.0
    %2105 = vmatpush1.msra.mxu0 0.0
    %2106 = vmatprep.subr.mxu0 0.0
    %2107 = vmatpush1.msra.mxu0 0.0
    %2108 = vmatprep.subr.mxu0 0.0
    %2109 = vmatpush1.msra.mxu0 0.0
    %2110 = vmatprep.subr.mxu0 0.0
    %2111 = vmatpush1.msra.mxu0 0.0
    %2112 = vmatprep.subr.mxu0 0.0
    %2113 = vmatpush1.msra.mxu0 0.0
    %2114 = vmatprep.subr.mxu0 0.0
    %2115 = vmatpush1.msra.mxu0 0.0
    %2116 = vmatprep.subr.mxu0 0.0
    %2117 = vmatpush1.msra.mxu0 0.0
    %2118 = vmatprep.subr.mxu0 0.0
    %2119 = vmatpush1.msra.mxu0 0.0
    %2120 = vmatprep.subr.mxu0 0.0
    %2121 = vmatpush1.msra.mxu0 0.0
    %2122 = vmatprep.subr.mxu0 0.0
    %2123 = vmatpush1.msra.mxu0 0.0
    %2124 = vmatprep.subr.mxu0 0.0
    %2125 = vmatpush1.msra.mxu0 0.0
    %2126 = vmatprep.subr.mxu0 0.0
    %2127 = vmatpush1.msra.mxu0 0.0
    %2128 = vmatprep.subr.mxu0 0.0
    %2129 = vmatpush1.msra.mxu0 0.0
    %2130 = vmatprep.subr.mxu0 0.0
    %2131 = vmatpush1.msra.mxu0 0.0
    %2132 = vmatprep.subr.mxu0 0.0
    %2133 = vmatpush1.msra.mxu0 0.0
    %2134 = vmatprep.subr.mxu0 0.0
    %2135 = vmatpush1.msra.mxu0 0.0
    %2136 = vmatprep.subr.mxu0 0.0
    %2137 = vmatpush1.msra.mxu0 0.0
    %2138 = vmatprep.subr.mxu0 0.0
    %2139 = vmatpush1.msra.mxu0 0.0
    %2140 = vmatprep.mubr.f32.mxu0 0.0
    %2141 = vmatmul.mubr.f32.gmra.mrb[0].mxu0 %v2074
    %v2142 = vpop.f32.mrb[0].mxu0
    %v2143 = vadd.f32 0.0, %v2142
    %v2144 = vpop.f32.mrb[0].mxu0
    %2145 = vdwg.mxu0
    %v2147 = vrot.slane %v2143, 5
    %v2148 = vrot.slane %v2143, 6
    %v2151 = vadd.f32 %v1668, %v2147
    %v2152 = vadd.f32 %v1669, %v2148
    %v2153 = vxor.u32 %v2151, 2147483648
    %v2154 = vxor.u32 %v2152, 2147483648
    %v2155 = vmul.f32 %v2153, 1.442695
    %v2156 = vpow.pop %v2155
    %v2157 = vmul.f32 %v2154, 1.442695
    %v2158 = vpow.pop %v2157
    %v2159 = vadd.f32 %v2156, 1.0
    %v2160 = vadd.f32 %v2158, 1.0
    %v2161 = vrcp.pop %v2159
    %v2162 = vmul.f32 1.0, %v2161
    %v2163 = vrcp.pop %v2160
    %v2164 = vmul.f32 1.0, %v2163
    %v2165 = vtanh.pop %v2151
    %v2166 = vtanh.pop %v2152
    %v2169 = vrot.slane %v2053, 7
    %v2170 = vrot.slane %v2054, 7
    %v2173 = vmul.f32 %v2162, %v2169
    %v2174 = vmul.f32 %v2164, %v2170
    %2177 = vrot.lane.b32.xlu0 %v2165, 64
    %v2178 = vpop.permute.xlu0 %2177
    %2179 = vrot.lane.b32.xlu0 %v2166, 64
    %v2180 = vpop.permute.xlu0 %2179
    %v2183 = vmul.f32 %v2162, %v2178
    %v2184 = vmul.f32 %v2164, %v2180
    %2187 = vrot.lane.b32.xlu0 %v2183, 32
    %v2188 = vpop.permute.xlu0 %2187
    %2189 = vrot.lane.b32.xlu0 %v2184, 32
    %v2190 = vpop.permute.xlu0 %2189
    %v2193 = vadd.f32 %v2173, %v2188
    %v2194 = vadd.f32 %v2174, %v2190
    %v2195 = vtanh.pop %v2193
    %v2196 = vtanh.pop %v2194
    %2199 = vrot.lane.b32.xlu0 %v2195, 64
    %v2200 = vpop.permute.xlu0 %2199
    %2201 = vrot.lane.b32.xlu0 %v2196, 64
    %v2202 = vpop.permute.xlu0 %2201
    %v2205 = vmul.f32 %v2162, %v2200
    %v2206 = vmul.f32 %v2164, %v2202
    %v2209 = vrot.slane %v2205, 3
    %v2210 = vrot.slane %v2206, 2
    %v2211 = vsel %vm357, %v2210, %v2209
    %2212 = vrot.lane.b32.xlu0 %v2211, 32
    %v2213 = vpop.permute.xlu0 %2212
    %v2214 = vsel %vm232, %v2213, 0
    %2216 = vmatprep.subr.mxu0 0.0
    %2217 = vmatpush1.msra.mxu0 %v1670
    %2218 = vmatprep.subr.mxu0 0.0
    %2219 = vmatpush1.msra.mxu0 %v1671
    %2220 = vmatprep.subr.mxu0 0.0
    %2221 = vmatpush1.msra.mxu0 %v1672
    %2222 = vmatprep.subr.mxu0 0.0
    %2223 = vmatpush1.msra.mxu0 %v1673
    %2224 = vmatprep.subr.mxu0 0.0
    %2225 = vmatpush1.msra.mxu0 0.0
    %2226 = vmatprep.subr.mxu0 0.0
    %2227 = vmatpush1.msra.mxu0 0.0
    %2228 = vmatprep.subr.mxu0 0.0
    %2229 = vmatpush1.msra.mxu0 0.0
    %2230 = vmatprep.subr.mxu0 0.0
    %2231 = vmatpush1.msra.mxu0 0.0
    %2232 = vmatprep.subr.mxu0 0.0
    %2233 = vmatpush1.msra.mxu0 0.0
    %2234 = vmatprep.subr.mxu0 0.0
    %2235 = vmatpush1.msra.mxu0 0.0
    %2236 = vmatprep.subr.mxu0 0.0
    %2237 = vmatpush1.msra.mxu0 0.0
    %2238 = vmatprep.subr.mxu0 0.0
    %2239 = vmatpush1.msra.mxu0 0.0
    %2240 = vmatprep.subr.mxu0 0.0
    %2241 = vmatpush1.msra.mxu0 0.0
    %2242 = vmatprep.subr.mxu0 0.0
    %2243 = vmatpush1.msra.mxu0 0.0
    %2244 = vmatprep.subr.mxu0 0.0
    %2245 = vmatpush1.msra.mxu0 0.0
    %2246 = vmatprep.subr.mxu0 0.0
    %2247 = vmatpush1.msra.mxu0 0.0
    %2248 = vmatprep.subr.mxu0 0.0
    %2249 = vmatpush1.msra.mxu0 0.0
    %2250 = vmatprep.subr.mxu0 0.0
    %2251 = vmatpush1.msra.mxu0 0.0
    %2252 = vmatprep.subr.mxu0 0.0
    %2253 = vmatpush1.msra.mxu0 0.0
    %2254 = vmatprep.subr.mxu0 0.0
    %2255 = vmatpush1.msra.mxu0 0.0
    %2256 = vmatprep.subr.mxu0 0.0
    %2257 = vmatpush1.msra.mxu0 0.0
    %2258 = vmatprep.subr.mxu0 0.0
    %2259 = vmatpush1.msra.mxu0 0.0
    %2260 = vmatprep.subr.mxu0 0.0
    %2261 = vmatpush1.msra.mxu0 0.0
    %2262 = vmatprep.subr.mxu0 0.0
    %2263 = vmatpush1.msra.mxu0 0.0
    %2264 = vmatprep.subr.mxu0 0.0
    %2265 = vmatpush1.msra.mxu0 0.0
    %2266 = vmatprep.subr.mxu0 0.0
    %2267 = vmatpush1.msra.mxu0 0.0
    %2268 = vmatprep.subr.mxu0 0.0
    %2269 = vmatpush1.msra.mxu0 0.0
    %2270 = vmatprep.subr.mxu0 0.0
    %2271 = vmatpush1.msra.mxu0 0.0
    %2272 = vmatprep.subr.mxu0 0.0
    %2273 = vmatpush1.msra.mxu0 0.0
    %2274 = vmatprep.subr.mxu0 0.0
    %2275 = vmatpush1.msra.mxu0 0.0
    %2276 = vmatprep.subr.mxu0 0.0
    %2277 = vmatpush1.msra.mxu0 0.0
    %2278 = vmatprep.subr.mxu0 0.0
    %2279 = vmatpush1.msra.mxu0 0.0
    %2280 = vmatprep.mubr.f32.mxu0 0.0
    %2281 = vmatmul.mubr.f32.gmra.mrb[0].mxu0 %v2214
    %v2282 = vpop.f32.mrb[0].mxu0
    %v2283 = vadd.f32 0.0, %v2282
    %v2284 = vpop.f32.mrb[0].mxu0
    %2285 = vdwg.mxu0
    %v2287 = vrot.slane %v2283, 4
    %v2288 = vrot.slane %v2283, 5
    %v2291 = vadd.f32 %v1668, %v2287
    %v2292 = vadd.f32 %v1669, %v2288
    %v2293 = vxor.u32 %v2291, 2147483648
    %v2294 = vxor.u32 %v2292, 2147483648
    %v2295 = vmul.f32 %v2293, 1.442695
    %v2296 = vpow.pop %v2295
    %v2297 = vmul.f32 %v2294, 1.442695
    %v2298 = vpow.pop %v2297
    %v2299 = vadd.f32 %v2296, 1.0
    %v2300 = vadd.f32 %v2298, 1.0
    %v2301 = vrcp.pop %v2299
    %v2302 = vmul.f32 1.0, %v2301
    %v2303 = vrcp.pop %v2300
    %v2304 = vmul.f32 1.0, %v2303
    %v2305 = vtanh.pop %v2291
    %v2306 = vtanh.pop %v2292
    %v2309 = vrot.slane %v2193, 7
    %v2310 = vrot.slane %v2194, 7
    %v2313 = vmul.f32 %v2302, %v2309
    %v2314 = vmul.f32 %v2304, %v2310
    %2317 = vrot.lane.b32.xlu0 %v2305, 64
    %v2318 = vpop.permute.xlu0 %2317
    %2319 = vrot.lane.b32.xlu0 %v2306, 64
    %v2320 = vpop.permute.xlu0 %2319
    %v2323 = vmul.f32 %v2302, %v2318
    %v2324 = vmul.f32 %v2304, %v2320
    %2327 = vrot.lane.b32.xlu0 %v2323, 32
    %v2328 = vpop.permute.xlu0 %2327
    %2329 = vrot.lane.b32.xlu0 %v2324, 32
    %v2330 = vpop.permute.xlu0 %2329
    %v2333 = vadd.f32 %v2313, %v2328
    %v2334 = vadd.f32 %v2314, %v2330
    %v2335 = vtanh.pop %v2333
    %v2336 = vtanh.pop %v2334
    %2339 = vrot.lane.b32.xlu0 %v2335, 64
    %v2340 = vpop.permute.xlu0 %2339
    %2341 = vrot.lane.b32.xlu0 %v2336, 64
    %v2342 = vpop.permute.xlu0 %2341
    %v2345 = vmul.f32 %v2302, %v2340
    %v2346 = vmul.f32 %v2304, %v2342
    %v2349 = vrot.slane %v2345, 4
    %v2350 = vrot.slane %v2346, 3
    %v2351 = vsel %vm357, %v2350, %v2349
    %2352 = vrot.lane.b32.xlu0 %v2351, 32
    %v2353 = vpop.permute.xlu0 %2352
    %v2354 = vsel %vm232, %v2353, 0
    %2356 = vmatprep.subr.mxu0 0.0
    %2357 = vmatpush1.msra.mxu0 %v1670
    %2358 = vmatprep.subr.mxu0 0.0
    %2359 = vmatpush1.msra.mxu0 %v1671
    %2360 = vmatprep.subr.mxu0 0.0
    %2361 = vmatpush1.msra.mxu0 %v1672
    %2362 = vmatprep.subr.mxu0 0.0
    %2363 = vmatpush1.msra.mxu0 %v1673
    %2364 = vmatprep.subr.mxu0 0.0
    %2365 = vmatpush1.msra.mxu0 0.0
    %2366 = vmatprep.subr.mxu0 0.0
    %2367 = vmatpush1.msra.mxu0 0.0
    %2368 = vmatprep.subr.mxu0 0.0
    %2369 = vmatpush1.msra.mxu0 0.0
    %2370 = vmatprep.subr.mxu0 0.0
    %2371 = vmatpush1.msra.mxu0 0.0
    %2372 = vmatprep.subr.mxu0 0.0
    %2373 = vmatpush1.msra.mxu0 0.0
    %2374 = vmatprep.subr.mxu0 0.0
    %2375 = vmatpush1.msra.mxu0 0.0
    %2376 = vmatprep.subr.mxu0 0.0
    %2377 = vmatpush1.msra.mxu0 0.0
    %2378 = vmatprep.subr.mxu0 0.0
    %2379 = vmatpush1.msra.mxu0 0.0
    %2380 = vmatprep.subr.mxu0 0.0
    %2381 = vmatpush1.msra.mxu0 0.0
    %2382 = vmatprep.subr.mxu0 0.0
    %2383 = vmatpush1.msra.mxu0 0.0
    %2384 = vmatprep.subr.mxu0 0.0
    %2385 = vmatpush1.msra.mxu0 0.0
    %2386 = vmatprep.subr.mxu0 0.0
    %2387 = vmatpush1.msra.mxu0 0.0
    %2388 = vmatprep.subr.mxu0 0.0
    %2389 = vmatpush1.msra.mxu0 0.0
    %2390 = vmatprep.subr.mxu0 0.0
    %2391 = vmatpush1.msra.mxu0 0.0
    %2392 = vmatprep.subr.mxu0 0.0
    %2393 = vmatpush1.msra.mxu0 0.0
    %2394 = vmatprep.subr.mxu0 0.0
    %2395 = vmatpush1.msra.mxu0 0.0
    %2396 = vmatprep.subr.mxu0 0.0
    %2397 = vmatpush1.msra.mxu0 0.0
    %2398 = vmatprep.subr.mxu0 0.0
    %2399 = vmatpush1.msra.mxu0 0.0
    %2400 = vmatprep.subr.mxu0 0.0
    %2401 = vmatpush1.msra.mxu0 0.0
    %2402 = vmatprep.subr.mxu0 0.0
    %2403 = vmatpush1.msra.mxu0 0.0
    %2404 = vmatprep.subr.mxu0 0.0
    %2405 = vmatpush1.msra.mxu0 0.0
    %2406 = vmatprep.subr.mxu0 0.0
    %2407 = vmatpush1.msra.mxu0 0.0
    %2408 = vmatprep.subr.mxu0 0.0
    %2409 = vmatpush1.msra.mxu0 0.0
    %2410 = vmatprep.subr.mxu0 0.0
    %2411 = vmatpush1.msra.mxu0 0.0
    %2412 = vmatprep.subr.mxu0 0.0
    %2413 = vmatpush1.msra.mxu0 0.0
    %2414 = vmatprep.subr.mxu0 0.0
    %2415 = vmatpush1.msra.mxu0 0.0
    %2416 = vmatprep.subr.mxu0 0.0
    %2417 = vmatpush1.msra.mxu0 0.0
    %2418 = vmatprep.subr.mxu0 0.0
    %2419 = vmatpush1.msra.mxu0 0.0
    %2420 = vmatprep.mubr.f32.mxu0 0.0
    %2421 = vmatmul.mubr.f32.gmra.mrb[0].mxu0 %v2354
    %v2422 = vpop.f32.mrb[0].mxu0
    %v2423 = vadd.f32 0.0, %v2422
    %v2424 = vpop.f32.mrb[0].mxu0
    %2425 = vdwg.mxu0
    %v2427 = vrot.slane %v2423, 3
    %v2428 = vrot.slane %v2423, 4
    %v2431 = vadd.f32 %v1668, %v2427
    %v2432 = vadd.f32 %v1669, %v2428
    %v2433 = vxor.u32 %v2431, 2147483648
    %v2434 = vxor.u32 %v2432, 2147483648
    %v2435 = vmul.f32 %v2433, 1.442695
    %v2436 = vpow.pop %v2435
    %v2437 = vmul.f32 %v2434, 1.442695
    %v2438 = vpow.pop %v2437
    %v2439 = vadd.f32 %v2436, 1.0
    %v2440 = vadd.f32 %v2438, 1.0
    %v2441 = vrcp.pop %v2439
    %v2442 = vmul.f32 1.0, %v2441
    %v2443 = vrcp.pop %v2440
    %v2444 = vmul.f32 1.0, %v2443
    %v2445 = vtanh.pop %v2431
    %v2446 = vtanh.pop %v2432
    %v2449 = vrot.slane %v2333, 7
    %v2450 = vrot.slane %v2334, 7
    %v2453 = vmul.f32 %v2442, %v2449
    %v2454 = vmul.f32 %v2444, %v2450
    %2457 = vrot.lane.b32.xlu0 %v2445, 64
    %v2458 = vpop.permute.xlu0 %2457
    %2459 = vrot.lane.b32.xlu0 %v2446, 64
    %v2460 = vpop.permute.xlu0 %2459
    %v2463 = vmul.f32 %v2442, %v2458
    %v2464 = vmul.f32 %v2444, %v2460
    %2467 = vrot.lane.b32.xlu0 %v2463, 32
    %v2468 = vpop.permute.xlu0 %2467
    %2469 = vrot.lane.b32.xlu0 %v2464, 32
    %v2470 = vpop.permute.xlu0 %2469
    %v2473 = vadd.f32 %v2453, %v2468
    %v2474 = vadd.f32 %v2454, %v2470
    %v2475 = vtanh.pop %v2473
    %v2476 = vtanh.pop %v2474
    %2479 = vrot.lane.b32.xlu0 %v2475, 64
    %v2480 = vpop.permute.xlu0 %2479
    %2481 = vrot.lane.b32.xlu0 %v2476, 64
    %v2482 = vpop.permute.xlu0 %2481
    %v2485 = vmul.f32 %v2442, %v2480
    %v2486 = vmul.f32 %v2444, %v2482
    %v2489 = vrot.slane %v2485, 5
    %v2490 = vrot.slane %v2486, 4
    %v2491 = vsel %vm357, %v2490, %v2489
    %2492 = vrot.lane.b32.xlu0 %v2491, 32
    %v2493 = vpop.permute.xlu0 %2492
    %v2494 = vsel %vm232, %v2493, 0
    %2496 = vmatprep.subr.mxu0 0.0
    %2497 = vmatpush1.msra.mxu0 %v1670
    %2498 = vmatprep.subr.mxu0 0.0
    %2499 = vmatpush1.msra.mxu0 %v1671
    %2500 = vmatprep.subr.mxu0 0.0
    %2501 = vmatpush1.msra.mxu0 %v1672
    %2502 = vmatprep.subr.mxu0 0.0
    %2503 = vmatpush1.msra.mxu0 %v1673
    %2504 = vmatprep.subr.mxu0 0.0
    %2505 = vmatpush1.msra.mxu0 0.0
    %2506 = vmatprep.subr.mxu0 0.0
    %2507 = vmatpush1.msra.mxu0 0.0
    %2508 = vmatprep.subr.mxu0 0.0
    %2509 = vmatpush1.msra.mxu0 0.0
    %2510 = vmatprep.subr.mxu0 0.0
    %2511 = vmatpush1.msra.mxu0 0.0
    %2512 = vmatprep.subr.mxu0 0.0
    %2513 = vmatpush1.msra.mxu0 0.0
    %2514 = vmatprep.subr.mxu0 0.0
    %2515 = vmatpush1.msra.mxu0 0.0
    %2516 = vmatprep.subr.mxu0 0.0
    %2517 = vmatpush1.msra.mxu0 0.0
    %2518 = vmatprep.subr.mxu0 0.0
    %2519 = vmatpush1.msra.mxu0 0.0
    %2520 = vmatprep.subr.mxu0 0.0
    %2521 = vmatpush1.msra.mxu0 0.0
    %2522 = vmatprep.subr.mxu0 0.0
    %2523 = vmatpush1.msra.mxu0 0.0
    %2524 = vmatprep.subr.mxu0 0.0
    %2525 = vmatpush1.msra.mxu0 0.0
    %2526 = vmatprep.subr.mxu0 0.0
    %2527 = vmatpush1.msra.mxu0 0.0
    %2528 = vmatprep.subr.mxu0 0.0
    %2529 = vmatpush1.msra.mxu0 0.0
    %2530 = vmatprep.subr.mxu0 0.0
    %2531 = vmatpush1.msra.mxu0 0.0
    %2532 = vmatprep.subr.mxu0 0.0
    %2533 = vmatpush1.msra.mxu0 0.0
    %2534 = vmatprep.subr.mxu0 0.0
    %2535 = vmatpush1.msra.mxu0 0.0
    %2536 = vmatprep.subr.mxu0 0.0
    %2537 = vmatpush1.msra.mxu0 0.0
    %2538 = vmatprep.subr.mxu0 0.0
    %2539 = vmatpush1.msra.mxu0 0.0
    %2540 = vmatprep.subr.mxu0 0.0
    %2541 = vmatpush1.msra.mxu0 0.0
    %2542 = vmatprep.subr.mxu0 0.0
    %2543 = vmatpush1.msra.mxu0 0.0
    %2544 = vmatprep.subr.mxu0 0.0
    %2545 = vmatpush1.msra.mxu0 0.0
    %2546 = vmatprep.subr.mxu0 0.0
    %2547 = vmatpush1.msra.mxu0 0.0
    %2548 = vmatprep.subr.mxu0 0.0
    %2549 = vmatpush1.msra.mxu0 0.0
    %2550 = vmatprep.subr.mxu0 0.0
    %2551 = vmatpush1.msra.mxu0 0.0
    %2552 = vmatprep.subr.mxu0 0.0
    %2553 = vmatpush1.msra.mxu0 0.0
    %2554 = vmatprep.subr.mxu0 0.0
    %2555 = vmatpush1.msra.mxu0 0.0
    %2556 = vmatprep.subr.mxu0 0.0
    %2557 = vmatpush1.msra.mxu0 0.0
    %2558 = vmatprep.subr.mxu0 0.0
    %2559 = vmatpush1.msra.mxu0 0.0
    %2560 = vmatprep.mubr.f32.mxu0 0.0
    %2561 = vmatmul.mubr.f32.gmra.mrb[0].mxu0 %v2494
    %v2562 = vpop.f32.mrb[0].mxu0
    %v2563 = vadd.f32 0.0, %v2562
    %v2564 = vpop.f32.mrb[0].mxu0
    %2565 = vdwg.mxu0
    %v2567 = vrot.slane %v2563, 2
    %v2568 = vrot.slane %v2563, 3
    %v2571 = vadd.f32 %v1668, %v2567
    %v2572 = vadd.f32 %v1669, %v2568
    %v2573 = vxor.u32 %v2571, 2147483648
    %v2574 = vxor.u32 %v2572, 2147483648
    %v2575 = vmul.f32 %v2573, 1.442695
    %v2576 = vpow.pop %v2575
    %v2577 = vmul.f32 %v2574, 1.442695
    %v2578 = vpow.pop %v2577
    %v2579 = vadd.f32 %v2576, 1.0
    %v2580 = vadd.f32 %v2578, 1.0
    %v2581 = vrcp.pop %v2579
    %v2582 = vmul.f32 1.0, %v2581
    %v2583 = vrcp.pop %v2580
    %v2584 = vmul.f32 1.0, %v2583
    %v2585 = vtanh.pop %v2571
    %v2586 = vtanh.pop %v2572
    %v2589 = vrot.slane %v2473, 7
    %v2590 = vrot.slane %v2474, 7
    %v2593 = vmul.f32 %v2582, %v2589
    %v2594 = vmul.f32 %v2584, %v2590
    %2597 = vrot.lane.b32.xlu0 %v2585, 64
    %v2598 = vpop.permute.xlu0 %2597
    %2599 = vrot.lane.b32.xlu0 %v2586, 64
    %v2600 = vpop.permute.xlu0 %2599
    %v2603 = vmul.f32 %v2582, %v2598
    %v2604 = vmul.f32 %v2584, %v2600
    %2607 = vrot.lane.b32.xlu0 %v2603, 32
    %v2608 = vpop.permute.xlu0 %2607
    %2609 = vrot.lane.b32.xlu0 %v2604, 32
    %v2610 = vpop.permute.xlu0 %2609
    %v2613 = vadd.f32 %v2593, %v2608
    %v2614 = vadd.f32 %v2594, %v2610
    %v2615 = vtanh.pop %v2613
    %v2616 = vtanh.pop %v2614
    %2619 = vrot.lane.b32.xlu0 %v2615, 64
    %v2620 = vpop.permute.xlu0 %2619
    %2621 = vrot.lane.b32.xlu0 %v2616, 64
    %v2622 = vpop.permute.xlu0 %2621
    %v2625 = vmul.f32 %v2582, %v2620
    %v2626 = vmul.f32 %v2584, %v2622
    %v2629 = vrot.slane %v2625, 6
    %v2630 = vrot.slane %v2626, 5
    %v2631 = vsel %vm357, %v2630, %v2629
    %2632 = vrot.lane.b32.xlu0 %v2631, 32
    %v2633 = vpop.permute.xlu0 %2632
    %v2634 = vsel %vm232, %v2633, 0
    %2636 = vmatprep.subr.mxu0 0.0
    %2637 = vmatpush1.msra.mxu0 %v1670
    %2638 = vmatprep.subr.mxu0 0.0
    %2639 = vmatpush1.msra.mxu0 %v1671
    %2640 = vmatprep.subr.mxu0 0.0
    %2641 = vmatpush1.msra.mxu0 %v1672
    %2642 = vmatprep.subr.mxu0 0.0
    %2643 = vmatpush1.msra.mxu0 %v1673
    %2644 = vmatprep.subr.mxu0 0.0
    %2645 = vmatpush1.msra.mxu0 0.0
    %2646 = vmatprep.subr.mxu0 0.0
    %2647 = vmatpush1.msra.mxu0 0.0
    %2648 = vmatprep.subr.mxu0 0.0
    %2649 = vmatpush1.msra.mxu0 0.0
    %2650 = vmatprep.subr.mxu0 0.0
    %2651 = vmatpush1.msra.mxu0 0.0
    %2652 = vmatprep.subr.mxu0 0.0
    %2653 = vmatpush1.msra.mxu0 0.0
    %2654 = vmatprep.subr.mxu0 0.0
    %2655 = vmatpush1.msra.mxu0 0.0
    %2656 = vmatprep.subr.mxu0 0.0
    %2657 = vmatpush1.msra.mxu0 0.0
    %2658 = vmatprep.subr.mxu0 0.0
    %2659 = vmatpush1.msra.mxu0 0.0
    %2660 = vmatprep.subr.mxu0 0.0
    %2661 = vmatpush1.msra.mxu0 0.0
    %2662 = vmatprep.subr.mxu0 0.0
    %2663 = vmatpush1.msra.mxu0 0.0
    %2664 = vmatprep.subr.mxu0 0.0
    %2665 = vmatpush1.msra.mxu0 0.0
    %2666 = vmatprep.subr.mxu0 0.0
    %2667 = vmatpush1.msra.mxu0 0.0
    %2668 = vmatprep.subr.mxu0 0.0
    %2669 = vmatpush1.msra.mxu0 0.0
    %2670 = vmatprep.subr.mxu0 0.0
    %2671 = vmatpush1.msra.mxu0 0.0
    %2672 = vmatprep.subr.mxu0 0.0
    %2673 = vmatpush1.msra.mxu0 0.0
    %2674 = vmatprep.subr.mxu0 0.0
    %2675 = vmatpush1.msra.mxu0 0.0
    %2676 = vmatprep.subr.mxu0 0.0
    %2677 = vmatpush1.msra.mxu0 0.0
    %2678 = vmatprep.subr.mxu0 0.0
    %2679 = vmatpush1.msra.mxu0 0.0
    %2680 = vmatprep.subr.mxu0 0.0
    %2681 = vmatpush1.msra.mxu0 0.0
    %2682 = vmatprep.subr.mxu0 0.0
    %2683 = vmatpush1.msra.mxu0 0.0
    %2684 = vmatprep.subr.mxu0 0.0
    %2685 = vmatpush1.msra.mxu0 0.0
    %2686 = vmatprep.subr.mxu0 0.0
    %2687 = vmatpush1.msra.mxu0 0.0
    %2688 = vmatprep.subr.mxu0 0.0
    %2689 = vmatpush1.msra.mxu0 0.0
    %2690 = vmatprep.subr.mxu0 0.0
    %2691 = vmatpush1.msra.mxu0 0.0
    %2692 = vmatprep.subr.mxu0 0.0
    %2693 = vmatpush1.msra.mxu0 0.0
    %2694 = vmatprep.subr.mxu0 0.0
    %2695 = vmatpush1.msra.mxu0 0.0
    %2696 = vmatprep.subr.mxu0 0.0
    %2697 = vmatpush1.msra.mxu0 0.0
    %2698 = vmatprep.subr.mxu0 0.0
    %2699 = vmatpush1.msra.mxu0 0.0
    %2700 = vmatprep.mubr.f32.mxu0 0.0
    %2701 = vmatmul.mubr.f32.gmra.mrb[0].mxu0 %v2634
    %v2702 = vpop.f32.mrb[0].mxu0
    %v2703 = vadd.f32 0.0, %v2702
    %v2704 = vpop.f32.mrb[0].mxu0
    %2705 = vdwg.mxu0
    %v2707 = vrot.slane %v2703, 1
    %v2708 = vrot.slane %v2703, 2
    %v2711 = vadd.f32 %v1668, %v2707
    %v2712 = vadd.f32 %v1669, %v2708
    %v2713 = vxor.u32 %v2711, 2147483648
    %v2714 = vxor.u32 %v2712, 2147483648
    %v2715 = vmul.f32 %v2713, 1.442695
    %v2716 = vpow.pop %v2715
    %v2717 = vmul.f32 %v2714, 1.442695
    %v2718 = vpow.pop %v2717
    %v2719 = vadd.f32 %v2716, 1.0
    %v2720 = vadd.f32 %v2718, 1.0
    %v2721 = vrcp.pop %v2719
    %v2722 = vmul.f32 1.0, %v2721
    %v2723 = vrcp.pop %v2720
    %v2724 = vmul.f32 1.0, %v2723
    %v2725 = vtanh.pop %v2711
    %v2726 = vtanh.pop %v2712
    %v2729 = vrot.slane %v2613, 7
    %v2730 = vrot.slane %v2614, 7
    %v2733 = vmul.f32 %v2722, %v2729
    %v2734 = vmul.f32 %v2724, %v2730
    %2737 = vrot.lane.b32.xlu0 %v2725, 64
    %v2738 = vpop.permute.xlu0 %2737
    %2739 = vrot.lane.b32.xlu0 %v2726, 64
    %v2740 = vpop.permute.xlu0 %2739
    %v2743 = vmul.f32 %v2722, %v2738
    %v2744 = vmul.f32 %v2724, %v2740
    %2747 = vrot.lane.b32.xlu0 %v2743, 32
    %v2748 = vpop.permute.xlu0 %2747
    %2749 = vrot.lane.b32.xlu0 %v2744, 32
    %v2750 = vpop.permute.xlu0 %2749
    %v2753 = vadd.f32 %v2733, %v2748
    %v2754 = vadd.f32 %v2734, %v2750
    %v2755 = vtanh.pop %v2753
    %v2756 = vtanh.pop %v2754
    %2759 = vrot.lane.b32.xlu0 %v2755, 64
    %v2760 = vpop.permute.xlu0 %2759
    %2761 = vrot.lane.b32.xlu0 %v2756, 64
    %v2762 = vpop.permute.xlu0 %2761
    %v2765 = vmul.f32 %v2722, %v2760
    %v2766 = vmul.f32 %v2724, %v2762
    %vm2767 = vcmask 1040384
    %v2768 = vsel %vm2767, %v1784, %v1926
    %v2769 = vsel %vm2767, %v1785, %v1927
    %vm2770 = vcmask 1041408
    %v2771 = vsel %vm2770, %v2768, %v2065
    %v2772 = vsel %vm2770, %v2769, %v2066
    %vm2773 = vcmask 1042432
    %v2774 = vsel %vm2773, %v2771, %v2205
    %v2775 = vsel %vm2773, %v2772, %v2206
    %vm2776 = vcmask 1043456
    %v2777 = vsel %vm2776, %v2774, %v2345
    %v2778 = vsel %vm2776, %v2775, %v2346
    %vm2779 = vcmask 1044480
    %v2780 = vsel %vm2779, %v2777, %v2485
    %v2781 = vsel %vm2779, %v2778, %v2486
    %vm2782 = vcmask 1045504
    %v2783 = vsel %vm2782, %v2780, %v2625
    %v2784 = vsel %vm2782, %v2781, %v2626
    %vm2785 = vcmask 1046528
    %v2786 = vsel %vm2785, %v2783, %v2765
    %v2787 = vsel %vm2785, %v2784, %v2766
    %v2788 = vld [vmem:[%s11] sm:$0xff]
    %v2789 = vld [vmem:[%s11 + $0x8] sm:$0xff]
    %v2790 = vld [vmem:[%s11 + $0x10] sm:$0xff]
    %v2791 = vld [vmem:[%s11 + $0x18] sm:$0xff]
    %2794 = vrot.lane.b32.xlu0 %v2786, 32
    %v2795 = vpop.permute.xlu0 %2794
    %2796 = vrot.lane.b32.xlu0 %v2787, 32
    %v2797 = vpop.permute.xlu0 %2796
    %v2798 = vsel %vm232, %v2795, 0
    %v2800 = vsel %vm232, %v2797, 0
    %2802 = vmatprep.subr.mxu0 0.0
    %2803 = vmatpush1.msra.mxu0 %v2788
    %2804 = vmatprep.subr.mxu0 0.0
    %2805 = vmatpush1.msra.mxu0 %v2789
    %2806 = vmatprep.subr.mxu0 0.0
    %2807 = vmatpush1.msra.mxu0 %v2790
    %2808 = vmatprep.subr.mxu0 0.0
    %2809 = vmatpush1.msra.mxu0 %v2791
    %2810 = vmatprep.subr.mxu0 0.0
    %2811 = vmatpush1.msra.mxu0 0.0
    %2812 = vmatprep.subr.mxu0 0.0
    %2813 = vmatpush1.msra.mxu0 0.0
    %2814 = vmatprep.subr.mxu0 0.0
    %2815 = vmatpush1.msra.mxu0 0.0
    %2816 = vmatprep.subr.mxu0 0.0
    %2817 = vmatpush1.msra.mxu0 0.0
    %2818 = vmatprep.subr.mxu0 0.0
    %2819 = vmatpush1.msra.mxu0 0.0
    %2820 = vmatprep.subr.mxu0 0.0
    %2821 = vmatpush1.msra.mxu0 0.0
    %2822 = vmatprep.subr.mxu0 0.0
    %2823 = vmatpush1.msra.mxu0 0.0
    %2824 = vmatprep.subr.mxu0 0.0
    %2825 = vmatpush1.msra.mxu0 0.0
    %2826 = vmatprep.subr.mxu0 0.0
    %2827 = vmatpush1.msra.mxu0 0.0
    %2828 = vmatprep.subr.mxu0 0.0
    %2829 = vmatpush1.msra.mxu0 0.0
    %2830 = vmatprep.subr.mxu0 0.0
    %2831 = vmatpush1.msra.mxu0 0.0
    %2832 = vmatprep.subr.mxu0 0.0
    %2833 = vmatpush1.msra.mxu0 0.0
    %2834 = vmatprep.subr.mxu0 0.0
    %2835 = vmatpush1.msra.mxu0 0.0
    %2836 = vmatprep.subr.mxu0 0.0
    %2837 = vmatpush1.msra.mxu0 0.0
    %2838 = vmatprep.subr.mxu0 0.0
    %2839 = vmatpush1.msra.mxu0 0.0
    %2840 = vmatprep.subr.mxu0 0.0
    %2841 = vmatpush1.msra.mxu0 0.0
    %2842 = vmatprep.subr.mxu0 0.0
    %2843 = vmatpush1.msra.mxu0 0.0
    %2844 = vmatprep.subr.mxu0 0.0
    %2845 = vmatpush1.msra.mxu0 0.0
    %2846 = vmatprep.subr.mxu0 0.0
    %2847 = vmatpush1.msra.mxu0 0.0
    %2848 = vmatprep.subr.mxu0 0.0
    %2849 = vmatpush1.msra.mxu0 0.0
    %2850 = vmatprep.subr.mxu0 0.0
    %2851 = vmatpush1.msra.mxu0 0.0
    %2852 = vmatprep.subr.mxu0 0.0
    %2853 = vmatpush1.msra.mxu0 0.0
    %2854 = vmatprep.subr.mxu0 0.0
    %2855 = vmatpush1.msra.mxu0 0.0
    %2856 = vmatprep.subr.mxu0 0.0
    %2857 = vmatpush1.msra.mxu0 0.0
    %2858 = vmatprep.subr.mxu0 0.0
    %2859 = vmatpush1.msra.mxu0 0.0
    %2860 = vmatprep.subr.mxu0 0.0
    %2861 = vmatpush1.msra.mxu0 0.0
    %2862 = vmatprep.subr.mxu0 0.0
    %2863 = vmatpush1.msra.mxu0 0.0
    %2864 = vmatprep.subr.mxu0 0.0
    %2865 = vmatpush1.msra.mxu0 0.0
    %2866 = vmatprep.mubr.f32.mxu0 0.0
    %2867 = vmatmul.mubr.f32.gmra.mrb[0].mxu0 %v2798
    %v2868 = vpop.f32.mrb[0].mxu0
    %v2869 = vadd.f32 0.0, %v2868
    %v2870 = vpop.f32.mrb[0].mxu0
    %2871 = vmatprep.mubr.f32.mxu0 0.0
    %2872 = vmatmul.mubr.f32.gmra.mrb[0].mxu0 %v2800
    %v2873 = vpop.f32.mrb[0].mxu0
    %v2874 = vadd.f32 0.0, %v2873
    %v2875 = vpop.f32.mrb[0].mxu0
    %2876 = vdwg.mxu0
    %v2879 = vunpack.c.l.s4 1966171168
    %v2880 = vunpack.c.0.s8 %v2879
    %v2881 = vlaneseq
    %v2882 = vshrl.u32 %v2881, 7
    %v2883 = vsub.s32 %v2880, %v2882
    %v2884 = vrot.slane %v1431, %v2883
    %v2885 = vcombine.high %v2884, %v2884
    %v2887 = vunpack.c.l.s4 1966171168
    %v2888 = vunpack.c.0.s8 %v2887
    %v2889 = vlaneseq
    %v2890 = vshrl.u32 %v2889, 7
    %v2891 = vsub.s32 %v2888, %v2890
    %v2892 = vrot.slane %v2884, %v2891
    %v2894 = vunpack.c.l.s4 1966171168
    %v2895 = vunpack.c.0.s8 %v2894
    %v2896 = vlaneseq
    %v2897 = vshrl.u32 %v2896, 7
    %v2898 = vsub.s32 %v2895, %v2897
    %v2899 = vrot.slane %v2885, %v2898
    %v2900 = vlaneseq
    %v2901 = vshrl.u32 %v2900, 7
    %v2902 = vsub.s32 0, %v2901
    %v2903 = vrot.slane %v2892, %v2902
    %v2904 = vlaneseq
    %v2905 = vshrl.u32 %v2904, 7
    %v2906 = vsub.s32 0, %v2905
    %v2907 = vrot.slane %v2899, %v2906
    %v2910 = vadd.f32 %v2869, %v2903
    %v2911 = vadd.f32 %v2874, %v2907
    %2912 = vst [vmem:[#allocation11] sm:$0xff] %v2910
    %2913 = vst [vmem:[#allocation11 + $0x8] sm:$0xff] %v2911
    // Predicated region
    $region74: #{seq2seq_forward.1} parent=1 // pred_check
      _
    $region75: #{seq2seq_forward.1} parent=1 // pred_check_branch
      %2915 = sbr.rel (0) target = $region77
    $region76: #{seq2seq_forward.1} parent=1 // pred_region
      %s2917 = ssub.s32 256, 256
      %2918 = vsyncadd [#allocation4], %s2917
      %s2919 = sshll.u32 [#allocation11], 4
      %s2920 = int_to_ptr.vmem [resolvable:$true] %s2919
      %2925 = dma.vmem_to_hbm [thread:$0]  %s2920, 256, %s13, [#allocation4], 128, 128, 8
    $region77: #{seq2seq_forward.1} parent=1 // pred_fallthru
      _
    // Predicated region
    $region78: #{seq2seq_forward.1} parent=1 // pred_check
      _
    $region79: #{seq2seq_forward.1} parent=1 // pred_check_branch
      %2927 = sbr.rel (0) target = $region81
    $region80: #{seq2seq_forward.1} parent=1 // pred_region
      %2928 = dma.done [#allocation4], 256
    $region81: #{seq2seq_forward.1} parent=1 // pred_fallthru
      _
    %2929 = vsyncpa [#allocation3], 1
    %2930 = vsyncpa [#allocation6], 1
    %2931 = vsyncpa [#allocation9], 1
    %2932 = vsyncpa [#allocation4], 1

</llo_original>
